<compile_context>
chip_gen: v5e
topology: v5e:2x2
jax: 0.10.0
libtpu: 0.0.40
codegen_flags: <defaults>
</compile_context>

<pallas_src>
import jax
import jax.numpy as jnp
from jax.experimental import pallas as pl
from jax.experimental.pallas import tpu as pltpu


def _sigmoid(x):
    # exp goes to the EUP slot; exact form keeps parity with the f32 reference.
    return 1.0 / (1.0 + jnp.exp(-x))


def bilstm_kernel(
    x_ref,                                    # (T, TB, IN)  time-major input tile
    w0f_x, w0f_h, b0f,                        # layer 0, forward dir
    w0b_x, w0b_h, b0b,                        # layer 0, reverse dir
    w1f_xf, w1f_xb, w1f_h, b1f,               # layer 1, forward dir
    w1b_xf, w1b_xb, w1b_h, b1b,               # layer 1, reverse dir
    wfc_f, wfc_b, bfc,                        # final Linear(2H, 1)
    o_ref,                                    # (TB, 1)
    h0f_all, h0b_all, h_sc, c_sc,             # VMEM scratch
):
    T, TB, _ = x_ref.shape
    H = w0f_h.shape[0]
    f32 = jnp.float32

    def cell(gates, c):
        # PyTorch gate order: input, forget, cell(g), output. H=128 -> slices
        # land on clean 128-lane boundaries.
        i = _sigmoid(gates[:, 0 * H:1 * H])
        f = _sigmoid(gates[:, 1 * H:2 * H])
        g = jnp.tanh(gates[:, 2 * H:3 * H])
        o = _sigmoid(gates[:, 3 * H:4 * H])
        c_new = f * c + i * g
        h_new = o * jnp.tanh(c_new)
        return h_new, c_new

    zeros = jnp.zeros((TB, H), f32)

    # ---------------- layer 0, forward direction ----------------
    h_sc[...] = zeros
    c_sc[...] = zeros

    @pl.loop(0, T)
    def _(t):
        gates = (jnp.dot(x_ref[t], w0f_x[...], preferred_element_type=f32)
                 + jnp.dot(h_sc[...], w0f_h[...], preferred_element_type=f32)
                 + b0f[...])
        h, c = cell(gates, c_sc[...])
        h_sc[...] = h
        c_sc[...] = c
        h0f_all[t] = h

    # ---------------- layer 0, reverse direction ----------------
    h_sc[...] = zeros
    c_sc[...] = zeros

    @pl.loop(0, T)
    def _(k):
        t = T - 1 - k
        gates = (jnp.dot(x_ref[t], w0b_x[...], preferred_element_type=f32)
                 + jnp.dot(h_sc[...], w0b_h[...], preferred_element_type=f32)
                 + b0b[...])
        h, c = cell(gates, c_sc[...])
        h_sc[...] = h
        c_sc[...] = c
        h0b_all[t] = h

    # TODO(synk): nn.LSTM inter-layer dropout (p=0.2) is training-only;
    # identity at inference, so intentionally omitted.

    # ---------------- layer 1, forward direction ----------------
    # Layer-1 input is concat([fwd, rev]) of layer-0 outputs; the concat is
    # avoided by pre-splitting W_ih into forward/reverse halves (two dots).
    h_sc[...] = zeros
    c_sc[...] = zeros

    @pl.loop(0, T)
    def _(t):
        gates = (jnp.dot(h0f_all[t], w1f_xf[...], preferred_element_type=f32)
                 + jnp.dot(h0b_all[t], w1f_xb[...], preferred_element_type=f32)
                 + jnp.dot(h_sc[...], w1f_h[...], preferred_element_type=f32)
                 + b1f[...])
        h, c = cell(gates, c_sc[...])
        h_sc[...] = h
        c_sc[...] = c

    h1f_last = h_sc[...]

    # ---------------- layer 1, reverse direction ----------------
    # Only out[:, -1, :] is used downstream; the reverse direction's output at
    # the last time index is its first scan step from zero state -> one step.
    gates = (jnp.dot(h0f_all[T - 1], w1b_xf[...], preferred_element_type=f32)
             + jnp.dot(h0b_all[T - 1], w1b_xb[...], preferred_element_type=f32)
             + jnp.dot(zeros, w1b_h[...], preferred_element_type=f32)
             + b1b[...])
    h1b_last, _ = cell(gates, zeros)

    # ---------------- fc + sigmoid ----------------
    z = (jnp.dot(h1f_last, wfc_f[...], preferred_element_type=f32)
         + jnp.dot(h1b_last, wfc_b[...], preferred_element_type=f32)
         + bfc[...])
    o_ref[...] = _sigmoid(z).astype(o_ref.dtype)


def _arranged_weights(params, hidden_dim):
    """PyTorch-layout LSTM/Linear weights -> (in, out) matmul form; layer-1 and
    fc input weights pre-split into fwd/rev halves so the kernel never
    concatenates along lanes."""
    H = hidden_dim
    out = []
    for layer in (0, 1):
        for d in ("fwd", "rev"):
            w_ih = params[f"w_ih_l{layer}_{d}"].T            # (in, 4H)
            w_hh = params[f"w_hh_l{layer}_{d}"].T            # (H, 4H)
            b = (params[f"b_ih_l{layer}_{d}"]
                 + params[f"b_hh_l{layer}_{d}"]).reshape(1, 4 * H)
            if layer == 0:
                out.extend([w_ih, w_hh, b])
            else:
                out.extend([w_ih[:H], w_ih[H:], w_hh, b])
    fc_w = params["fc_w"].T                                  # (2H, 1)
    out.extend([fc_w[:H], fc_w[H:], params["fc_b"].reshape(1, 1)])
    return tuple(out)


def bilstm_forward(x, params, hidden_dim, *, block_b=None):
    """x: (B, T, input_dim) float32 -> (B, 1) float32 sigmoid probabilities."""
    B, T, IN = x.shape
    H = hidden_dim
    if block_b is None:
        block_b = min(B, 256)
    assert B % block_b == 0, "pad the batch to a multiple of block_b"
    assert block_b == B or block_b % 8 == 0, "batch tile must respect sublane tiling"

    weights = _arranged_weights(params, H)
    x_tm = jnp.transpose(x, (1, 0, 2))        # time-major (T, B, IN)

    def const_spec(arr):
        nd = arr.ndim
        # Full-array block, constant index -> DMA'd once, VMEM-resident.
        return pl.BlockSpec(arr.shape, lambda i, _nd=nd: (0,) * _nd)

    in_specs = [pl.BlockSpec((T, block_b, IN), lambda i: (0, i, 0))]
    in_specs += [const_spec(w) for w in weights]

    grid_spec = pltpu.PrefetchScalarGridSpec(
        num_scalar_prefetch=0,
        grid=(B // block_b,),                 # batch tiles stream through VMEM
        in_specs=in_specs,
        out_specs=pl.BlockSpec((block_b, 1), lambda i: (i, 0)),
        scratch_shapes=[
            pltpu.VMEM((T, block_b, H), jnp.float32),   # layer-0 fwd outputs, all t
            pltpu.VMEM((T, block_b, H), jnp.float32),   # layer-0 rev outputs, all t
            pltpu.VMEM((block_b, H), jnp.float32),      # running h
            pltpu.VMEM((block_b, H), jnp.float32),      # running c
        ],
    )

    return pl.pallas_call(
        bilstm_kernel,
        out_shape=jax.ShapeDtypeStruct((B, 1), jnp.float32),
        grid_spec=grid_spec,
        compiler_params=pltpu.CompilerParams(
            # batch tiles are independent -> v7x megacore can split them;
            # harmless no-op on v5e/v6e.
            dimension_semantics=("parallel",),
        ),
    )(x_tm, *weights)


def init_params(key, input_dim=420, hidden_dim=128):
    """Deterministic params in PyTorch nn.LSTM / nn.Linear layout."""
    H = hidden_dim
    params = {}
    bound = 1.0 / jnp.sqrt(float(H))
    for layer, in_dim in enumerate([input_dim, 2 * H]):
        for d in ("fwd", "rev"):
            key, k1, k2, k3, k4 = jax.random.split(key, 5)
            params[f"w_ih_l{layer}_{d}"] = jax.random.uniform(
                k1, (4 * H, in_dim), jnp.float32, -bound, bound)
            params[f"w_hh_l{layer}_{d}"] = jax.random.uniform(
                k2, (4 * H, H), jnp.float32, -bound, bound)
            params[f"b_ih_l{layer}_{d}"] = jax.random.uniform(
                k3, (4 * H,), jnp.float32, -bound, bound)
            params[f"b_hh_l{layer}_{d}"] = jax.random.uniform(
                k4, (4 * H,), jnp.float32, -bound, bound)
    key, k1, k2 = jax.random.split(key, 3)
    fb = 1.0 / jnp.sqrt(float(2 * H))
    params["fc_w"] = jax.random.uniform(k1, (1, 2 * H), jnp.float32, -fb, fb)
    params["fc_b"] = jax.random.uniform(k2, (1,), jnp.float32, -fb, fb)
    return params


def bilstm_reference(x, params, hidden_dim, num_layers=2):
    """Pure-JAX reference with PyTorch nn.LSTM semantics (eval mode)."""
    H = hidden_dim
    B, T, _ = x.shape

    def cell(x_t, h, c, w_ih, w_hh, b_ih, b_hh):
        gates = x_t @ w_ih.T + b_ih + h @ w_hh.T + b_hh
        i, f, g, o = jnp.split(gates, 4, axis=-1)
        i, f, o = jax.nn.sigmoid(i), jax.nn.sigmoid(f), jax.nn.sigmoid(o)
        g = jnp.tanh(g)
        c = f * c + i * g
        return o * jnp.tanh(c), c

    inp = x
    for layer in range(num_layers):
        fwd = []
        h = c = jnp.zeros((B, H), jnp.float32)
        for t in range(T):
            h, c = cell(inp[:, t], h, c,
                        params[f"w_ih_l{layer}_fwd"], params[f"w_hh_l{layer}_fwd"],
                        params[f"b_ih_l{layer}_fwd"], params[f"b_hh_l{layer}_fwd"])
            fwd.append(h)
        rev = [None] * T
        h = c = jnp.zeros((B, H), jnp.float32)
        for t in range(T - 1, -1, -1):
            h, c = cell(inp[:, t], h, c,
                        params[f"w_ih_l{layer}_rev"], params[f"w_hh_l{layer}_rev"],
                        params[f"b_ih_l{layer}_rev"], params[f"b_hh_l{layer}_rev"])
            rev[t] = h
        inp = jnp.concatenate([jnp.stack(fwd, 1), jnp.stack(rev, 1)], axis=-1)
    out_last = inp[:, -1, :]
    return jax.nn.sigmoid(out_last @ params["fc_w"].T + params["fc_b"])


if __name__ == "__main__":
    key = jax.random.PRNGKey(0)
    k_x, k_p = jax.random.split(key)

    # Small batch/seq; feature dims match the module defaults (420 -> 128x2 -> 1).
    B, T, INPUT_DIM, HIDDEN = 8, 8, 420, 128
    x = jax.random.normal(k_x, (B, T, INPUT_DIM), dtype=jnp.float32)
    params = init_params(k_p, input_dim=INPUT_DIM, hidden_dim=HIDDEN)

    out = bilstm_forward(x, params, HIDDEN, block_b=8)
    out = jax.block_until_ready(out)

    ref = bilstm_reference(x, params, HIDDEN)
    assert out.shape == (B, 1)
    assert jnp.allclose(out, ref, atol=1e-3, rtol=1e-3), (out, ref)

    print("KERNEL_OK")
</pallas_src>

<mosaic_0001>
module attributes {stable_mosaic.version = 11 : i64} {
  func.func @bilstm_kernel(%arg0: i32, %arg1: memref<8x8x420xf32, #tpu.memory_space<vmem>>, %arg2: memref<420x512xf32, #tpu.memory_space<vmem>>, %arg3: memref<128x512xf32, #tpu.memory_space<vmem>>, %arg4: memref<1x512xf32, #tpu.memory_space<vmem>>, %arg5: memref<420x512xf32, #tpu.memory_space<vmem>>, %arg6: memref<128x512xf32, #tpu.memory_space<vmem>>, %arg7: memref<1x512xf32, #tpu.memory_space<vmem>>, %arg8: memref<128x512xf32, #tpu.memory_space<vmem>>, %arg9: memref<128x512xf32, #tpu.memory_space<vmem>>, %arg10: memref<128x512xf32, #tpu.memory_space<vmem>>, %arg11: memref<1x512xf32, #tpu.memory_space<vmem>>, %arg12: memref<128x512xf32, #tpu.memory_space<vmem>>, %arg13: memref<128x512xf32, #tpu.memory_space<vmem>>, %arg14: memref<128x512xf32, #tpu.memory_space<vmem>>, %arg15: memref<1x512xf32, #tpu.memory_space<vmem>>, %arg16: memref<128x1xf32, #tpu.memory_space<vmem>>, %arg17: memref<128x1xf32, #tpu.memory_space<vmem>>, %arg18: memref<1x1xf32, #tpu.memory_space<vmem>>, %arg19: memref<8x1xf32, #tpu.memory_space<vmem>>, %arg20: memref<8x8x128xf32, #tpu.memory_space<vmem>>, %arg21: memref<8x8x128xf32, #tpu.memory_space<vmem>>, %arg22: memref<8x128xf32, #tpu.memory_space<vmem>>, %arg23: memref<8x128xf32, #tpu.memory_space<vmem>>) attributes {dimension_semantics = [#tpu.dimension_semantics<parallel>], iteration_bounds = array<i64: 1>, scalar_prefetch = 0 : i64, scratch_operands = 4 : i64, tpu.core_type = #tpu.core_type<tc>, window_params = [{transform_indices = @transform_0, window_bounds = array<i64: 8, 8, 420>}, {pipeline_mode = #tpu.pipeline_mode<synchronous>, transform_indices = @transform_1, window_bounds = array<i64: 420, 512>}, {pipeline_mode = #tpu.pipeline_mode<synchronous>, transform_indices = @transform_2, window_bounds = array<i64: 128, 512>}, {pipeline_mode = #tpu.pipeline_mode<synchronous>, transform_indices = @transform_3, window_bounds = array<i64: 1, 512>}, {pipeline_mode = #tpu.pipeline_mode<synchronous>, transform_indices = @transform_4, window_bounds = array<i64: 420, 512>}, {pipeline_mode = #tpu.pipeline_mode<synchronous>, transform_indices = @transform_5, window_bounds = array<i64: 128, 512>}, {pipeline_mode = #tpu.pipeline_mode<synchronous>, transform_indices = @transform_6, window_bounds = array<i64: 1, 512>}, {pipeline_mode = #tpu.pipeline_mode<synchronous>, transform_indices = @transform_7, window_bounds = array<i64: 128, 512>}, {pipeline_mode = #tpu.pipeline_mode<synchronous>, transform_indices = @transform_8, window_bounds = array<i64: 128, 512>}, {pipeline_mode = #tpu.pipeline_mode<synchronous>, transform_indices = @transform_9, window_bounds = array<i64: 128, 512>}, {pipeline_mode = #tpu.pipeline_mode<synchronous>, transform_indices = @transform_10, window_bounds = array<i64: 1, 512>}, {pipeline_mode = #tpu.pipeline_mode<synchronous>, transform_indices = @transform_11, window_bounds = array<i64: 128, 512>}, {pipeline_mode = #tpu.pipeline_mode<synchronous>, transform_indices = @transform_12, window_bounds = array<i64: 128, 512>}, {pipeline_mode = #tpu.pipeline_mode<synchronous>, transform_indices = @transform_13, window_bounds = array<i64: 128, 512>}, {pipeline_mode = #tpu.pipeline_mode<synchronous>, transform_indices = @transform_14, window_bounds = array<i64: 1, 512>}, {pipeline_mode = #tpu.pipeline_mode<synchronous>, transform_indices = @transform_15, window_bounds = array<i64: 128, 1>}, {pipeline_mode = #tpu.pipeline_mode<synchronous>, transform_indices = @transform_16, window_bounds = array<i64: 128, 1>}, {pipeline_mode = #tpu.pipeline_mode<synchronous>, transform_indices = @transform_17, window_bounds = array<i64: 1, 1>}, {transform_indices = @transform_18, window_bounds = array<i64: 8, 1>}]} {
    %cst = arith.constant 0.000000e+00 : f32
    %0 = vector.broadcast %cst : f32 to vector<8x128xf32>
    %c0 = arith.constant 0 : index
    %c0_0 = arith.constant 0 : index
    %1 = vector.load %arg22[%c0, %c0_0] : memref<8x128xf32, #tpu.memory_space<vmem>>, vector<8x128xf32>
    tpu.vector_store %arg22[%c0, %c0_0], %0 {strides = array<i32>} : memref<8x128xf32, #tpu.memory_space<vmem>>, vector<8x128xf32>,
    %c0_1 = arith.constant 0 : index
    %c0_2 = arith.constant 0 : index
    %2 = vector.load %arg23[%c0_1, %c0_2] : memref<8x128xf32, #tpu.memory_space<vmem>>, vector<8x128xf32>
    tpu.vector_store %arg23[%c0_1, %c0_2], %0 {strides = array<i32>} : memref<8x128xf32, #tpu.memory_space<vmem>>, vector<8x128xf32>,
    %c0_i32 = arith.constant 0 : i32
    %c8_i32 = arith.constant 8 : i32
    %3 = arith.addi %c0_i32, %c8_i32 : i32
    %c1_i32 = arith.constant 1 : i32
    scf.for %arg24 = %c0_i32 to %3 step %c1_i32  : i32 {
      %c1_i32_60 = arith.constant 1 : i32
      %73 = arith.muli %arg24, %c1_i32_60 : i32
      %c0_i32_61 = arith.constant 0 : i32
      %74 = arith.addi %c0_i32_61, %73 : i32
      %75 = arith.index_cast %74 : i32 to index
      %c0_62 = arith.constant 0 : index
      %c0_63 = arith.constant 0 : index
      %76 = vector.load %arg1[%75, %c0_62, %c0_63] : memref<8x8x420xf32, #tpu.memory_space<vmem>>, vector<1x8x420xf32>
      %77 = vector.shape_cast %76 : vector<1x8x420xf32> to vector<8x420xf32>
      %c0_64 = arith.constant 0 : index
      %c0_65 = arith.constant 0 : index
      %78 = vector.load %arg2[%c0_64, %c0_65] : memref<420x512xf32, #tpu.memory_space<vmem>>, vector<420x512xf32>
      %cst_66 = arith.constant dense<0.000000e+00> : vector<8x512xf32>
      %79 = tpu.matmul %77, %78, %cst_66 {dimension_numbers = #tpu.dot_dimension_numbers<[1], [0], [0], [1], [0, 0, 1, 1], [], []>} : vector<8x420xf32>, vector<420x512xf32>, vector<8x512xf32> -> vector<8x512xf32>
      %c0_67 = arith.constant 0 : index
      %c0_68 = arith.constant 0 : index
      %80 = vector.load %arg22[%c0_67, %c0_68] : memref<8x128xf32, #tpu.memory_space<vmem>>, vector<8x128xf32>
      %c0_69 = arith.constant 0 : index
      %c0_70 = arith.constant 0 : index
      %81 = vector.load %arg3[%c0_69, %c0_70] : memref<128x512xf32, #tpu.memory_space<vmem>>, vector<128x512xf32>
      %cst_71 = arith.constant dense<0.000000e+00> : vector<8x512xf32>
      %82 = tpu.matmul %80, %81, %cst_71 {dimension_numbers = #tpu.dot_dimension_numbers<[1], [0], [0], [1], [0, 0, 1, 1], [], []>} : vector<8x128xf32>, vector<128x512xf32>, vector<8x512xf32> -> vector<8x512xf32>
      %83 = arith.addf %79, %82 : vector<8x512xf32>
      %c0_72 = arith.constant 0 : index
      %c0_73 = arith.constant 0 : index
      %84 = vector.load %arg4[%c0_72, %c0_73] : memref<1x512xf32, #tpu.memory_space<vmem>>, vector<1x512xf32>
      %85 = vector.broadcast %84 : vector<1x512xf32> to vector<8x512xf32>
      %86 = arith.addf %83, %85 : vector<8x512xf32>
      %c0_74 = arith.constant 0 : index
      %c0_75 = arith.constant 0 : index
      %87 = vector.load %arg23[%c0_74, %c0_75] : memref<8x128xf32, #tpu.memory_space<vmem>>, vector<8x128xf32>
      %88 = vector.extract_strided_slice %86 {offsets = [0, 0], sizes = [8, 128], strides = [1, 1]} : vector<8x512xf32> to vector<8x128xf32>
      %cst_76 = arith.constant 0.000000e+00 : f32
      %89 = vector.broadcast %cst_76 : f32 to vector<8x128xf32>
      %90 = arith.subf %89, %88 : vector<8x128xf32>
      %91 = math.exp %90 : vector<8x128xf32>
      %cst_77 = arith.constant 1.000000e+00 : f32
      %92 = vector.broadcast %cst_77 : f32 to vector<8x128xf32>
      %93 = arith.addf %92, %91 : vector<8x128xf32>
      %cst_78 = arith.constant 1.000000e+00 : f32
      %94 = vector.broadcast %cst_78 : f32 to vector<8x128xf32>
      %95 = arith.divf %94, %93 : vector<8x128xf32>
      %96 = vector.extract_strided_slice %86 {offsets = [0, 128], sizes = [8, 128], strides = [1, 1]} : vector<8x512xf32> to vector<8x128xf32>
      %cst_79 = arith.constant 0.000000e+00 : f32
      %97 = vector.broadcast %cst_79 : f32 to vector<8x128xf32>
      %98 = arith.subf %97, %96 : vector<8x128xf32>
      %99 = math.exp %98 : vector<8x128xf32>
      %cst_80 = arith.constant 1.000000e+00 : f32
      %100 = vector.broadcast %cst_80 : f32 to vector<8x128xf32>
      %101 = arith.addf %100, %99 : vector<8x128xf32>
      %cst_81 = arith.constant 1.000000e+00 : f32
      %102 = vector.broadcast %cst_81 : f32 to vector<8x128xf32>
      %103 = arith.divf %102, %101 : vector<8x128xf32>
      %104 = vector.extract_strided_slice %86 {offsets = [0, 256], sizes = [8, 128], strides = [1, 1]} : vector<8x512xf32> to vector<8x128xf32>
      %105 = math.tanh %104 : vector<8x128xf32>
      %106 = vector.extract_strided_slice %86 {offsets = [0, 384], sizes = [8, 128], strides = [1, 1]} : vector<8x512xf32> to vector<8x128xf32>
      %cst_82 = arith.constant 0.000000e+00 : f32
      %107 = vector.broadcast %cst_82 : f32 to vector<8x128xf32>
      %108 = arith.subf %107, %106 : vector<8x128xf32>
      %109 = math.exp %108 : vector<8x128xf32>
      %cst_83 = arith.constant 1.000000e+00 : f32
      %110 = vector.broadcast %cst_83 : f32 to vector<8x128xf32>
      %111 = arith.addf %110, %109 : vector<8x128xf32>
      %cst_84 = arith.constant 1.000000e+00 : f32
      %112 = vector.broadcast %cst_84 : f32 to vector<8x128xf32>
      %113 = arith.divf %112, %111 : vector<8x128xf32>
      %114 = arith.mulf %103, %87 : vector<8x128xf32>
      %115 = arith.mulf %95, %105 : vector<8x128xf32>
      %116 = arith.addf %114, %115 : vector<8x128xf32>
      %117 = math.tanh %116 : vector<8x128xf32>
      %118 = arith.mulf %113, %117 : vector<8x128xf32>
      %c0_85 = arith.constant 0 : index
      %c0_86 = arith.constant 0 : index
      %119 = vector.load %arg22[%c0_85, %c0_86] : memref<8x128xf32, #tpu.memory_space<vmem>>, vector<8x128xf32>
      tpu.vector_store %arg22[%c0_85, %c0_86], %118 {strides = array<i32>} : memref<8x128xf32, #tpu.memory_space<vmem>>, vector<8x128xf32>,
      %c0_87 = arith.constant 0 : index
      %c0_88 = arith.constant 0 : index
      %120 = vector.load %arg23[%c0_87, %c0_88] : memref<8x128xf32, #tpu.memory_space<vmem>>, vector<8x128xf32>
      tpu.vector_store %arg23[%c0_87, %c0_88], %116 {strides = array<i32>} : memref<8x128xf32, #tpu.memory_space<vmem>>, vector<8x128xf32>,
      %121 = arith.index_cast %74 : i32 to index
      %c0_89 = arith.constant 0 : index
      %c0_90 = arith.constant 0 : index
      %122 = vector.load %arg20[%121, %c0_89, %c0_90] : memref<8x8x128xf32, #tpu.memory_space<vmem>>, vector<1x8x128xf32>
      %123 = vector.shape_cast %122 : vector<1x8x128xf32> to vector<8x128xf32>
      %124 = vector.shape_cast %118 : vector<8x128xf32> to vector<1x8x128xf32>
      tpu.vector_store %arg20[%121, %c0_89, %c0_90], %124 {strides = array<i32>} : memref<8x8x128xf32, #tpu.memory_space<vmem>>, vector<1x8x128xf32>,
    }
    %c8_i32_3 = arith.constant 8 : i32
    %c0_4 = arith.constant 0 : index
    %c0_5 = arith.constant 0 : index
    %4 = vector.load %arg22[%c0_4, %c0_5] : memref<8x128xf32, #tpu.memory_space<vmem>>, vector<8x128xf32>
    tpu.vector_store %arg22[%c0_4, %c0_5], %0 {strides = array<i32>} : memref<8x128xf32, #tpu.memory_space<vmem>>, vector<8x128xf32>,
    %c0_6 = arith.constant 0 : index
    %c0_7 = arith.constant 0 : index
    %5 = vector.load %arg23[%c0_6, %c0_7] : memref<8x128xf32, #tpu.memory_space<vmem>>, vector<8x128xf32>
    tpu.vector_store %arg23[%c0_6, %c0_7], %0 {strides = array<i32>} : memref<8x128xf32, #tpu.memory_space<vmem>>, vector<8x128xf32>,
    %c0_i32_8 = arith.constant 0 : i32
    %c8_i32_9 = arith.constant 8 : i32
    %6 = arith.addi %c0_i32_8, %c8_i32_9 : i32
    %c1_i32_10 = arith.constant 1 : i32
    scf.for %arg24 = %c0_i32_8 to %6 step %c1_i32_10  : i32 {
      %c1_i32_60 = arith.constant 1 : i32
      %73 = arith.muli %arg24, %c1_i32_60 : i32
      %c0_i32_61 = arith.constant 0 : i32
      %74 = arith.addi %c0_i32_61, %73 : i32
      %c7_i32 = arith.constant 7 : i32
      %75 = arith.subi %c7_i32, %74 : i32
      %76 = arith.index_cast %75 : i32 to index
      %c0_62 = arith.constant 0 : index
      %c0_63 = arith.constant 0 : index
      %77 = vector.load %arg1[%76, %c0_62, %c0_63] : memref<8x8x420xf32, #tpu.memory_space<vmem>>, vector<1x8x420xf32>
      %78 = vector.shape_cast %77 : vector<1x8x420xf32> to vector<8x420xf32>
      %c0_64 = arith.constant 0 : index
      %c0_65 = arith.constant 0 : index
      %79 = vector.load %arg5[%c0_64, %c0_65] : memref<420x512xf32, #tpu.memory_space<vmem>>, vector<420x512xf32>
      %cst_66 = arith.constant dense<0.000000e+00> : vector<8x512xf32>
      %80 = tpu.matmul %78, %79, %cst_66 {dimension_numbers = #tpu.dot_dimension_numbers<[1], [0], [0], [1], [0, 0, 1, 1], [], []>} : vector<8x420xf32>, vector<420x512xf32>, vector<8x512xf32> -> vector<8x512xf32>
      %c0_67 = arith.constant 0 : index
      %c0_68 = arith.constant 0 : index
      %81 = vector.load %arg22[%c0_67, %c0_68] : memref<8x128xf32, #tpu.memory_space<vmem>>, vector<8x128xf32>
      %c0_69 = arith.constant 0 : index
      %c0_70 = arith.constant 0 : index
      %82 = vector.load %arg6[%c0_69, %c0_70] : memref<128x512xf32, #tpu.memory_space<vmem>>, vector<128x512xf32>
      %cst_71 = arith.constant dense<0.000000e+00> : vector<8x512xf32>
      %83 = tpu.matmul %81, %82, %cst_71 {dimension_numbers = #tpu.dot_dimension_numbers<[1], [0], [0], [1], [0, 0, 1, 1], [], []>} : vector<8x128xf32>, vector<128x512xf32>, vector<8x512xf32> -> vector<8x512xf32>
      %84 = arith.addf %80, %83 : vector<8x512xf32>
      %c0_72 = arith.constant 0 : index
      %c0_73 = arith.constant 0 : index
      %85 = vector.load %arg7[%c0_72, %c0_73] : memref<1x512xf32, #tpu.memory_space<vmem>>, vector<1x512xf32>
      %86 = vector.broadcast %85 : vector<1x512xf32> to vector<8x512xf32>
      %87 = arith.addf %84, %86 : vector<8x512xf32>
      %c0_74 = arith.constant 0 : index
      %c0_75 = arith.constant 0 : index
      %88 = vector.load %arg23[%c0_74, %c0_75] : memref<8x128xf32, #tpu.memory_space<vmem>>, vector<8x128xf32>
      %89 = vector.extract_strided_slice %87 {offsets = [0, 0], sizes = [8, 128], strides = [1, 1]} : vector<8x512xf32> to vector<8x128xf32>
      %cst_76 = arith.constant 0.000000e+00 : f32
      %90 = vector.broadcast %cst_76 : f32 to vector<8x128xf32>
      %91 = arith.subf %90, %89 : vector<8x128xf32>
      %92 = math.exp %91 : vector<8x128xf32>
      %cst_77 = arith.constant 1.000000e+00 : f32
      %93 = vector.broadcast %cst_77 : f32 to vector<8x128xf32>
      %94 = arith.addf %93, %92 : vector<8x128xf32>
      %cst_78 = arith.constant 1.000000e+00 : f32
      %95 = vector.broadcast %cst_78 : f32 to vector<8x128xf32>
      %96 = arith.divf %95, %94 : vector<8x128xf32>
      %97 = vector.extract_strided_slice %87 {offsets = [0, 128], sizes = [8, 128], strides = [1, 1]} : vector<8x512xf32> to vector<8x128xf32>
      %cst_79 = arith.constant 0.000000e+00 : f32
      %98 = vector.broadcast %cst_79 : f32 to vector<8x128xf32>
      %99 = arith.subf %98, %97 : vector<8x128xf32>
      %100 = math.exp %99 : vector<8x128xf32>
      %cst_80 = arith.constant 1.000000e+00 : f32
      %101 = vector.broadcast %cst_80 : f32 to vector<8x128xf32>
      %102 = arith.addf %101, %100 : vector<8x128xf32>
      %cst_81 = arith.constant 1.000000e+00 : f32
      %103 = vector.broadcast %cst_81 : f32 to vector<8x128xf32>
      %104 = arith.divf %103, %102 : vector<8x128xf32>
      %105 = vector.extract_strided_slice %87 {offsets = [0, 256], sizes = [8, 128], strides = [1, 1]} : vector<8x512xf32> to vector<8x128xf32>
      %106 = math.tanh %105 : vector<8x128xf32>
      %107 = vector.extract_strided_slice %87 {offsets = [0, 384], sizes = [8, 128], strides = [1, 1]} : vector<8x512xf32> to vector<8x128xf32>
      %cst_82 = arith.constant 0.000000e+00 : f32
      %108 = vector.broadcast %cst_82 : f32 to vector<8x128xf32>
      %109 = arith.subf %108, %107 : vector<8x128xf32>
      %110 = math.exp %109 : vector<8x128xf32>
      %cst_83 = arith.constant 1.000000e+00 : f32
      %111 = vector.broadcast %cst_83 : f32 to vector<8x128xf32>
      %112 = arith.addf %111, %110 : vector<8x128xf32>
      %cst_84 = arith.constant 1.000000e+00 : f32
      %113 = vector.broadcast %cst_84 : f32 to vector<8x128xf32>
      %114 = arith.divf %113, %112 : vector<8x128xf32>
      %115 = arith.mulf %104, %88 : vector<8x128xf32>
      %116 = arith.mulf %96, %106 : vector<8x128xf32>
      %117 = arith.addf %115, %116 : vector<8x128xf32>
      %118 = math.tanh %117 : vector<8x128xf32>
      %119 = arith.mulf %114, %118 : vector<8x128xf32>
      %c0_85 = arith.constant 0 : index
      %c0_86 = arith.constant 0 : index
      %120 = vector.load %arg22[%c0_85, %c0_86] : memref<8x128xf32, #tpu.memory_space<vmem>>, vector<8x128xf32>
      tpu.vector_store %arg22[%c0_85, %c0_86], %119 {strides = array<i32>} : memref<8x128xf32, #tpu.memory_space<vmem>>, vector<8x128xf32>,
      %c0_87 = arith.constant 0 : index
      %c0_88 = arith.constant 0 : index
      %121 = vector.load %arg23[%c0_87, %c0_88] : memref<8x128xf32, #tpu.memory_space<vmem>>, vector<8x128xf32>
      tpu.vector_store %arg23[%c0_87, %c0_88], %117 {strides = array<i32>} : memref<8x128xf32, #tpu.memory_space<vmem>>, vector<8x128xf32>,
      %122 = arith.index_cast %75 : i32 to index
      %c0_89 = arith.constant 0 : index
      %c0_90 = arith.constant 0 : index
      %123 = vector.load %arg21[%122, %c0_89, %c0_90] : memref<8x8x128xf32, #tpu.memory_space<vmem>>, vector<1x8x128xf32>
      %124 = vector.shape_cast %123 : vector<1x8x128xf32> to vector<8x128xf32>
      %125 = vector.shape_cast %119 : vector<8x128xf32> to vector<1x8x128xf32>
      tpu.vector_store %arg21[%122, %c0_89, %c0_90], %125 {strides = array<i32>} : memref<8x8x128xf32, #tpu.memory_space<vmem>>, vector<1x8x128xf32>,
    }
    %c8_i32_11 = arith.constant 8 : i32
    %c0_12 = arith.constant 0 : index
    %c0_13 = arith.constant 0 : index
    %7 = vector.load %arg22[%c0_12, %c0_13] : memref<8x128xf32, #tpu.memory_space<vmem>>, vector<8x128xf32>
    tpu.vector_store %arg22[%c0_12, %c0_13], %0 {strides = array<i32>} : memref<8x128xf32, #tpu.memory_space<vmem>>, vector<8x128xf32>,
    %c0_14 = arith.constant 0 : index
    %c0_15 = arith.constant 0 : index
    %8 = vector.load %arg23[%c0_14, %c0_15] : memref<8x128xf32, #tpu.memory_space<vmem>>, vector<8x128xf32>
    tpu.vector_store %arg23[%c0_14, %c0_15], %0 {strides = array<i32>} : memref<8x128xf32, #tpu.memory_space<vmem>>, vector<8x128xf32>,
    %c0_i32_16 = arith.constant 0 : i32
    %c8_i32_17 = arith.constant 8 : i32
    %9 = arith.addi %c0_i32_16, %c8_i32_17 : i32
    %c1_i32_18 = arith.constant 1 : i32
    scf.for %arg24 = %c0_i32_16 to %9 step %c1_i32_18  : i32 {
      %c1_i32_60 = arith.constant 1 : i32
      %73 = arith.muli %arg24, %c1_i32_60 : i32
      %c0_i32_61 = arith.constant 0 : i32
      %74 = arith.addi %c0_i32_61, %73 : i32
      %75 = arith.index_cast %74 : i32 to index
      %c0_62 = arith.constant 0 : index
      %c0_63 = arith.constant 0 : index
      %76 = vector.load %arg20[%75, %c0_62, %c0_63] : memref<8x8x128xf32, #tpu.memory_space<vmem>>, vector<1x8x128xf32>
      %77 = vector.shape_cast %76 : vector<1x8x128xf32> to vector<8x128xf32>
      %c0_64 = arith.constant 0 : index
      %c0_65 = arith.constant 0 : index
      %78 = vector.load %arg8[%c0_64, %c0_65] : memref<128x512xf32, #tpu.memory_space<vmem>>, vector<128x512xf32>
      %cst_66 = arith.constant dense<0.000000e+00> : vector<8x512xf32>
      %79 = tpu.matmul %77, %78, %cst_66 {dimension_numbers = #tpu.dot_dimension_numbers<[1], [0], [0], [1], [0, 0, 1, 1], [], []>} : vector<8x128xf32>, vector<128x512xf32>, vector<8x512xf32> -> vector<8x512xf32>
      %80 = arith.index_cast %74 : i32 to index
      %c0_67 = arith.constant 0 : index
      %c0_68 = arith.constant 0 : index
      %81 = vector.load %arg21[%80, %c0_67, %c0_68] : memref<8x8x128xf32, #tpu.memory_space<vmem>>, vector<1x8x128xf32>
      %82 = vector.shape_cast %81 : vector<1x8x128xf32> to vector<8x128xf32>
      %c0_69 = arith.constant 0 : index
      %c0_70 = arith.constant 0 : index
      %83 = vector.load %arg9[%c0_69, %c0_70] : memref<128x512xf32, #tpu.memory_space<vmem>>, vector<128x512xf32>
      %cst_71 = arith.constant dense<0.000000e+00> : vector<8x512xf32>
      %84 = tpu.matmul %82, %83, %cst_71 {dimension_numbers = #tpu.dot_dimension_numbers<[1], [0], [0], [1], [0, 0, 1, 1], [], []>} : vector<8x128xf32>, vector<128x512xf32>, vector<8x512xf32> -> vector<8x512xf32>
      %85 = arith.addf %79, %84 : vector<8x512xf32>
      %c0_72 = arith.constant 0 : index
      %c0_73 = arith.constant 0 : index
      %86 = vector.load %arg22[%c0_72, %c0_73] : memref<8x128xf32, #tpu.memory_space<vmem>>, vector<8x128xf32>
      %c0_74 = arith.constant 0 : index
      %c0_75 = arith.constant 0 : index
      %87 = vector.load %arg10[%c0_74, %c0_75] : memref<128x512xf32, #tpu.memory_space<vmem>>, vector<128x512xf32>
      %cst_76 = arith.constant dense<0.000000e+00> : vector<8x512xf32>
      %88 = tpu.matmul %86, %87, %cst_76 {dimension_numbers = #tpu.dot_dimension_numbers<[1], [0], [0], [1], [0, 0, 1, 1], [], []>} : vector<8x128xf32>, vector<128x512xf32>, vector<8x512xf32> -> vector<8x512xf32>
      %89 = arith.addf %85, %88 : vector<8x512xf32>
      %c0_77 = arith.constant 0 : index
      %c0_78 = arith.constant 0 : index
      %90 = vector.load %arg11[%c0_77, %c0_78] : memref<1x512xf32, #tpu.memory_space<vmem>>, vector<1x512xf32>
      %91 = vector.broadcast %90 : vector<1x512xf32> to vector<8x512xf32>
      %92 = arith.addf %89, %91 : vector<8x512xf32>
      %c0_79 = arith.constant 0 : index
      %c0_80 = arith.constant 0 : index
      %93 = vector.load %arg23[%c0_79, %c0_80] : memref<8x128xf32, #tpu.memory_space<vmem>>, vector<8x128xf32>
      %94 = vector.extract_strided_slice %92 {offsets = [0, 0], sizes = [8, 128], strides = [1, 1]} : vector<8x512xf32> to vector<8x128xf32>
      %cst_81 = arith.constant 0.000000e+00 : f32
      %95 = vector.broadcast %cst_81 : f32 to vector<8x128xf32>
      %96 = arith.subf %95, %94 : vector<8x128xf32>
      %97 = math.exp %96 : vector<8x128xf32>
      %cst_82 = arith.constant 1.000000e+00 : f32
      %98 = vector.broadcast %cst_82 : f32 to vector<8x128xf32>
      %99 = arith.addf %98, %97 : vector<8x128xf32>
      %cst_83 = arith.constant 1.000000e+00 : f32
      %100 = vector.broadcast %cst_83 : f32 to vector<8x128xf32>
      %101 = arith.divf %100, %99 : vector<8x128xf32>
      %102 = vector.extract_strided_slice %92 {offsets = [0, 128], sizes = [8, 128], strides = [1, 1]} : vector<8x512xf32> to vector<8x128xf32>
      %cst_84 = arith.constant 0.000000e+00 : f32
      %103 = vector.broadcast %cst_84 : f32 to vector<8x128xf32>
      %104 = arith.subf %103, %102 : vector<8x128xf32>
      %105 = math.exp %104 : vector<8x128xf32>
      %cst_85 = arith.constant 1.000000e+00 : f32
      %106 = vector.broadcast %cst_85 : f32 to vector<8x128xf32>
      %107 = arith.addf %106, %105 : vector<8x128xf32>
      %cst_86 = arith.constant 1.000000e+00 : f32
      %108 = vector.broadcast %cst_86 : f32 to vector<8x128xf32>
      %109 = arith.divf %108, %107 : vector<8x128xf32>
      %110 = vector.extract_strided_slice %92 {offsets = [0, 256], sizes = [8, 128], strides = [1, 1]} : vector<8x512xf32> to vector<8x128xf32>
      %111 = math.tanh %110 : vector<8x128xf32>
      %112 = vector.extract_strided_slice %92 {offsets = [0, 384], sizes = [8, 128], strides = [1, 1]} : vector<8x512xf32> to vector<8x128xf32>
      %cst_87 = arith.constant 0.000000e+00 : f32
      %113 = vector.broadcast %cst_87 : f32 to vector<8x128xf32>
      %114 = arith.subf %113, %112 : vector<8x128xf32>
      %115 = math.exp %114 : vector<8x128xf32>
      %cst_88 = arith.constant 1.000000e+00 : f32
      %116 = vector.broadcast %cst_88 : f32 to vector<8x128xf32>
      %117 = arith.addf %116, %115 : vector<8x128xf32>
      %cst_89 = arith.constant 1.000000e+00 : f32
      %118 = vector.broadcast %cst_89 : f32 to vector<8x128xf32>
      %119 = arith.divf %118, %117 : vector<8x128xf32>
      %120 = arith.mulf %109, %93 : vector<8x128xf32>
      %121 = arith.mulf %101, %111 : vector<8x128xf32>
      %122 = arith.addf %120, %121 : vector<8x128xf32>
      %123 = math.tanh %122 : vector<8x128xf32>
      %124 = arith.mulf %119, %123 : vector<8x128xf32>
      %c0_90 = arith.constant 0 : index
      %c0_91 = arith.constant 0 : index
      %125 = vector.load %arg22[%c0_90, %c0_91] : memref<8x128xf32, #tpu.memory_space<vmem>>, vector<8x128xf32>
      tpu.vector_store %arg22[%c0_90, %c0_91], %124 {strides = array<i32>} : memref<8x128xf32, #tpu.memory_space<vmem>>, vector<8x128xf32>,
      %c0_92 = arith.constant 0 : index
      %c0_93 = arith.constant 0 : index
      %126 = vector.load %arg23[%c0_92, %c0_93] : memref<8x128xf32, #tpu.memory_space<vmem>>, vector<8x128xf32>
      tpu.vector_store %arg23[%c0_92, %c0_93], %122 {strides = array<i32>} : memref<8x128xf32, #tpu.memory_space<vmem>>, vector<8x128xf32>,
    }
    %c8_i32_19 = arith.constant 8 : i32
    %c0_20 = arith.constant 0 : index
    %c0_21 = arith.constant 0 : index
    %10 = vector.load %arg22[%c0_20, %c0_21] : memref<8x128xf32, #tpu.memory_space<vmem>>, vector<8x128xf32>
    %c7 = arith.constant 7 : index
    %c0_22 = arith.constant 0 : index
    %c0_23 = arith.constant 0 : index
    %11 = vector.load %arg20[%c7, %c0_22, %c0_23] : memref<8x8x128xf32, #tpu.memory_space<vmem>>, vector<1x8x128xf32>
    %12 = vector.shape_cast %11 : vector<1x8x128xf32> to vector<8x128xf32>
    %c0_24 = arith.constant 0 : index
    %c0_25 = arith.constant 0 : index
    %13 = vector.load %arg12[%c0_24, %c0_25] : memref<128x512xf32, #tpu.memory_space<vmem>>, vector<128x512xf32>
    %cst_26 = arith.constant dense<0.000000e+00> : vector<8x512xf32>
    %14 = tpu.matmul %12, %13, %cst_26 {dimension_numbers = #tpu.dot_dimension_numbers<[1], [0], [0], [1], [0, 0, 1, 1], [], []>} : vector<8x128xf32>, vector<128x512xf32>, vector<8x512xf32> -> vector<8x512xf32>
    %c7_27 = arith.constant 7 : index
    %c0_28 = arith.constant 0 : index
    %c0_29 = arith.constant 0 : index
    %15 = vector.load %arg21[%c7_27, %c0_28, %c0_29] : memref<8x8x128xf32, #tpu.memory_space<vmem>>, vector<1x8x128xf32>
    %16 = vector.shape_cast %15 : vector<1x8x128xf32> to vector<8x128xf32>
    %c0_30 = arith.constant 0 : index
    %c0_31 = arith.constant 0 : index
    %17 = vector.load %arg13[%c0_30, %c0_31] : memref<128x512xf32, #tpu.memory_space<vmem>>, vector<128x512xf32>
    %cst_32 = arith.constant dense<0.000000e+00> : vector<8x512xf32>
    %18 = tpu.matmul %16, %17, %cst_32 {dimension_numbers = #tpu.dot_dimension_numbers<[1], [0], [0], [1], [0, 0, 1, 1], [], []>} : vector<8x128xf32>, vector<128x512xf32>, vector<8x512xf32> -> vector<8x512xf32>
    %19 = arith.addf %14, %18 : vector<8x512xf32>
    %c0_33 = arith.constant 0 : index
    %c0_34 = arith.constant 0 : index
    %20 = vector.load %arg14[%c0_33, %c0_34] : memref<128x512xf32, #tpu.memory_space<vmem>>, vector<128x512xf32>
    %cst_35 = arith.constant dense<0.000000e+00> : vector<8x512xf32>
    %21 = tpu.matmul %0, %20, %cst_35 {dimension_numbers = #tpu.dot_dimension_numbers<[1], [0], [0], [1], [0, 0, 1, 1], [], []>} : vector<8x128xf32>, vector<128x512xf32>, vector<8x512xf32> -> vector<8x512xf32>
    %22 = arith.addf %19, %21 : vector<8x512xf32>
    %c0_36 = arith.constant 0 : index
    %c0_37 = arith.constant 0 : index
    %23 = vector.load %arg15[%c0_36, %c0_37] : memref<1x512xf32, #tpu.memory_space<vmem>>, vector<1x512xf32>
    %24 = vector.broadcast %23 : vector<1x512xf32> to vector<8x512xf32>
    %25 = arith.addf %22, %24 : vector<8x512xf32>
    %26 = vector.extract_strided_slice %25 {offsets = [0, 0], sizes = [8, 128], strides = [1, 1]} : vector<8x512xf32> to vector<8x128xf32>
    %cst_38 = arith.constant 0.000000e+00 : f32
    %27 = vector.broadcast %cst_38 : f32 to vector<8x128xf32>
    %28 = arith.subf %27, %26 : vector<8x128xf32>
    %29 = math.exp %28 : vector<8x128xf32>
    %cst_39 = arith.constant 1.000000e+00 : f32
    %30 = vector.broadcast %cst_39 : f32 to vector<8x128xf32>
    %31 = arith.addf %30, %29 : vector<8x128xf32>
    %cst_40 = arith.constant 1.000000e+00 : f32
    %32 = vector.broadcast %cst_40 : f32 to vector<8x128xf32>
    %33 = arith.divf %32, %31 : vector<8x128xf32>
    %34 = vector.extract_strided_slice %25 {offsets = [0, 128], sizes = [8, 128], strides = [1, 1]} : vector<8x512xf32> to vector<8x128xf32>
    %cst_41 = arith.constant 0.000000e+00 : f32
    %35 = vector.broadcast %cst_41 : f32 to vector<8x128xf32>
    %36 = arith.subf %35, %34 : vector<8x128xf32>
    %37 = math.exp %36 : vector<8x128xf32>
    %cst_42 = arith.constant 1.000000e+00 : f32
    %38 = vector.broadcast %cst_42 : f32 to vector<8x128xf32>
    %39 = arith.addf %38, %37 : vector<8x128xf32>
    %cst_43 = arith.constant 1.000000e+00 : f32
    %40 = vector.broadcast %cst_43 : f32 to vector<8x128xf32>
    %41 = arith.divf %40, %39 : vector<8x128xf32>
    %42 = vector.extract_strided_slice %25 {offsets = [0, 256], sizes = [8, 128], strides = [1, 1]} : vector<8x512xf32> to vector<8x128xf32>
    %43 = math.tanh %42 : vector<8x128xf32>
    %44 = vector.extract_strided_slice %25 {offsets = [0, 384], sizes = [8, 128], strides = [1, 1]} : vector<8x512xf32> to vector<8x128xf32>
    %cst_44 = arith.constant 0.000000e+00 : f32
    %45 = vector.broadcast %cst_44 : f32 to vector<8x128xf32>
    %46 = arith.subf %45, %44 : vector<8x128xf32>
    %47 = math.exp %46 : vector<8x128xf32>
    %cst_45 = arith.constant 1.000000e+00 : f32
    %48 = vector.broadcast %cst_45 : f32 to vector<8x128xf32>
    %49 = arith.addf %48, %47 : vector<8x128xf32>
    %cst_46 = arith.constant 1.000000e+00 : f32
    %50 = vector.broadcast %cst_46 : f32 to vector<8x128xf32>
    %51 = arith.divf %50, %49 : vector<8x128xf32>
    %52 = arith.mulf %41, %0 : vector<8x128xf32>
    %53 = arith.mulf %33, %43 : vector<8x128xf32>
    %54 = arith.addf %52, %53 : vector<8x128xf32>
    %55 = math.tanh %54 : vector<8x128xf32>
    %56 = arith.mulf %51, %55 : vector<8x128xf32>
    %c0_47 = arith.constant 0 : index
    %c0_48 = arith.constant 0 : index
    %57 = vector.load %arg16[%c0_47, %c0_48] : memref<128x1xf32, #tpu.memory_space<vmem>>, vector<128x1xf32>
    %cst_49 = arith.constant dense<0.000000e+00> : vector<8x1xf32>
    %58 = tpu.matmul %10, %57, %cst_49 {dimension_numbers = #tpu.dot_dimension_numbers<[1], [0], [0], [1], [0, 0, 1, 1], [], []>} : vector<8x128xf32>, vector<128x1xf32>, vector<8x1xf32> -> vector<8x1xf32>
    %c0_50 = arith.constant 0 : index
    %c0_51 = arith.constant 0 : index
    %59 = vector.load %arg17[%c0_50, %c0_51] : memref<128x1xf32, #tpu.memory_space<vmem>>, vector<128x1xf32>
    %cst_52 = arith.constant dense<0.000000e+00> : vector<8x1xf32>
    %60 = tpu.matmul %56, %59, %cst_52 {dimension_numbers = #tpu.dot_dimension_numbers<[1], [0], [0], [1], [0, 0, 1, 1], [], []>} : vector<8x128xf32>, vector<128x1xf32>, vector<8x1xf32> -> vector<8x1xf32>
    %61 = arith.addf %58, %60 : vector<8x1xf32>
    %c0_53 = arith.constant 0 : index
    %c0_54 = arith.constant 0 : index
    %62 = vector.load %arg18[%c0_53, %c0_54] : memref<1x1xf32, #tpu.memory_space<vmem>>, vector<1x1xf32>
    %63 = vector.broadcast %62 : vector<1x1xf32> to vector<8x1xf32>
    %64 = arith.addf %61, %63 : vector<8x1xf32>
    %cst_55 = arith.constant 0.000000e+00 : f32
    %65 = vector.broadcast %cst_55 : f32 to vector<8x1xf32>
    %66 = arith.subf %65, %64 : vector<8x1xf32>
    %67 = math.exp %66 : vector<8x1xf32>
    %cst_56 = arith.constant 1.000000e+00 : f32
    %68 = vector.broadcast %cst_56 : f32 to vector<8x1xf32>
    %69 = arith.addf %68, %67 : vector<8x1xf32>
    %cst_57 = arith.constant 1.000000e+00 : f32
    %70 = vector.broadcast %cst_57 : f32 to vector<8x1xf32>
    %71 = arith.divf %70, %69 : vector<8x1xf32>
    %c0_58 = arith.constant 0 : index
    %c0_59 = arith.constant 0 : index
    %72 = vector.load %arg19[%c0_58, %c0_59] : memref<8x1xf32, #tpu.memory_space<vmem>>, vector<8x1xf32>
    tpu.vector_store %arg19[%c0_58, %c0_59], %71 {strides = array<i32>} : memref<8x1xf32, #tpu.memory_space<vmem>>, vector<8x1xf32>,
    return
  }
  func.func @transform_0(%arg0: i32) -> (i32, i32, i32) {
    %c0_i32 = arith.constant 0 : i32
    %c0_i32_0 = arith.constant 0 : i32
    %c0_i32_1 = arith.constant 0 : i32
    return %c0_i32, %arg0, %c0_i32_0 : i32, i32, i32
  }
  func.func @transform_1(%arg0: i32) -> (i32, i32) {
    %c0_i32 = arith.constant 0 : i32
    %c0_i32_0 = arith.constant 0 : i32
    %c0_i32_1 = arith.constant 0 : i32
    return %c0_i32, %c0_i32_0 : i32, i32
  }
  func.func @transform_2(%arg0: i32) -> (i32, i32) {
    %c0_i32 = arith.constant 0 : i32
    %c0_i32_0 = arith.constant 0 : i32
    %c0_i32_1 = arith.constant 0 : i32
    return %c0_i32, %c0_i32_0 : i32, i32
  }
  func.func @transform_3(%arg0: i32) -> (i32, i32) {
    %c0_i32 = arith.constant 0 : i32
    %c0_i32_0 = arith.constant 0 : i32
    %c0_i32_1 = arith.constant 0 : i32
    return %c0_i32, %c0_i32_0 : i32, i32
  }
  func.func @transform_4(%arg0: i32) -> (i32, i32) {
    %c0_i32 = arith.constant 0 : i32
    %c0_i32_0 = arith.constant 0 : i32
    %c0_i32_1 = arith.constant 0 : i32
    return %c0_i32, %c0_i32_0 : i32, i32
  }
  func.func @transform_5(%arg0: i32) -> (i32, i32) {
    %c0_i32 = arith.constant 0 : i32
    %c0_i32_0 = arith.constant 0 : i32
    %c0_i32_1 = arith.constant 0 : i32
    return %c0_i32, %c0_i32_0 : i32, i32
  }
  func.func @transform_6(%arg0: i32) -> (i32, i32) {
    %c0_i32 = arith.constant 0 : i32
    %c0_i32_0 = arith.constant 0 : i32
    %c0_i32_1 = arith.constant 0 : i32
    return %c0_i32, %c0_i32_0 : i32, i32
  }
  func.func @transform_7(%arg0: i32) -> (i32, i32) {
    %c0_i32 = arith.constant 0 : i32
    %c0_i32_0 = arith.constant 0 : i32
    %c0_i32_1 = arith.constant 0 : i32
    return %c0_i32, %c0_i32_0 : i32, i32
  }
  func.func @transform_8(%arg0: i32) -> (i32, i32) {
    %c0_i32 = arith.constant 0 : i32
    %c0_i32_0 = arith.constant 0 : i32
    %c0_i32_1 = arith.constant 0 : i32
    return %c0_i32, %c0_i32_0 : i32, i32
  }
  func.func @transform_9(%arg0: i32) -> (i32, i32) {
    %c0_i32 = arith.constant 0 : i32
    %c0_i32_0 = arith.constant 0 : i32
    %c0_i32_1 = arith.constant 0 : i32
    return %c0_i32, %c0_i32_0 : i32, i32
  }
  func.func @transform_10(%arg0: i32) -> (i32, i32) {
    %c0_i32 = arith.constant 0 : i32
    %c0_i32_0 = arith.constant 0 : i32
    %c0_i32_1 = arith.constant 0 : i32
    return %c0_i32, %c0_i32_0 : i32, i32
  }
  func.func @transform_11(%arg0: i32) -> (i32, i32) {
    %c0_i32 = arith.constant 0 : i32
    %c0_i32_0 = arith.constant 0 : i32
    %c0_i32_1 = arith.constant 0 : i32
    return %c0_i32, %c0_i32_0 : i32, i32
  }
  func.func @transform_12(%arg0: i32) -> (i32, i32) {
    %c0_i32 = arith.constant 0 : i32
    %c0_i32_0 = arith.constant 0 : i32
    %c0_i32_1 = arith.constant 0 : i32
    return %c0_i32, %c0_i32_0 : i32, i32
  }
  func.func @transform_13(%arg0: i32) -> (i32, i32) {
    %c0_i32 = arith.constant 0 : i32
    %c0_i32_0 = arith.constant 0 : i32
    %c0_i32_1 = arith.constant 0 : i32
    return %c0_i32, %c0_i32_0 : i32, i32
  }
  func.func @transform_14(%arg0: i32) -> (i32, i32) {
    %c0_i32 = arith.constant 0 : i32
    %c0_i32_0 = arith.constant 0 : i32
    %c0_i32_1 = arith.constant 0 : i32
    return %c0_i32, %c0_i32_0 : i32, i32
  }
  func.func @transform_15(%arg0: i32) -> (i32, i32) {
    %c0_i32 = arith.constant 0 : i32
    %c0_i32_0 = arith.constant 0 : i32
    %c0_i32_1 = arith.constant 0 : i32
    return %c0_i32, %c0_i32_0 : i32, i32
  }
  func.func @transform_16(%arg0: i32) -> (i32, i32) {
    %c0_i32 = arith.constant 0 : i32
    %c0_i32_0 = arith.constant 0 : i32
    %c0_i32_1 = arith.constant 0 : i32
    return %c0_i32, %c0_i32_0 : i32, i32
  }
  func.func @transform_17(%arg0: i32) -> (i32, i32) {
    %c0_i32 = arith.constant 0 : i32
    %c0_i32_0 = arith.constant 0 : i32
    %c0_i32_1 = arith.constant 0 : i32
    return %c0_i32, %c0_i32_0 : i32, i32
  }
  func.func @transform_18(%arg0: i32) -> (i32, i32) {
    %c0_i32 = arith.constant 0 : i32
    %c0_i32_0 = arith.constant 0 : i32
    return %arg0, %c0_i32 : i32, i32
  }
}

</mosaic_0001>

<llo_original>
// kernel: tpu_custom_call.1
$region0: #{tpu_custom_call.1}
  #allocation0 [shape = 'u32[]', space=smem, size = 0x4, offset = 0x4, fixed_abs, tag = 'smem constant byte address 0x4 - core index']
  #allocation1 [shape = 'u32[72,128]{1,0:T(1,128)}', space=vmem, size = 0x9000, scoped, tag = 'internal scratch']
  #allocation2 [shape = 'f32[8,8,128]{2,1,0:T(8,128)}', space=vmem, size = 0x8000, scoped, tag = 'scratch operand']
  #allocation3 [shape = 'f32[8,8,128]{2,1,0:T(8,128)}', space=vmem, size = 0x8000, scoped, tag = 'scratch operand']
  #allocation4 [shape = 'f32[8,128]{1,0:T(8,128)}', space=vmem, size = 0x1000, scoped, tag = 'scratch operand']
  #allocation5 [shape = 'f32[8,128]{1,0:T(8,128)}', space=vmem, size = 0x1000, scoped, tag = 'scratch operand']
  #allocation6 [shape = 'f32[1,1]{1,0:T(1,128)S(1)}', space=vmem, size = 0x200, scoped, tag = 'scoped memory for tpu_custom_call.1']
  %s0 = inlined_call_operand.vmem [shape: f32[8,8,420], index: 0, kind: input, shape index: {}]
  %s1 = inlined_call_operand.hbm [shape: f32[420,512], index: 1, kind: input, shape index: {}]
  %s2 = inlined_call_operand.hbm [shape: f32[128,512], index: 2, kind: input, shape index: {}]
  %s3 = inlined_call_operand.hbm [shape: f32[1,512], index: 3, kind: input, shape index: {}]
  %s4 = inlined_call_operand.hbm [shape: f32[420,512], index: 4, kind: input, shape index: {}]
  %s5 = inlined_call_operand.hbm [shape: f32[128,512], index: 5, kind: input, shape index: {}]
  %s6 = inlined_call_operand.vmem [shape: f32[1,512], index: 6, kind: input, shape index: {}]
  %s7 = inlined_call_operand.hbm [shape: f32[128,512], index: 7, kind: input, shape index: {}]
  %s8 = inlined_call_operand.hbm [shape: f32[128,512], index: 8, kind: input, shape index: {}]
  %s9 = inlined_call_operand.hbm [shape: f32[128,512], index: 9, kind: input, shape index: {}]
  %s10 = inlined_call_operand.vmem [shape: f32[1,512], index: 10, kind: input, shape index: {}]
  %s11 = inlined_call_operand.hbm [shape: f32[128,512], index: 11, kind: input, shape index: {}]
  %s12 = inlined_call_operand.hbm [shape: f32[128,512], index: 12, kind: input, shape index: {}]
  %s13 = inlined_call_operand.hbm [shape: f32[128,512], index: 13, kind: input, shape index: {}]
  %s14 = inlined_call_operand.vmem [shape: f32[1,512], index: 14, kind: input, shape index: {}]
  %s15 = inlined_call_operand.vmem [shape: f32[128,1], index: 15, kind: input, shape index: {}]
  %s16 = inlined_call_operand.vmem [shape: f32[128,1], index: 16, kind: input, shape index: {}]
  %s17 = inlined_call_operand.<no memory space> [shape: f32[1,1], index: 17, kind: input, shape index: {}]
  %s18 = inlined_call_operand.vmem [shape: f32[8,1], index: 18, kind: output, shape index: {}]
  %s19 = sld [smem:[#allocation0]]
  $region147: #{tpu_custom_call.1} parent=0
    _
  %s21 = ssub.s32 1, %s19
  %s22 = scalar_select 0, %s21, %s19
  %v23 = vstv %s17
  %24 = vst [vmem:[#allocation6] sm:$0x1] %v23
  $region1: #{tpu_custom_call.1} parent=0
    #allocation7 [shape = 'u8[868352]{0}', space=vmem, size = 0xd4000, scoped, tag = 'input window, operand 1, single buffered']
    #allocation8 [shape = 's32[1]{0}', space=sflag, size = 0x4, scoped, tag = 'scoped memory for tpu_custom_call.1']
    #allocation9 [shape = 'u8[262144]{0}', space=vmem, size = 0x40000, scoped, tag = 'input window, operand 2, single buffered']
    #allocation10 [shape = 's32[1]{0}', space=sflag, size = 0x4, scoped, tag = 'scoped memory for tpu_custom_call.1']
    #allocation11 [shape = 'u8[2048]{0}', space=vmem, size = 0x800, scoped, tag = 'input window, operand 3, single buffered']
    #allocation12 [shape = 'u8[868352]{0}', space=vmem, size = 0xd4000, scoped, tag = 'input window, operand 4, single buffered']
    #allocation13 [shape = 's32[1]{0}', space=sflag, size = 0x4, scoped, tag = 'scoped memory for tpu_custom_call.1']
    #allocation14 [shape = 'u8[262144]{0}', space=vmem, size = 0x40000, scoped, tag = 'input window, operand 5, single buffered']
    #allocation15 [shape = 'u8[262144]{0}', space=vmem, size = 0x40000, scoped, tag = 'input window, operand 7, single buffered']
    #allocation16 [shape = 's32[1]{0}', space=sflag, size = 0x4, scoped, tag = 'scoped memory for tpu_custom_call.1']
    #allocation17 [shape = 'u8[262144]{0}', space=vmem, size = 0x40000, scoped, tag = 'input window, operand 8, single buffered']
    #allocation18 [shape = 'u8[262144]{0}', space=vmem, size = 0x40000, scoped, tag = 'input window, operand 9, single buffered']
    #allocation19 [shape = 's32[1]{0}', space=sflag, size = 0x4, scoped, tag = 'scoped memory for tpu_custom_call.1']
    #allocation20 [shape = 'u8[262144]{0}', space=vmem, size = 0x40000, scoped, tag = 'input window, operand 11, single buffered']
    #allocation21 [shape = 'u8[262144]{0}', space=vmem, size = 0x40000, scoped, tag = 'input window, operand 12, single buffered']
    #allocation22 [shape = 's32[1]{0}', space=sflag, size = 0x4, scoped, tag = 'scoped memory for tpu_custom_call.1']
    #allocation23 [shape = 'u8[262144]{0}', space=vmem, size = 0x40000, scoped, tag = 'input window, operand 13, single buffered']
    %25 = vsyncpa [#allocation8], 0
    %26 = vsyncpa [#allocation10], 0
    %27 = vsyncpa [#allocation13], 0
    %28 = vsyncpa [#allocation16], 0
    %29 = vsyncpa [#allocation19], 0
    %30 = vsyncpa [#allocation22], 0
    // Predicated region
    $region2: #{tpu_custom_call.1} parent=1 // pred_check
      _
    $region3: #{tpu_custom_call.1} parent=1 // pred_check_branch
      %32 = sbr.rel (0) target = $region5
    $region4: #{tpu_custom_call.1} parent=1 // pred_region
      _
    $region5: #{tpu_custom_call.1} parent=1 // pred_fallthru
      _
    // Predicated region
    $region6: #{tpu_custom_call.1} parent=1 // pred_check
      _
    $region7: #{tpu_custom_call.1} parent=1 // pred_check_branch
      %34 = sbr.rel (0) target = $region9
    $region8: #{tpu_custom_call.1} parent=1 // pred_region
      %36 = vsyncadd [#allocation8], 0
      %s37 = sshll.u32 %s1, 4
      %s38 = int_to_ptr.hbm [resolvable:$true] %s37
      %s39 = sshll.u32 [#allocation7], 4
      %s40 = int_to_ptr.vmem [resolvable:$true] %s39
      %45 = dma.hbm_to_vmem [thread:$0]  %s38, 27136, %s40, [#allocation8], 512, 512, 32
    $region9: #{tpu_custom_call.1} parent=1 // pred_fallthru
      _
    // Predicated region
    $region10: #{tpu_custom_call.1} parent=1 // pred_check
      _
    $region11: #{tpu_custom_call.1} parent=1 // pred_check_branch
      %47 = sbr.rel (0) target = $region13
    $region12: #{tpu_custom_call.1} parent=1 // pred_region
      %49 = vsyncadd [#allocation10], 0
      %s50 = sshll.u32 %s2, 4
      %s51 = int_to_ptr.hbm [resolvable:$true] %s50
      %s52 = sshll.u32 [#allocation9], 4
      %s53 = int_to_ptr.vmem [resolvable:$true] %s52
      %58 = dma.hbm_to_vmem [thread:$0]  %s51, 8192, %s53, [#allocation10], 512, 512, 32
    $region13: #{tpu_custom_call.1} parent=1 // pred_fallthru
      _
    // Predicated region
    $region14: #{tpu_custom_call.1} parent=1 // pred_check
      _
    $region15: #{tpu_custom_call.1} parent=1 // pred_check_branch
      %60 = sbr.rel (0) target = $region17
    $region16: #{tpu_custom_call.1} parent=1 // pred_region
      %62 = vsyncadd [#allocation10], 0
      %s64 = sshll.u32 %s3, 4
      %s65 = int_to_ptr.hbm [resolvable:$true] %s64
      %s66 = sshll.u32 [#allocation11], 4
      %s67 = int_to_ptr.vmem [resolvable:$true] %s66
      %69 = dma.hbm_to_vmem [thread:$0]  %s65, 64, %s67, [#allocation10]
    $region17: #{tpu_custom_call.1} parent=1 // pred_fallthru
      _
    // Predicated region
    $region18: #{tpu_custom_call.1} parent=1 // pred_check
      _
    $region19: #{tpu_custom_call.1} parent=1 // pred_check_branch
      %71 = sbr.rel (0) target = $region21
    $region20: #{tpu_custom_call.1} parent=1 // pred_region
      %73 = vsyncadd [#allocation13], 0
      %s74 = sshll.u32 %s4, 4
      %s75 = int_to_ptr.hbm [resolvable:$true] %s74
      %s76 = sshll.u32 [#allocation12], 4
      %s77 = int_to_ptr.vmem [resolvable:$true] %s76
      %82 = dma.hbm_to_vmem [thread:$0]  %s75, 27136, %s77, [#allocation13], 512, 512, 32
    $region21: #{tpu_custom_call.1} parent=1 // pred_fallthru
      _
    // Predicated region
    $region22: #{tpu_custom_call.1} parent=1 // pred_check
      _
    $region23: #{tpu_custom_call.1} parent=1 // pred_check_branch
      %84 = sbr.rel (0) target = $region25
    $region24: #{tpu_custom_call.1} parent=1 // pred_region
      %86 = vsyncadd [#allocation13], 0
      %s87 = sshll.u32 %s5, 4
      %s88 = int_to_ptr.hbm [resolvable:$true] %s87
      %s89 = sshll.u32 [#allocation14], 4
      %s90 = int_to_ptr.vmem [resolvable:$true] %s89
      %95 = dma.hbm_to_vmem [thread:$0]  %s88, 8192, %s90, [#allocation13], 512, 512, 32
    $region25: #{tpu_custom_call.1} parent=1 // pred_fallthru
      _
    // Predicated region
    $region26: #{tpu_custom_call.1} parent=1 // pred_check
      _
    $region27: #{tpu_custom_call.1} parent=1 // pred_check_branch
      %97 = sbr.rel (0) target = $region29
    $region28: #{tpu_custom_call.1} parent=1 // pred_region
      _
    $region29: #{tpu_custom_call.1} parent=1 // pred_fallthru
      _
    // Predicated region
    $region30: #{tpu_custom_call.1} parent=1 // pred_check
      _
    $region31: #{tpu_custom_call.1} parent=1 // pred_check_branch
      %99 = sbr.rel (0) target = $region33
    $region32: #{tpu_custom_call.1} parent=1 // pred_region
      %101 = vsyncadd [#allocation16], 0
      %s102 = sshll.u32 %s7, 4
      %s103 = int_to_ptr.hbm [resolvable:$true] %s102
      %s104 = sshll.u32 [#allocation15], 4
      %s105 = int_to_ptr.vmem [resolvable:$true] %s104
      %110 = dma.hbm_to_vmem [thread:$0]  %s103, 8192, %s105, [#allocation16], 512, 512, 32
    $region33: #{tpu_custom_call.1} parent=1 // pred_fallthru
      _
    // Predicated region
    $region34: #{tpu_custom_call.1} parent=1 // pred_check
      _
    $region35: #{tpu_custom_call.1} parent=1 // pred_check_branch
      %112 = sbr.rel (0) target = $region37
    $region36: #{tpu_custom_call.1} parent=1 // pred_region
      %114 = vsyncadd [#allocation16], 0
      %s115 = sshll.u32 %s8, 4
      %s116 = int_to_ptr.hbm [resolvable:$true] %s115
      %s117 = sshll.u32 [#allocation17], 4
      %s118 = int_to_ptr.vmem [resolvable:$true] %s117
      %123 = dma.hbm_to_vmem [thread:$0]  %s116, 8192, %s118, [#allocation16], 512, 512, 32
    $region37: #{tpu_custom_call.1} parent=1 // pred_fallthru
      _
    // Predicated region
    $region38: #{tpu_custom_call.1} parent=1 // pred_check
      _
    $region39: #{tpu_custom_call.1} parent=1 // pred_check_branch
      %125 = sbr.rel (0) target = $region41
    $region40: #{tpu_custom_call.1} parent=1 // pred_region
      %127 = vsyncadd [#allocation19], 0
      %s128 = sshll.u32 %s9, 4
      %s129 = int_to_ptr.hbm [resolvable:$true] %s128
      %s130 = sshll.u32 [#allocation18], 4
      %s131 = int_to_ptr.vmem [resolvable:$true] %s130
      %136 = dma.hbm_to_vmem [thread:$0]  %s129, 8192, %s131, [#allocation19], 512, 512, 32
    $region41: #{tpu_custom_call.1} parent=1 // pred_fallthru
      _
    // Predicated region
    $region42: #{tpu_custom_call.1} parent=1 // pred_check
      _
    $region43: #{tpu_custom_call.1} parent=1 // pred_check_branch
      %138 = sbr.rel (0) target = $region45
    $region44: #{tpu_custom_call.1} parent=1 // pred_region
      _
    $region45: #{tpu_custom_call.1} parent=1 // pred_fallthru
      _
    // Predicated region
    $region46: #{tpu_custom_call.1} parent=1 // pred_check
      _
    $region47: #{tpu_custom_call.1} parent=1 // pred_check_branch
      %140 = sbr.rel (0) target = $region49
    $region48: #{tpu_custom_call.1} parent=1 // pred_region
      %142 = vsyncadd [#allocation19], 0
      %s143 = sshll.u32 %s11, 4
      %s144 = int_to_ptr.hbm [resolvable:$true] %s143
      %s145 = sshll.u32 [#allocation20], 4
      %s146 = int_to_ptr.vmem [resolvable:$true] %s145
      %151 = dma.hbm_to_vmem [thread:$0]  %s144, 8192, %s146, [#allocation19], 512, 512, 32
    $region49: #{tpu_custom_call.1} parent=1 // pred_fallthru
      _
    // Predicated region
    $region50: #{tpu_custom_call.1} parent=1 // pred_check
      _
    $region51: #{tpu_custom_call.1} parent=1 // pred_check_branch
      %153 = sbr.rel (0) target = $region53
    $region52: #{tpu_custom_call.1} parent=1 // pred_region
      %155 = vsyncadd [#allocation22], 0
      %s156 = sshll.u32 %s12, 4
      %s157 = int_to_ptr.hbm [resolvable:$true] %s156
      %s158 = sshll.u32 [#allocation21], 4
      %s159 = int_to_ptr.vmem [resolvable:$true] %s158
      %164 = dma.hbm_to_vmem [thread:$0]  %s157, 8192, %s159, [#allocation22], 512, 512, 32
    $region53: #{tpu_custom_call.1} parent=1 // pred_fallthru
      _
    // Predicated region
    $region54: #{tpu_custom_call.1} parent=1 // pred_check
      _
    $region55: #{tpu_custom_call.1} parent=1 // pred_check_branch
      %166 = sbr.rel (0) target = $region57
    $region56: #{tpu_custom_call.1} parent=1 // pred_region
      %168 = vsyncadd [#allocation22], 0
      %s169 = sshll.u32 %s13, 4
      %s170 = int_to_ptr.hbm [resolvable:$true] %s169
      %s171 = sshll.u32 [#allocation23], 4
      %s172 = int_to_ptr.vmem [resolvable:$true] %s171
      %177 = dma.hbm_to_vmem [thread:$0]  %s170, 8192, %s172, [#allocation22], 512, 512, 32
    $region57: #{tpu_custom_call.1} parent=1 // pred_fallthru
      _
    // Predicated region
    $region58: #{tpu_custom_call.1} parent=1 // pred_check
      _
    $region59: #{tpu_custom_call.1} parent=1 // pred_check_branch
      %179 = sbr.rel (0) target = $region61
    $region60: #{tpu_custom_call.1} parent=1 // pred_region
      _
    $region61: #{tpu_custom_call.1} parent=1 // pred_fallthru
      _
    // Predicated region
    $region62: #{tpu_custom_call.1} parent=1 // pred_check
      _
    $region63: #{tpu_custom_call.1} parent=1 // pred_check_branch
      %181 = sbr.rel (0) target = $region65
    $region64: #{tpu_custom_call.1} parent=1 // pred_region
      _
    $region65: #{tpu_custom_call.1} parent=1 // pred_fallthru
      _
    // Predicated region
    $region66: #{tpu_custom_call.1} parent=1 // pred_check
      _
    $region67: #{tpu_custom_call.1} parent=1 // pred_check_branch
      %183 = sbr.rel (0) target = $region69
    $region68: #{tpu_custom_call.1} parent=1 // pred_region
      _
    $region69: #{tpu_custom_call.1} parent=1 // pred_fallthru
      _
    // Predicated region
    $region70: #{tpu_custom_call.1} parent=1 // pred_check
      _
    $region71: #{tpu_custom_call.1} parent=1 // pred_check_branch
      %185 = sbr.rel (0) target = $region73
    $region72: #{tpu_custom_call.1} parent=1 // pred_region
      _
    $region73: #{tpu_custom_call.1} parent=1 // pred_fallthru
      _
    // Predicated region
    $region74: #{tpu_custom_call.1} parent=1 // pred_check
      _
    $region75: #{tpu_custom_call.1} parent=1 // pred_check_branch
      %187 = sbr.rel (0) target = $region77
    $region76: #{tpu_custom_call.1} parent=1 // pred_region
      %189 = dma.done [#allocation8], 27136
    $region77: #{tpu_custom_call.1} parent=1 // pred_fallthru
      _
    // Predicated region
    $region78: #{tpu_custom_call.1} parent=1 // pred_check
      _
    $region79: #{tpu_custom_call.1} parent=1 // pred_check_branch
      %191 = sbr.rel (0) target = $region81
    $region80: #{tpu_custom_call.1} parent=1 // pred_region
      %193 = dma.done [#allocation10], 8192
    $region81: #{tpu_custom_call.1} parent=1 // pred_fallthru
      _
    // Predicated region
    $region82: #{tpu_custom_call.1} parent=1 // pred_check
      _
    $region83: #{tpu_custom_call.1} parent=1 // pred_check_branch
      %195 = sbr.rel (0) target = $region85
    $region84: #{tpu_custom_call.1} parent=1 // pred_region
      %197 = dma.done [#allocation10], 64
    $region85: #{tpu_custom_call.1} parent=1 // pred_fallthru
      _
    // Predicated region
    $region86: #{tpu_custom_call.1} parent=1 // pred_check
      _
    $region87: #{tpu_custom_call.1} parent=1 // pred_check_branch
      %199 = sbr.rel (0) target = $region89
    $region88: #{tpu_custom_call.1} parent=1 // pred_region
      %201 = dma.done [#allocation13], 27136
    $region89: #{tpu_custom_call.1} parent=1 // pred_fallthru
      _
    // Predicated region
    $region90: #{tpu_custom_call.1} parent=1 // pred_check
      _
    $region91: #{tpu_custom_call.1} parent=1 // pred_check_branch
      %203 = sbr.rel (0) target = $region93
    $region92: #{tpu_custom_call.1} parent=1 // pred_region
      %205 = dma.done [#allocation13], 8192
    $region93: #{tpu_custom_call.1} parent=1 // pred_fallthru
      _
    // Predicated region
    $region94: #{tpu_custom_call.1} parent=1 // pred_check
      _
    $region95: #{tpu_custom_call.1} parent=1 // pred_check_branch
      %207 = sbr.rel (0) target = $region97
    $region96: #{tpu_custom_call.1} parent=1 // pred_region
      %209 = dma.done [#allocation16], 8192
    $region97: #{tpu_custom_call.1} parent=1 // pred_fallthru
      _
    // Predicated region
    $region98: #{tpu_custom_call.1} parent=1 // pred_check
      _
    $region99: #{tpu_custom_call.1} parent=1 // pred_check_branch
      %211 = sbr.rel (0) target = $region101
    $region100: #{tpu_custom_call.1} parent=1 // pred_region
      %213 = dma.done [#allocation16], 8192
    $region101: #{tpu_custom_call.1} parent=1 // pred_fallthru
      _
    // Predicated region
    $region102: #{tpu_custom_call.1} parent=1 // pred_check
      _
    $region103: #{tpu_custom_call.1} parent=1 // pred_check_branch
      %215 = sbr.rel (0) target = $region105
    $region104: #{tpu_custom_call.1} parent=1 // pred_region
      %217 = dma.done [#allocation19], 8192
    $region105: #{tpu_custom_call.1} parent=1 // pred_fallthru
      _
    // Predicated region
    $region106: #{tpu_custom_call.1} parent=1 // pred_check
      _
    $region107: #{tpu_custom_call.1} parent=1 // pred_check_branch
      %219 = sbr.rel (0) target = $region109
    $region108: #{tpu_custom_call.1} parent=1 // pred_region
      %221 = dma.done [#allocation19], 8192
    $region109: #{tpu_custom_call.1} parent=1 // pred_fallthru
      _
    // Predicated region
    $region110: #{tpu_custom_call.1} parent=1 // pred_check
      _
    $region111: #{tpu_custom_call.1} parent=1 // pred_check_branch
      %223 = sbr.rel (0) target = $region113
    $region112: #{tpu_custom_call.1} parent=1 // pred_region
      %225 = dma.done [#allocation22], 8192
    $region113: #{tpu_custom_call.1} parent=1 // pred_fallthru
      _
    // Predicated region
    $region114: #{tpu_custom_call.1} parent=1 // pred_check
      _
    $region115: #{tpu_custom_call.1} parent=1 // pred_check_branch
      %227 = sbr.rel (0) target = $region117
    $region116: #{tpu_custom_call.1} parent=1 // pred_region
      %229 = dma.done [#allocation22], 8192
    $region117: #{tpu_custom_call.1} parent=1 // pred_fallthru
      _
    %230 = vst [vmem:[#allocation4] sm:$0xff] 0.0
    %231 = vst [vmem:[#allocation5] sm:$0xff] 0.0
    loop: start=0, step=1, limit=8
    $region118: #{tpu_custom_call.1} parent=1 // loop_pre_header
      _
    $region119: #{tpu_custom_call.1} parent=1 // loop_header
      %s233 = sphi 0, %s237
      %p234 = scmp.ge.s32.totalorder %s233, 8
    $region120: #{tpu_custom_call.1} parent=1 // loop_header_branch
      %236 = sbr.rel (%p234) target = $region124
    $region121: #{tpu_custom_call.1} parent=1 // loop_body
      %s238 = smul.u32 %s233, 4
      %s239 = smul.addr %s238, 8
      %s240 = scalar_lea.vmem %s0, %s239
      %v241 = vld [vmem:[%s240] sm:$0xff]
      %v242 = vld [vmem:[%s240 + $0x8] sm:$0xff]
      %v243 = vld [vmem:[%s240 + $0x10] sm:$0xff]
      %v244 = vld [vmem:[%s240 + $0x18] sm:$0xff]
      %v245 = vld [vmem:[#allocation7] sm:$0xff]
      %v246 = vld [vmem:[#allocation7 + $0x8] sm:$0xff]
      %v247 = vld [vmem:[#allocation7 + $0x10] sm:$0xff]
      %v248 = vld [vmem:[#allocation7 + $0x18] sm:$0xff]
      %v249 = vld [vmem:[#allocation7 + $0x20] sm:$0xff]
      %v250 = vld [vmem:[#allocation7 + $0x28] sm:$0xff]
      %v251 = vld [vmem:[#allocation7 + $0x30] sm:$0xff]
      %v252 = vld [vmem:[#allocation7 + $0x38] sm:$0xff]
      %v253 = vld [vmem:[#allocation7 + $0x40] sm:$0xff]
      %v254 = vld [vmem:[#allocation7 + $0x48] sm:$0xff]
      %v255 = vld [vmem:[#allocation7 + $0x50] sm:$0xff]
      %v256 = vld [vmem:[#allocation7 + $0x58] sm:$0xff]
      %v257 = vld [vmem:[#allocation7 + $0x60] sm:$0xff]
      %v258 = vld [vmem:[#allocation7 + $0x68] sm:$0xff]
      %v259 = vld [vmem:[#allocation7 + $0x70] sm:$0xff]
      %v260 = vld [vmem:[#allocation7 + $0x78] sm:$0xff]
      %v261 = vld [vmem:[#allocation7 + $0x80] sm:$0xff]
      %v262 = vld [vmem:[#allocation7 + $0x88] sm:$0xff]
      %v263 = vld [vmem:[#allocation7 + $0x90] sm:$0xff]
      %v264 = vld [vmem:[#allocation7 + $0x98] sm:$0xff]
      %v265 = vld [vmem:[#allocation7 + $0xa0] sm:$0xff]
      %v266 = vld [vmem:[#allocation7 + $0xa8] sm:$0xff]
      %v267 = vld [vmem:[#allocation7 + $0xb0] sm:$0xff]
      %v268 = vld [vmem:[#allocation7 + $0xb8] sm:$0xff]
      %v269 = vld [vmem:[#allocation7 + $0xc0] sm:$0xff]
      %v270 = vld [vmem:[#allocation7 + $0xc8] sm:$0xff]
      %v271 = vld [vmem:[#allocation7 + $0xd0] sm:$0xff]
      %v272 = vld [vmem:[#allocation7 + $0xd8] sm:$0xff]
      %v273 = vld [vmem:[#allocation7 + $0xe0] sm:$0xff]
      %v274 = vld [vmem:[#allocation7 + $0xe8] sm:$0xff]
      %v275 = vld [vmem:[#allocation7 + $0xf0] sm:$0xff]
      %v276 = vld [vmem:[#allocation7 + $0xf8] sm:$0xff]
      %v277 = vld [vmem:[#allocation7 + $0x100] sm:$0xff]
      %v278 = vld [vmem:[#allocation7 + $0x108] sm:$0xff]
      %v279 = vld [vmem:[#allocation7 + $0x110] sm:$0xff]
      %v280 = vld [vmem:[#allocation7 + $0x118] sm:$0xff]
      %v281 = vld [vmem:[#allocation7 + $0x120] sm:$0xff]
      %v282 = vld [vmem:[#allocation7 + $0x128] sm:$0xff]
      %v283 = vld [vmem:[#allocation7 + $0x130] sm:$0xff]
      %v284 = vld [vmem:[#allocation7 + $0x138] sm:$0xff]
      %v285 = vld [vmem:[#allocation7 + $0x140] sm:$0xff]
      %v286 = vld [vmem:[#allocation7 + $0x148] sm:$0xff]
      %v287 = vld [vmem:[#allocation7 + $0x150] sm:$0xff]
      %v288 = vld [vmem:[#allocation7 + $0x158] sm:$0xff]
      %v289 = vld [vmem:[#allocation7 + $0x160] sm:$0xff]
      %v290 = vld [vmem:[#allocation7 + $0x168] sm:$0xff]
      %v291 = vld [vmem:[#allocation7 + $0x170] sm:$0xff]
      %v292 = vld [vmem:[#allocation7 + $0x178] sm:$0xff]
      %v293 = vld [vmem:[#allocation7 + $0x180] sm:$0xff]
      %v294 = vld [vmem:[#allocation7 + $0x188] sm:$0xff]
      %v295 = vld [vmem:[#allocation7 + $0x190] sm:$0xff]
      %v296 = vld [vmem:[#allocation7 + $0x198] sm:$0xff]
      %v297 = vld [vmem:[#allocation7 + $0x1a0] sm:$0xff]
      %v298 = vld [vmem:[#allocation7 + $0x1a8] sm:$0xff]
      %v299 = vld [vmem:[#allocation7 + $0x1b0] sm:$0xff]
      %v300 = vld [vmem:[#allocation7 + $0x1b8] sm:$0xff]
      %v301 = vld [vmem:[#allocation7 + $0x1c0] sm:$0xff]
      %v302 = vld [vmem:[#allocation7 + $0x1c8] sm:$0xff]
      %v303 = vld [vmem:[#allocation7 + $0x1d0] sm:$0xff]
      %v304 = vld [vmem:[#allocation7 + $0x1d8] sm:$0xff]
      %v305 = vld [vmem:[#allocation7 + $0x1e0] sm:$0xff]
      %v306 = vld [vmem:[#allocation7 + $0x1e8] sm:$0xff]
      %v307 = vld [vmem:[#allocation7 + $0x1f0] sm:$0xff]
      %v308 = vld [vmem:[#allocation7 + $0x1f8] sm:$0xff]
      %v309 = vld [vmem:[#allocation7 + $0x200] sm:$0xff]
      %v310 = vld [vmem:[#allocation7 + $0x208] sm:$0xff]
      %v311 = vld [vmem:[#allocation7 + $0x210] sm:$0xff]
      %v312 = vld [vmem:[#allocation7 + $0x218] sm:$0xff]
      %v313 = vld [vmem:[#allocation7 + $0x220] sm:$0xff]
      %v314 = vld [vmem:[#allocation7 + $0x228] sm:$0xff]
      %v315 = vld [vmem:[#allocation7 + $0x230] sm:$0xff]
      %v316 = vld [vmem:[#allocation7 + $0x238] sm:$0xff]
      %v317 = vld [vmem:[#allocation7 + $0x240] sm:$0xff]
      %v318 = vld [vmem:[#allocation7 + $0x248] sm:$0xff]
      %v319 = vld [vmem:[#allocation7 + $0x250] sm:$0xff]
      %v320 = vld [vmem:[#allocation7 + $0x258] sm:$0xff]
      %v321 = vld [vmem:[#allocation7 + $0x260] sm:$0xff]
      %v322 = vld [vmem:[#allocation7 + $0x268] sm:$0xff]
      %v323 = vld [vmem:[#allocation7 + $0x270] sm:$0xff]
      %v324 = vld [vmem:[#allocation7 + $0x278] sm:$0xff]
      %v325 = vld [vmem:[#allocation7 + $0x280] sm:$0xff]
      %v326 = vld [vmem:[#allocation7 + $0x288] sm:$0xff]
      %v327 = vld [vmem:[#allocation7 + $0x290] sm:$0xff]
      %v328 = vld [vmem:[#allocation7 + $0x298] sm:$0xff]
      %v329 = vld [vmem:[#allocation7 + $0x2a0] sm:$0xff]
      %v330 = vld [vmem:[#allocation7 + $0x2a8] sm:$0xff]
      %v331 = vld [vmem:[#allocation7 + $0x2b0] sm:$0xff]
      %v332 = vld [vmem:[#allocation7 + $0x2b8] sm:$0xff]
      %v333 = vld [vmem:[#allocation7 + $0x2c0] sm:$0xff]
      %v334 = vld [vmem:[#allocation7 + $0x2c8] sm:$0xff]
      %v335 = vld [vmem:[#allocation7 + $0x2d0] sm:$0xff]
      %v336 = vld [vmem:[#allocation7 + $0x2d8] sm:$0xff]
      %v337 = vld [vmem:[#allocation7 + $0x2e0] sm:$0xff]
      %v338 = vld [vmem:[#allocation7 + $0x2e8] sm:$0xff]
      %v339 = vld [vmem:[#allocation7 + $0x2f0] sm:$0xff]
      %v340 = vld [vmem:[#allocation7 + $0x2f8] sm:$0xff]
      %v341 = vld [vmem:[#allocation7 + $0x300] sm:$0xff]
      %v342 = vld [vmem:[#allocation7 + $0x308] sm:$0xff]
      %v343 = vld [vmem:[#allocation7 + $0x310] sm:$0xff]
      %v344 = vld [vmem:[#allocation7 + $0x318] sm:$0xff]
      %v345 = vld [vmem:[#allocation7 + $0x320] sm:$0xff]
      %v346 = vld [vmem:[#allocation7 + $0x328] sm:$0xff]
      %v347 = vld [vmem:[#allocation7 + $0x330] sm:$0xff]
      %v348 = vld [vmem:[#allocation7 + $0x338] sm:$0xff]
      %v349 = vld [vmem:[#allocation7 + $0x340] sm:$0xff]
      %v350 = vld [vmem:[#allocation7 + $0x348] sm:$0xff]
      %v351 = vld [vmem:[#allocation7 + $0x350] sm:$0xff]
      %v352 = vld [vmem:[#allocation7 + $0x358] sm:$0xff]
      %v353 = vld [vmem:[#allocation7 + $0x360] sm:$0xff]
      %v354 = vld [vmem:[#allocation7 + $0x368] sm:$0xff]
      %v355 = vld [vmem:[#allocation7 + $0x370] sm:$0xff]
      %v356 = vld [vmem:[#allocation7 + $0x378] sm:$0xff]
      %v357 = vld [vmem:[#allocation7 + $0x380] sm:$0xff]
      %v358 = vld [vmem:[#allocation7 + $0x388] sm:$0xff]
      %v359 = vld [vmem:[#allocation7 + $0x390] sm:$0xff]
      %v360 = vld [vmem:[#allocation7 + $0x398] sm:$0xff]
      %v361 = vld [vmem:[#allocation7 + $0x3a0] sm:$0xff]
      %v362 = vld [vmem:[#allocation7 + $0x3a8] sm:$0xff]
      %v363 = vld [vmem:[#allocation7 + $0x3b0] sm:$0xff]
      %v364 = vld [vmem:[#allocation7 + $0x3b8] sm:$0xff]
      %v365 = vld [vmem:[#allocation7 + $0x3c0] sm:$0xff]
      %v366 = vld [vmem:[#allocation7 + $0x3c8] sm:$0xff]
      %v367 = vld [vmem:[#allocation7 + $0x3d0] sm:$0xff]
      %v368 = vld [vmem:[#allocation7 + $0x3d8] sm:$0xff]
      %v369 = vld [vmem:[#allocation7 + $0x3e0] sm:$0xff]
      %v370 = vld [vmem:[#allocation7 + $0x3e8] sm:$0xff]
      %v371 = vld [vmem:[#allocation7 + $0x3f0] sm:$0xff]
      %v372 = vld [vmem:[#allocation7 + $0x3f8] sm:$0xff]
      %v373 = vld [vmem:[#allocation7 + $0x400] sm:$0xff]
      %v374 = vld [vmem:[#allocation7 + $0x408] sm:$0xff]
      %v375 = vld [vmem:[#allocation7 + $0x410] sm:$0xff]
      %v376 = vld [vmem:[#allocation7 + $0x418] sm:$0xff]
      %v377 = vld [vmem:[#allocation7 + $0x420] sm:$0xff]
      %v378 = vld [vmem:[#allocation7 + $0x428] sm:$0xff]
      %v379 = vld [vmem:[#allocation7 + $0x430] sm:$0xff]
      %v380 = vld [vmem:[#allocation7 + $0x438] sm:$0xff]
      %v381 = vld [vmem:[#allocation7 + $0x440] sm:$0xff]
      %v382 = vld [vmem:[#allocation7 + $0x448] sm:$0xff]
      %v383 = vld [vmem:[#allocation7 + $0x450] sm:$0xff]
      %v384 = vld [vmem:[#allocation7 + $0x458] sm:$0xff]
      %v385 = vld [vmem:[#allocation7 + $0x460] sm:$0xff]
      %v386 = vld [vmem:[#allocation7 + $0x468] sm:$0xff]
      %v387 = vld [vmem:[#allocation7 + $0x470] sm:$0xff]
      %v388 = vld [vmem:[#allocation7 + $0x478] sm:$0xff]
      %v389 = vld [vmem:[#allocation7 + $0x480] sm:$0xff]
      %v390 = vld [vmem:[#allocation7 + $0x488] sm:$0xff]
      %v391 = vld [vmem:[#allocation7 + $0x490] sm:$0xff]
      %v392 = vld [vmem:[#allocation7 + $0x498] sm:$0xff]
      %v393 = vld [vmem:[#allocation7 + $0x4a0] sm:$0xff]
      %v394 = vld [vmem:[#allocation7 + $0x4a8] sm:$0xff]
      %v395 = vld [vmem:[#allocation7 + $0x4b0] sm:$0xff]
      %v396 = vld [vmem:[#allocation7 + $0x4b8] sm:$0xff]
      %v397 = vld [vmem:[#allocation7 + $0x4c0] sm:$0xff]
      %v398 = vld [vmem:[#allocation7 + $0x4c8] sm:$0xff]
      %v399 = vld [vmem:[#allocation7 + $0x4d0] sm:$0xff]
      %v400 = vld [vmem:[#allocation7 + $0x4d8] sm:$0xff]
      %v401 = vld [vmem:[#allocation7 + $0x4e0] sm:$0xff]
      %v402 = vld [vmem:[#allocation7 + $0x4e8] sm:$0xff]
      %v403 = vld [vmem:[#allocation7 + $0x4f0] sm:$0xff]
      %v404 = vld [vmem:[#allocation7 + $0x4f8] sm:$0xff]
      %v405 = vld [vmem:[#allocation7 + $0x500] sm:$0xff]
      %v406 = vld [vmem:[#allocation7 + $0x508] sm:$0xff]
      %v407 = vld [vmem:[#allocation7 + $0x510] sm:$0xff]
      %v408 = vld [vmem:[#allocation7 + $0x518] sm:$0xff]
      %v409 = vld [vmem:[#allocation7 + $0x520] sm:$0xff]
      %v410 = vld [vmem:[#allocation7 + $0x528] sm:$0xff]
      %v411 = vld [vmem:[#allocation7 + $0x530] sm:$0xff]
      %v412 = vld [vmem:[#allocation7 + $0x538] sm:$0xff]
      %v413 = vld [vmem:[#allocation7 + $0x540] sm:$0xff]
      %v414 = vld [vmem:[#allocation7 + $0x548] sm:$0xff]
      %v415 = vld [vmem:[#allocation7 + $0x550] sm:$0xff]
      %v416 = vld [vmem:[#allocation7 + $0x558] sm:$0xff]
      %v417 = vld [vmem:[#allocation7 + $0x560] sm:$0xff]
      %v418 = vld [vmem:[#allocation7 + $0x568] sm:$0xff]
      %v419 = vld [vmem:[#allocation7 + $0x570] sm:$0xff]
      %v420 = vld [vmem:[#allocation7 + $0x578] sm:$0xff]
      %v421 = vld [vmem:[#allocation7 + $0x580] sm:$0xff]
      %v422 = vld [vmem:[#allocation7 + $0x588] sm:$0xff]
      %v423 = vld [vmem:[#allocation7 + $0x590] sm:$0xff]
      %v424 = vld [vmem:[#allocation7 + $0x598] sm:$0xff]
      %v425 = vld [vmem:[#allocation7 + $0x5a0] sm:$0xff]
      %v426 = vld [vmem:[#allocation7 + $0x5a8] sm:$0xff]
      %v427 = vld [vmem:[#allocation7 + $0x5b0] sm:$0xff]
      %v428 = vld [vmem:[#allocation7 + $0x5b8] sm:$0xff]
      %v429 = vld [vmem:[#allocation7 + $0x5c0] sm:$0xff]
      %v430 = vld [vmem:[#allocation7 + $0x5c8] sm:$0xff]
      %v431 = vld [vmem:[#allocation7 + $0x5d0] sm:$0xff]
      %v432 = vld [vmem:[#allocation7 + $0x5d8] sm:$0xff]
      %v433 = vld [vmem:[#allocation7 + $0x5e0] sm:$0xff]
      %v434 = vld [vmem:[#allocation7 + $0x5e8] sm:$0xff]
      %v435 = vld [vmem:[#allocation7 + $0x5f0] sm:$0xff]
      %v436 = vld [vmem:[#allocation7 + $0x5f8] sm:$0xff]
      %v437 = vld [vmem:[#allocation7 + $0x600] sm:$0xff]
      %v438 = vld [vmem:[#allocation7 + $0x608] sm:$0xff]
      %v439 = vld [vmem:[#allocation7 + $0x610] sm:$0xff]
      %v440 = vld [vmem:[#allocation7 + $0x618] sm:$0xff]
      %v441 = vld [vmem:[#allocation7 + $0x620] sm:$0xff]
      %v442 = vld [vmem:[#allocation7 + $0x628] sm:$0xff]
      %v443 = vld [vmem:[#allocation7 + $0x630] sm:$0xff]
      %v444 = vld [vmem:[#allocation7 + $0x638] sm:$0xff]
      %v445 = vld [vmem:[#allocation7 + $0x640] sm:$0xff]
      %v446 = vld [vmem:[#allocation7 + $0x648] sm:$0xff]
      %v447 = vld [vmem:[#allocation7 + $0x650] sm:$0xff]
      %v448 = vld [vmem:[#allocation7 + $0x658] sm:$0xff]
      %v449 = vld [vmem:[#allocation7 + $0x660] sm:$0xff]
      %v450 = vld [vmem:[#allocation7 + $0x668] sm:$0xff]
      %v451 = vld [vmem:[#allocation7 + $0x670] sm:$0xff]
      %v452 = vld [vmem:[#allocation7 + $0x678] sm:$0xff]
      %v453 = vld [vmem:[#allocation7 + $0x680] sm:$0xf]
      %v454 = vld [vmem:[#allocation7 + $0x688] sm:$0xf]
      %v455 = vld [vmem:[#allocation7 + $0x690] sm:$0xf]
      %v456 = vld [vmem:[#allocation7 + $0x698] sm:$0xf]
      %v457 = vld [vmem:[#allocation4] sm:$0xff]
      %v458 = vld [vmem:[#allocation9] sm:$0xff]
      %v459 = vld [vmem:[#allocation9 + $0x8] sm:$0xff]
      %v460 = vld [vmem:[#allocation9 + $0x10] sm:$0xff]
      %v461 = vld [vmem:[#allocation9 + $0x18] sm:$0xff]
      %v462 = vld [vmem:[#allocation9 + $0x20] sm:$0xff]
      %v463 = vld [vmem:[#allocation9 + $0x28] sm:$0xff]
      %v464 = vld [vmem:[#allocation9 + $0x30] sm:$0xff]
      %v465 = vld [vmem:[#allocation9 + $0x38] sm:$0xff]
      %v466 = vld [vmem:[#allocation9 + $0x40] sm:$0xff]
      %v467 = vld [vmem:[#allocation9 + $0x48] sm:$0xff]
      %v468 = vld [vmem:[#allocation9 + $0x50] sm:$0xff]
      %v469 = vld [vmem:[#allocation9 + $0x58] sm:$0xff]
      %v470 = vld [vmem:[#allocation9 + $0x60] sm:$0xff]
      %v471 = vld [vmem:[#allocation9 + $0x68] sm:$0xff]
      %v472 = vld [vmem:[#allocation9 + $0x70] sm:$0xff]
      %v473 = vld [vmem:[#allocation9 + $0x78] sm:$0xff]
      %v474 = vld [vmem:[#allocation9 + $0x80] sm:$0xff]
      %v475 = vld [vmem:[#allocation9 + $0x88] sm:$0xff]
      %v476 = vld [vmem:[#allocation9 + $0x90] sm:$0xff]
      %v477 = vld [vmem:[#allocation9 + $0x98] sm:$0xff]
      %v478 = vld [vmem:[#allocation9 + $0xa0] sm:$0xff]
      %v479 = vld [vmem:[#allocation9 + $0xa8] sm:$0xff]
      %v480 = vld [vmem:[#allocation9 + $0xb0] sm:$0xff]
      %v481 = vld [vmem:[#allocation9 + $0xb8] sm:$0xff]
      %v482 = vld [vmem:[#allocation9 + $0xc0] sm:$0xff]
      %v483 = vld [vmem:[#allocation9 + $0xc8] sm:$0xff]
      %v484 = vld [vmem:[#allocation9 + $0xd0] sm:$0xff]
      %v485 = vld [vmem:[#allocation9 + $0xd8] sm:$0xff]
      %v486 = vld [vmem:[#allocation9 + $0xe0] sm:$0xff]
      %v487 = vld [vmem:[#allocation9 + $0xe8] sm:$0xff]
      %v488 = vld [vmem:[#allocation9 + $0xf0] sm:$0xff]
      %v489 = vld [vmem:[#allocation9 + $0xf8] sm:$0xff]
      %v490 = vld [vmem:[#allocation9 + $0x100] sm:$0xff]
      %v491 = vld [vmem:[#allocation9 + $0x108] sm:$0xff]
      %v492 = vld [vmem:[#allocation9 + $0x110] sm:$0xff]
      %v493 = vld [vmem:[#allocation9 + $0x118] sm:$0xff]
      %v494 = vld [vmem:[#allocation9 + $0x120] sm:$0xff]
      %v495 = vld [vmem:[#allocation9 + $0x128] sm:$0xff]
      %v496 = vld [vmem:[#allocation9 + $0x130] sm:$0xff]
      %v497 = vld [vmem:[#allocation9 + $0x138] sm:$0xff]
      %v498 = vld [vmem:[#allocation9 + $0x140] sm:$0xff]
      %v499 = vld [vmem:[#allocation9 + $0x148] sm:$0xff]
      %v500 = vld [vmem:[#allocation9 + $0x150] sm:$0xff]
      %v501 = vld [vmem:[#allocation9 + $0x158] sm:$0xff]
      %v502 = vld [vmem:[#allocation9 + $0x160] sm:$0xff]
      %v503 = vld [vmem:[#allocation9 + $0x168] sm:$0xff]
      %v504 = vld [vmem:[#allocation9 + $0x170] sm:$0xff]
      %v505 = vld [vmem:[#allocation9 + $0x178] sm:$0xff]
      %v506 = vld [vmem:[#allocation9 + $0x180] sm:$0xff]
      %v507 = vld [vmem:[#allocation9 + $0x188] sm:$0xff]
      %v508 = vld [vmem:[#allocation9 + $0x190] sm:$0xff]
      %v509 = vld [vmem:[#allocation9 + $0x198] sm:$0xff]
      %v510 = vld [vmem:[#allocation9 + $0x1a0] sm:$0xff]
      %v511 = vld [vmem:[#allocation9 + $0x1a8] sm:$0xff]
      %v512 = vld [vmem:[#allocation9 + $0x1b0] sm:$0xff]
      %v513 = vld [vmem:[#allocation9 + $0x1b8] sm:$0xff]
      %v514 = vld [vmem:[#allocation9 + $0x1c0] sm:$0xff]
      %v515 = vld [vmem:[#allocation9 + $0x1c8] sm:$0xff]
      %v516 = vld [vmem:[#allocation9 + $0x1d0] sm:$0xff]
      %v517 = vld [vmem:[#allocation9 + $0x1d8] sm:$0xff]
      %v518 = vld [vmem:[#allocation9 + $0x1e0] sm:$0xff]
      %v519 = vld [vmem:[#allocation9 + $0x1e8] sm:$0xff]
      %v520 = vld [vmem:[#allocation9 + $0x1f0] sm:$0xff]
      %v521 = vld [vmem:[#allocation9 + $0x1f8] sm:$0xff]
      %522 = vmatpush.msra.mxu0 %v518
      %523 = vmatpush.msra.mxu0 %v514
      %524 = vmatpush.msra.mxu0 %v510
      %525 = vmatpush.msra.mxu0 %v506
      %526 = vmatpush.msra.mxu0 %v502
      %527 = vmatpush.msra.mxu0 %v498
      %528 = vmatpush.msra.mxu0 %v494
      %529 = vmatpush.msra.mxu0 %v490
      %530 = vmatpush.msra.mxu0 %v486
      %531 = vmatpush.msra.mxu0 %v482
      %532 = vmatpush.msra.mxu0 %v478
      %533 = vmatpush.msra.mxu0 %v474
      %534 = vmatpush.msra.mxu0 %v470
      %535 = vmatpush.msra.mxu0 %v466
      %536 = vmatpush.msra.mxu0 %v462
      %537 = vmatpush.msra.mxu0 %v458
      %538 = vmatmul.f32.gmra.mxu0 %v457
      %v539 = vpop.f32.mrf.mxu0
      %v540 = vadd.f32 0.0, %v539
      %541 = vdwg.mxu0
      %542 = vmatpush.msra.mxu0 %v519
      %543 = vmatpush.msra.mxu0 %v515
      %544 = vmatpush.msra.mxu0 %v511
      %545 = vmatpush.msra.mxu0 %v507
      %546 = vmatpush.msra.mxu0 %v503
      %547 = vmatpush.msra.mxu0 %v499
      %548 = vmatpush.msra.mxu0 %v495
      %549 = vmatpush.msra.mxu0 %v491
      %550 = vmatpush.msra.mxu0 %v487
      %551 = vmatpush.msra.mxu0 %v483
      %552 = vmatpush.msra.mxu0 %v479
      %553 = vmatpush.msra.mxu0 %v475
      %554 = vmatpush.msra.mxu0 %v471
      %555 = vmatpush.msra.mxu0 %v467
      %556 = vmatpush.msra.mxu0 %v463
      %557 = vmatpush.msra.mxu0 %v459
      %558 = vmatmul.f32.gmra.mxu0 %v457
      %v559 = vpop.f32.mrf.mxu0
      %v560 = vadd.f32 0.0, %v559
      %561 = vdwg.mxu0
      %562 = vmatpush.msra.mxu0 %v520
      %563 = vmatpush.msra.mxu0 %v516
      %564 = vmatpush.msra.mxu0 %v512
      %565 = vmatpush.msra.mxu0 %v508
      %566 = vmatpush.msra.mxu0 %v504
      %567 = vmatpush.msra.mxu0 %v500
      %568 = vmatpush.msra.mxu0 %v496
      %569 = vmatpush.msra.mxu0 %v492
      %570 = vmatpush.msra.mxu0 %v488
      %571 = vmatpush.msra.mxu0 %v484
      %572 = vmatpush.msra.mxu0 %v480
      %573 = vmatpush.msra.mxu0 %v476
      %574 = vmatpush.msra.mxu0 %v472
      %575 = vmatpush.msra.mxu0 %v468
      %576 = vmatpush.msra.mxu0 %v464
      %577 = vmatpush.msra.mxu0 %v460
      %578 = vmatmul.f32.gmra.mxu0 %v457
      %v579 = vpop.f32.mrf.mxu0
      %v580 = vadd.f32 0.0, %v579
      %581 = vdwg.mxu0
      %582 = vmatpush.msra.mxu0 %v521
      %583 = vmatpush.msra.mxu0 %v517
      %584 = vmatpush.msra.mxu0 %v513
      %585 = vmatpush.msra.mxu0 %v509
      %586 = vmatpush.msra.mxu0 %v505
      %587 = vmatpush.msra.mxu0 %v501
      %588 = vmatpush.msra.mxu0 %v497
      %589 = vmatpush.msra.mxu0 %v493
      %590 = vmatpush.msra.mxu0 %v489
      %591 = vmatpush.msra.mxu0 %v485
      %592 = vmatpush.msra.mxu0 %v481
      %593 = vmatpush.msra.mxu0 %v477
      %594 = vmatpush.msra.mxu0 %v473
      %595 = vmatpush.msra.mxu0 %v469
      %596 = vmatpush.msra.mxu0 %v465
      %597 = vmatpush.msra.mxu0 %v461
      %598 = vmatmul.f32.gmra.mxu0 %v457
      %v599 = vpop.f32.mrf.mxu0
      %v600 = vadd.f32 0.0, %v599
      %601 = vdwg.mxu0
      %vm602 = vcmask 293888
      %v604 = vsel %vm602, %v244, 0
      %vm606 = vcmask 1043456
      %v608 = vsel %vm606, %v453, 0
      %v611 = vsel %vm606, %v454, 0
      %v614 = vsel %vm606, %v455, 0
      %v617 = vsel %vm606, %v456, 0
      %619 = vmatpush.msra.mxu0 %v305
      %620 = vmatpush.msra.mxu0 %v301
      %621 = vmatpush.msra.mxu0 %v297
      %622 = vmatpush.msra.mxu0 %v293
      %623 = vmatpush.msra.mxu0 %v289
      %624 = vmatpush.msra.mxu0 %v285
      %625 = vmatpush.msra.mxu0 %v281
      %626 = vmatpush.msra.mxu0 %v277
      %627 = vmatpush.msra.mxu0 %v273
      %628 = vmatpush.msra.mxu0 %v269
      %629 = vmatpush.msra.mxu0 %v265
      %630 = vmatpush.msra.mxu0 %v261
      %631 = vmatpush.msra.mxu0 %v257
      %632 = vmatpush.msra.mxu0 %v253
      %633 = vmatpush.msra.mxu0 %v249
      %634 = vmatpush.msra.mxu0 %v245
      %635 = vmatmul.f32.gmra.mxu0 %v241
      %v636 = vpop.f32.mrf.mxu0
      %v637 = vadd.f32 %v540, %v636
      %638 = vdwg.mxu0
      %639 = vmatpush.msra.mxu0 %v369
      %640 = vmatpush.msra.mxu0 %v365
      %641 = vmatpush.msra.mxu0 %v361
      %642 = vmatpush.msra.mxu0 %v357
      %643 = vmatpush.msra.mxu0 %v353
      %644 = vmatpush.msra.mxu0 %v349
      %645 = vmatpush.msra.mxu0 %v345
      %646 = vmatpush.msra.mxu0 %v341
      %647 = vmatpush.msra.mxu0 %v337
      %648 = vmatpush.msra.mxu0 %v333
      %649 = vmatpush.msra.mxu0 %v329
      %650 = vmatpush.msra.mxu0 %v325
      %651 = vmatpush.msra.mxu0 %v321
      %652 = vmatpush.msra.mxu0 %v317
      %653 = vmatpush.msra.mxu0 %v313
      %654 = vmatpush.msra.mxu0 %v309
      %655 = vmatmul.f32.gmra.mxu0 %v242
      %v656 = vpop.f32.mrf.mxu0
      %v657 = vadd.f32 %v637, %v656
      %658 = vdwg.mxu0
      %659 = vmatpush.msra.mxu0 %v433
      %660 = vmatpush.msra.mxu0 %v429
      %661 = vmatpush.msra.mxu0 %v425
      %662 = vmatpush.msra.mxu0 %v421
      %663 = vmatpush.msra.mxu0 %v417
      %664 = vmatpush.msra.mxu0 %v413
      %665 = vmatpush.msra.mxu0 %v409
      %666 = vmatpush.msra.mxu0 %v405
      %667 = vmatpush.msra.mxu0 %v401
      %668 = vmatpush.msra.mxu0 %v397
      %669 = vmatpush.msra.mxu0 %v393
      %670 = vmatpush.msra.mxu0 %v389
      %671 = vmatpush.msra.mxu0 %v385
      %672 = vmatpush.msra.mxu0 %v381
      %673 = vmatpush.msra.mxu0 %v377
      %674 = vmatpush.msra.mxu0 %v373
      %675 = vmatmul.f32.gmra.mxu0 %v243
      %v676 = vpop.f32.mrf.mxu0
      %v677 = vadd.f32 %v657, %v676
      %678 = vdwg.mxu0
      %679 = vmatpush.msra.mxu0 0.0
      %680 = vmatpush.msra.mxu0 0.0
      %681 = vmatpush.msra.mxu0 0.0
      %682 = vmatpush.msra.mxu0 0.0
      %683 = vmatpush.msra.mxu0 0.0
      %684 = vmatpush.msra.mxu0 0.0
      %685 = vmatpush.msra.mxu0 0.0
      %686 = vmatpush.msra.mxu0 0.0
      %687 = vmatpush.msra.mxu0 0.0
      %688 = vmatpush.msra.mxu0 0.0
      %689 = vmatpush.msra.mxu0 0.0
      %690 = vmatpush.msra.mxu0 %v608
      %691 = vmatpush.msra.mxu0 %v449
      %692 = vmatpush.msra.mxu0 %v445
      %693 = vmatpush.msra.mxu0 %v441
      %694 = vmatpush.msra.mxu0 %v437
      %695 = vmatmul.f32.gmra.mxu0 %v604
      %v696 = vpop.f32.mrf.mxu0
      %v697 = vadd.f32 %v677, %v696
      %698 = vdwg.mxu0
      %699 = vmatpush.msra.mxu0 %v306
      %700 = vmatpush.msra.mxu0 %v302
      %701 = vmatpush.msra.mxu0 %v298
      %702 = vmatpush.msra.mxu0 %v294
      %703 = vmatpush.msra.mxu0 %v290
      %704 = vmatpush.msra.mxu0 %v286
      %705 = vmatpush.msra.mxu0 %v282
      %706 = vmatpush.msra.mxu0 %v278
      %707 = vmatpush.msra.mxu0 %v274
      %708 = vmatpush.msra.mxu0 %v270
      %709 = vmatpush.msra.mxu0 %v266
      %710 = vmatpush.msra.mxu0 %v262
      %711 = vmatpush.msra.mxu0 %v258
      %712 = vmatpush.msra.mxu0 %v254
      %713 = vmatpush.msra.mxu0 %v250
      %714 = vmatpush.msra.mxu0 %v246
      %715 = vmatmul.f32.gmra.mxu0 %v241
      %v716 = vpop.f32.mrf.mxu0
      %v717 = vadd.f32 %v560, %v716
      %718 = vdwg.mxu0
      %719 = vmatpush.msra.mxu0 %v370
      %720 = vmatpush.msra.mxu0 %v366
      %721 = vmatpush.msra.mxu0 %v362
      %722 = vmatpush.msra.mxu0 %v358
      %723 = vmatpush.msra.mxu0 %v354
      %724 = vmatpush.msra.mxu0 %v350
      %725 = vmatpush.msra.mxu0 %v346
      %726 = vmatpush.msra.mxu0 %v342
      %727 = vmatpush.msra.mxu0 %v338
      %728 = vmatpush.msra.mxu0 %v334
      %729 = vmatpush.msra.mxu0 %v330
      %730 = vmatpush.msra.mxu0 %v326
      %731 = vmatpush.msra.mxu0 %v322
      %732 = vmatpush.msra.mxu0 %v318
      %733 = vmatpush.msra.mxu0 %v314
      %734 = vmatpush.msra.mxu0 %v310
      %735 = vmatmul.f32.gmra.mxu0 %v242
      %v736 = vpop.f32.mrf.mxu0
      %v737 = vadd.f32 %v717, %v736
      %738 = vdwg.mxu0
      %739 = vmatpush.msra.mxu0 %v434
      %740 = vmatpush.msra.mxu0 %v430
      %741 = vmatpush.msra.mxu0 %v426
      %742 = vmatpush.msra.mxu0 %v422
      %743 = vmatpush.msra.mxu0 %v418
      %744 = vmatpush.msra.mxu0 %v414
      %745 = vmatpush.msra.mxu0 %v410
      %746 = vmatpush.msra.mxu0 %v406
      %747 = vmatpush.msra.mxu0 %v402
      %748 = vmatpush.msra.mxu0 %v398
      %749 = vmatpush.msra.mxu0 %v394
      %750 = vmatpush.msra.mxu0 %v390
      %751 = vmatpush.msra.mxu0 %v386
      %752 = vmatpush.msra.mxu0 %v382
      %753 = vmatpush.msra.mxu0 %v378
      %754 = vmatpush.msra.mxu0 %v374
      %755 = vmatmul.f32.gmra.mxu0 %v243
      %v756 = vpop.f32.mrf.mxu0
      %v757 = vadd.f32 %v737, %v756
      %758 = vdwg.mxu0
      %759 = vmatpush.msra.mxu0 0.0
      %760 = vmatpush.msra.mxu0 0.0
      %761 = vmatpush.msra.mxu0 0.0
      %762 = vmatpush.msra.mxu0 0.0
      %763 = vmatpush.msra.mxu0 0.0
      %764 = vmatpush.msra.mxu0 0.0
      %765 = vmatpush.msra.mxu0 0.0
      %766 = vmatpush.msra.mxu0 0.0
      %767 = vmatpush.msra.mxu0 0.0
      %768 = vmatpush.msra.mxu0 0.0
      %769 = vmatpush.msra.mxu0 0.0
      %770 = vmatpush.msra.mxu0 %v611
      %771 = vmatpush.msra.mxu0 %v450
      %772 = vmatpush.msra.mxu0 %v446
      %773 = vmatpush.msra.mxu0 %v442
      %774 = vmatpush.msra.mxu0 %v438
      %775 = vmatmul.f32.gmra.mxu0 %v604
      %v776 = vpop.f32.mrf.mxu0
      %v777 = vadd.f32 %v757, %v776
      %778 = vdwg.mxu0
      %779 = vmatpush.msra.mxu0 %v307
      %780 = vmatpush.msra.mxu0 %v303
      %781 = vmatpush.msra.mxu0 %v299
      %782 = vmatpush.msra.mxu0 %v295
      %783 = vmatpush.msra.mxu0 %v291
      %784 = vmatpush.msra.mxu0 %v287
      %785 = vmatpush.msra.mxu0 %v283
      %786 = vmatpush.msra.mxu0 %v279
      %787 = vmatpush.msra.mxu0 %v275
      %788 = vmatpush.msra.mxu0 %v271
      %789 = vmatpush.msra.mxu0 %v267
      %790 = vmatpush.msra.mxu0 %v263
      %791 = vmatpush.msra.mxu0 %v259
      %792 = vmatpush.msra.mxu0 %v255
      %793 = vmatpush.msra.mxu0 %v251
      %794 = vmatpush.msra.mxu0 %v247
      %795 = vmatmul.f32.gmra.mxu0 %v241
      %v796 = vpop.f32.mrf.mxu0
      %v797 = vadd.f32 %v580, %v796
      %798 = vdwg.mxu0
      %799 = vmatpush.msra.mxu0 %v371
      %800 = vmatpush.msra.mxu0 %v367
      %801 = vmatpush.msra.mxu0 %v363
      %802 = vmatpush.msra.mxu0 %v359
      %803 = vmatpush.msra.mxu0 %v355
      %804 = vmatpush.msra.mxu0 %v351
      %805 = vmatpush.msra.mxu0 %v347
      %806 = vmatpush.msra.mxu0 %v343
      %807 = vmatpush.msra.mxu0 %v339
      %808 = vmatpush.msra.mxu0 %v335
      %809 = vmatpush.msra.mxu0 %v331
      %810 = vmatpush.msra.mxu0 %v327
      %811 = vmatpush.msra.mxu0 %v323
      %812 = vmatpush.msra.mxu0 %v319
      %813 = vmatpush.msra.mxu0 %v315
      %814 = vmatpush.msra.mxu0 %v311
      %815 = vmatmul.f32.gmra.mxu0 %v242
      %v816 = vpop.f32.mrf.mxu0
      %v817 = vadd.f32 %v797, %v816
      %818 = vdwg.mxu0
      %819 = vmatpush.msra.mxu0 %v435
      %820 = vmatpush.msra.mxu0 %v431
      %821 = vmatpush.msra.mxu0 %v427
      %822 = vmatpush.msra.mxu0 %v423
      %823 = vmatpush.msra.mxu0 %v419
      %824 = vmatpush.msra.mxu0 %v415
      %825 = vmatpush.msra.mxu0 %v411
      %826 = vmatpush.msra.mxu0 %v407
      %827 = vmatpush.msra.mxu0 %v403
      %828 = vmatpush.msra.mxu0 %v399
      %829 = vmatpush.msra.mxu0 %v395
      %830 = vmatpush.msra.mxu0 %v391
      %831 = vmatpush.msra.mxu0 %v387
      %832 = vmatpush.msra.mxu0 %v383
      %833 = vmatpush.msra.mxu0 %v379
      %834 = vmatpush.msra.mxu0 %v375
      %835 = vmatmul.f32.gmra.mxu0 %v243
      %v836 = vpop.f32.mrf.mxu0
      %v837 = vadd.f32 %v817, %v836
      %838 = vdwg.mxu0
      %839 = vmatpush.msra.mxu0 0.0
      %840 = vmatpush.msra.mxu0 0.0
      %841 = vmatpush.msra.mxu0 0.0
      %842 = vmatpush.msra.mxu0 0.0
      %843 = vmatpush.msra.mxu0 0.0
      %844 = vmatpush.msra.mxu0 0.0
      %845 = vmatpush.msra.mxu0 0.0
      %846 = vmatpush.msra.mxu0 0.0
      %847 = vmatpush.msra.mxu0 0.0
      %848 = vmatpush.msra.mxu0 0.0
      %849 = vmatpush.msra.mxu0 0.0
      %850 = vmatpush.msra.mxu0 %v614
      %851 = vmatpush.msra.mxu0 %v451
      %852 = vmatpush.msra.mxu0 %v447
      %853 = vmatpush.msra.mxu0 %v443
      %854 = vmatpush.msra.mxu0 %v439
      %855 = vmatmul.f32.gmra.mxu0 %v604
      %v856 = vpop.f32.mrf.mxu0
      %v857 = vadd.f32 %v837, %v856
      %858 = vdwg.mxu0
      %859 = vmatpush.msra.mxu0 %v308
      %860 = vmatpush.msra.mxu0 %v304
      %861 = vmatpush.msra.mxu0 %v300
      %862 = vmatpush.msra.mxu0 %v296
      %863 = vmatpush.msra.mxu0 %v292
      %864 = vmatpush.msra.mxu0 %v288
      %865 = vmatpush.msra.mxu0 %v284
      %866 = vmatpush.msra.mxu0 %v280
      %867 = vmatpush.msra.mxu0 %v276
      %868 = vmatpush.msra.mxu0 %v272
      %869 = vmatpush.msra.mxu0 %v268
      %870 = vmatpush.msra.mxu0 %v264
      %871 = vmatpush.msra.mxu0 %v260
      %872 = vmatpush.msra.mxu0 %v256
      %873 = vmatpush.msra.mxu0 %v252
      %874 = vmatpush.msra.mxu0 %v248
      %875 = vmatmul.f32.gmra.mxu0 %v241
      %v876 = vpop.f32.mrf.mxu0
      %v877 = vadd.f32 %v600, %v876
      %878 = vdwg.mxu0
      %879 = vmatpush.msra.mxu0 %v372
      %880 = vmatpush.msra.mxu0 %v368
      %881 = vmatpush.msra.mxu0 %v364
      %882 = vmatpush.msra.mxu0 %v360
      %883 = vmatpush.msra.mxu0 %v356
      %884 = vmatpush.msra.mxu0 %v352
      %885 = vmatpush.msra.mxu0 %v348
      %886 = vmatpush.msra.mxu0 %v344
      %887 = vmatpush.msra.mxu0 %v340
      %888 = vmatpush.msra.mxu0 %v336
      %889 = vmatpush.msra.mxu0 %v332
      %890 = vmatpush.msra.mxu0 %v328
      %891 = vmatpush.msra.mxu0 %v324
      %892 = vmatpush.msra.mxu0 %v320
      %893 = vmatpush.msra.mxu0 %v316
      %894 = vmatpush.msra.mxu0 %v312
      %895 = vmatmul.f32.gmra.mxu0 %v242
      %v896 = vpop.f32.mrf.mxu0
      %v897 = vadd.f32 %v877, %v896
      %898 = vdwg.mxu0
      %899 = vmatpush.msra.mxu0 %v436
      %900 = vmatpush.msra.mxu0 %v432
      %901 = vmatpush.msra.mxu0 %v428
      %902 = vmatpush.msra.mxu0 %v424
      %903 = vmatpush.msra.mxu0 %v420
      %904 = vmatpush.msra.mxu0 %v416
      %905 = vmatpush.msra.mxu0 %v412
      %906 = vmatpush.msra.mxu0 %v408
      %907 = vmatpush.msra.mxu0 %v404
      %908 = vmatpush.msra.mxu0 %v400
      %909 = vmatpush.msra.mxu0 %v396
      %910 = vmatpush.msra.mxu0 %v392
      %911 = vmatpush.msra.mxu0 %v388
      %912 = vmatpush.msra.mxu0 %v384
      %913 = vmatpush.msra.mxu0 %v380
      %914 = vmatpush.msra.mxu0 %v376
      %915 = vmatmul.f32.gmra.mxu0 %v243
      %v916 = vpop.f32.mrf.mxu0
      %v917 = vadd.f32 %v897, %v916
      %918 = vdwg.mxu0
      %919 = vmatpush.msra.mxu0 0.0
      %920 = vmatpush.msra.mxu0 0.0
      %921 = vmatpush.msra.mxu0 0.0
      %922 = vmatpush.msra.mxu0 0.0
      %923 = vmatpush.msra.mxu0 0.0
      %924 = vmatpush.msra.mxu0 0.0
      %925 = vmatpush.msra.mxu0 0.0
      %926 = vmatpush.msra.mxu0 0.0
      %927 = vmatpush.msra.mxu0 0.0
      %928 = vmatpush.msra.mxu0 0.0
      %929 = vmatpush.msra.mxu0 0.0
      %930 = vmatpush.msra.mxu0 %v617
      %931 = vmatpush.msra.mxu0 %v452
      %932 = vmatpush.msra.mxu0 %v448
      %933 = vmatpush.msra.mxu0 %v444
      %934 = vmatpush.msra.mxu0 %v440
      %935 = vmatmul.f32.gmra.mxu0 %v604
      %v936 = vpop.f32.mrf.mxu0
      %v937 = vadd.f32 %v917, %v936
      %938 = vdwg.mxu0
      %v939 = vld [vmem:[#allocation11] sm:$0xf]
      %v941 = vperm.slane %v939, 0
      %v942 = vperm.slane %v939, 1
      %v943 = vperm.slane %v939, 2
      %v944 = vperm.slane %v939, 3
      %v949 = vadd.f32 %v697, %v941
      %v950 = vadd.f32 %v777, %v942
      %v951 = vadd.f32 %v857, %v943
      %v952 = vadd.f32 %v937, %v944
      %v953 = vld [vmem:[#allocation5] sm:$0xff]
      %v954 = vsub.f32 0.0, %v949
      %v955 = vmul.f32 %v954, 1.442695
      %v956 = vpow.pop %v955
      %v957 = vadd.f32 %v956, 1.0
      %v958 = vrcp.pop %v957
      %v959 = vmul.f32 %v957, %v958
      %v960 = vsub.f32 1.0, %v959
      %v961 = vmul.f32 %v958, %v960
      %v962 = vadd.f32 %v958, %v961
      %vm963 = vweird.f32 %v957
      %vm964 = vweird.f32 %v958
      %vm965 = vmor %vm963, %vm964
      %v966 = vsel %vm965, %v958, %v962
      %v967 = vand.u32 2147483647, %v957
      %vm968 = vcmp.eq.f32.partialorder %v967, 8.507059e+37
      %v969 = vand.u32 %v957, 2147483648
      %v970 = vor.u32 1.1754944e-38, %v969
      %v971 = vsel %vm968, %v970, %v966
      %v972 = vmul.f32 1.0, %v971
      %v973 = vsub.f32 0.0, %v950
      %v974 = vmul.f32 %v973, 1.442695
      %v975 = vpow.pop %v974
      %v976 = vadd.f32 %v975, 1.0
      %v977 = vrcp.pop %v976
      %v978 = vmul.f32 %v976, %v977
      %v979 = vsub.f32 1.0, %v978
      %v980 = vmul.f32 %v977, %v979
      %v981 = vadd.f32 %v977, %v980
      %vm982 = vweird.f32 %v976
      %vm983 = vweird.f32 %v977
      %vm984 = vmor %vm982, %vm983
      %v985 = vsel %vm984, %v977, %v981
      %v986 = vand.u32 2147483647, %v976
      %vm987 = vcmp.eq.f32.partialorder %v986, 8.507059e+37
      %v988 = vand.u32 %v976, 2147483648
      %v989 = vor.u32 1.1754944e-38, %v988
      %v990 = vsel %vm987, %v989, %v985
      %v991 = vmul.f32 1.0, %v990
      %v992 = vtanh.pop %v951
      %v993 = vsub.f32 0.0, %v952
      %v994 = vmul.f32 %v993, 1.442695
      %v995 = vpow.pop %v994
      %v996 = vadd.f32 %v995, 1.0
      %v997 = vrcp.pop %v996
      %v998 = vmul.f32 %v996, %v997
      %v999 = vsub.f32 1.0, %v998
      %v1000 = vmul.f32 %v997, %v999
      %v1001 = vadd.f32 %v997, %v1000
      %vm1002 = vweird.f32 %v996
      %vm1003 = vweird.f32 %v997
      %vm1004 = vmor %vm1002, %vm1003
      %v1005 = vsel %vm1004, %v997, %v1001
      %v1006 = vand.u32 2147483647, %v996
      %vm1007 = vcmp.eq.f32.partialorder %v1006, 8.507059e+37
      %v1008 = vand.u32 %v996, 2147483648
      %v1009 = vor.u32 1.1754944e-38, %v1008
      %v1010 = vsel %vm1007, %v1009, %v1005
      %v1011 = vmul.f32 1.0, %v1010
      %v1012 = vmul.f32 %v991, %v953
      %v1013 = vmul.f32 %v972, %v992
      %v1014 = vadd.f32 %v1012, %v1013
      %v1015 = vtanh.pop %v1014
      %v1016 = vmul.f32 %v1011, %v1015
      %1017 = vst [vmem:[#allocation4] sm:$0xff] %v1016
      %1018 = vst [vmem:[#allocation5] sm:$0xff] %v1014
      %s1019 = smul.u32 %s233, 8
      %s1020 = scalar_lea.vmem [#allocation2], %s1019
      %1021 = vst [vmem:[%s1020] sm:$0xff] %v1016
    $region122: #{tpu_custom_call.1} parent=1 // loop_footer
      %s237 = sadd.s32 1, %s233
    $region123: #{tpu_custom_call.1} parent=1 // loop_footer_branch
      %232 = sbr.rel target = $region119
    $region124: #{tpu_custom_call.1} parent=1 // loop_exit
      _
    %1022 = vst [vmem:[#allocation4] sm:$0xff] 0.0
    %1023 = vst [vmem:[#allocation5] sm:$0xff] 0.0
    loop: start=0, step=1, limit=8
    $region125: #{tpu_custom_call.1} parent=1 // loop_pre_header
      _
    $region126: #{tpu_custom_call.1} parent=1 // loop_header
      %s1025 = sphi 0, %s1029
      %p1026 = scmp.ge.s32.totalorder %s1025, 8
    $region127: #{tpu_custom_call.1} parent=1 // loop_header_branch
      %1028 = sbr.rel (%p1026) target = $region131
    $region128: #{tpu_custom_call.1} parent=1 // loop_body
      %s1030 = ssub.s32 7, %s1025
      %s1031 = smul.u32 %s1030, 4
      %s1032 = smul.addr %s1031, 8
      %s1033 = scalar_lea.vmem %s0, %s1032
      %v1034 = vld [vmem:[%s1033] sm:$0xff]
      %v1035 = vld [vmem:[%s1033 + $0x8] sm:$0xff]
      %v1036 = vld [vmem:[%s1033 + $0x10] sm:$0xff]
      %v1037 = vld [vmem:[%s1033 + $0x18] sm:$0xff]
      %v1038 = vld [vmem:[#allocation12] sm:$0xff]
      %v1039 = vld [vmem:[#allocation12 + $0x8] sm:$0xff]
      %v1040 = vld [vmem:[#allocation12 + $0x10] sm:$0xff]
      %v1041 = vld [vmem:[#allocation12 + $0x18] sm:$0xff]
      %v1042 = vld [vmem:[#allocation12 + $0x20] sm:$0xff]
      %v1043 = vld [vmem:[#allocation12 + $0x28] sm:$0xff]
      %v1044 = vld [vmem:[#allocation12 + $0x30] sm:$0xff]
      %v1045 = vld [vmem:[#allocation12 + $0x38] sm:$0xff]
      %v1046 = vld [vmem:[#allocation12 + $0x40] sm:$0xff]
      %v1047 = vld [vmem:[#allocation12 + $0x48] sm:$0xff]
      %v1048 = vld [vmem:[#allocation12 + $0x50] sm:$0xff]
      %v1049 = vld [vmem:[#allocation12 + $0x58] sm:$0xff]
      %v1050 = vld [vmem:[#allocation12 + $0x60] sm:$0xff]
      %v1051 = vld [vmem:[#allocation12 + $0x68] sm:$0xff]
      %v1052 = vld [vmem:[#allocation12 + $0x70] sm:$0xff]
      %v1053 = vld [vmem:[#allocation12 + $0x78] sm:$0xff]
      %v1054 = vld [vmem:[#allocation12 + $0x80] sm:$0xff]
      %v1055 = vld [vmem:[#allocation12 + $0x88] sm:$0xff]
      %v1056 = vld [vmem:[#allocation12 + $0x90] sm:$0xff]
      %v1057 = vld [vmem:[#allocation12 + $0x98] sm:$0xff]
      %v1058 = vld [vmem:[#allocation12 + $0xa0] sm:$0xff]
      %v1059 = vld [vmem:[#allocation12 + $0xa8] sm:$0xff]
      %v1060 = vld [vmem:[#allocation12 + $0xb0] sm:$0xff]
      %v1061 = vld [vmem:[#allocation12 + $0xb8] sm:$0xff]
      %v1062 = vld [vmem:[#allocation12 + $0xc0] sm:$0xff]
      %v1063 = vld [vmem:[#allocation12 + $0xc8] sm:$0xff]
      %v1064 = vld [vmem:[#allocation12 + $0xd0] sm:$0xff]
      %v1065 = vld [vmem:[#allocation12 + $0xd8] sm:$0xff]
      %v1066 = vld [vmem:[#allocation12 + $0xe0] sm:$0xff]
      %v1067 = vld [vmem:[#allocation12 + $0xe8] sm:$0xff]
      %v1068 = vld [vmem:[#allocation12 + $0xf0] sm:$0xff]
      %v1069 = vld [vmem:[#allocation12 + $0xf8] sm:$0xff]
      %v1070 = vld [vmem:[#allocation12 + $0x100] sm:$0xff]
      %v1071 = vld [vmem:[#allocation12 + $0x108] sm:$0xff]
      %v1072 = vld [vmem:[#allocation12 + $0x110] sm:$0xff]
      %v1073 = vld [vmem:[#allocation12 + $0x118] sm:$0xff]
      %v1074 = vld [vmem:[#allocation12 + $0x120] sm:$0xff]
      %v1075 = vld [vmem:[#allocation12 + $0x128] sm:$0xff]
      %v1076 = vld [vmem:[#allocation12 + $0x130] sm:$0xff]
      %v1077 = vld [vmem:[#allocation12 + $0x138] sm:$0xff]
      %v1078 = vld [vmem:[#allocation12 + $0x140] sm:$0xff]
      %v1079 = vld [vmem:[#allocation12 + $0x148] sm:$0xff]
      %v1080 = vld [vmem:[#allocation12 + $0x150] sm:$0xff]
      %v1081 = vld [vmem:[#allocation12 + $0x158] sm:$0xff]
      %v1082 = vld [vmem:[#allocation12 + $0x160] sm:$0xff]
      %v1083 = vld [vmem:[#allocation12 + $0x168] sm:$0xff]
      %v1084 = vld [vmem:[#allocation12 + $0x170] sm:$0xff]
      %v1085 = vld [vmem:[#allocation12 + $0x178] sm:$0xff]
      %v1086 = vld [vmem:[#allocation12 + $0x180] sm:$0xff]
      %v1087 = vld [vmem:[#allocation12 + $0x188] sm:$0xff]
      %v1088 = vld [vmem:[#allocation12 + $0x190] sm:$0xff]
      %v1089 = vld [vmem:[#allocation12 + $0x198] sm:$0xff]
      %v1090 = vld [vmem:[#allocation12 + $0x1a0] sm:$0xff]
      %v1091 = vld [vmem:[#allocation12 + $0x1a8] sm:$0xff]
      %v1092 = vld [vmem:[#allocation12 + $0x1b0] sm:$0xff]
      %v1093 = vld [vmem:[#allocation12 + $0x1b8] sm:$0xff]
      %v1094 = vld [vmem:[#allocation12 + $0x1c0] sm:$0xff]
      %v1095 = vld [vmem:[#allocation12 + $0x1c8] sm:$0xff]
      %v1096 = vld [vmem:[#allocation12 + $0x1d0] sm:$0xff]
      %v1097 = vld [vmem:[#allocation12 + $0x1d8] sm:$0xff]
      %v1098 = vld [vmem:[#allocation12 + $0x1e0] sm:$0xff]
      %v1099 = vld [vmem:[#allocation12 + $0x1e8] sm:$0xff]
      %v1100 = vld [vmem:[#allocation12 + $0x1f0] sm:$0xff]
      %v1101 = vld [vmem:[#allocation12 + $0x1f8] sm:$0xff]
      %v1102 = vld [vmem:[#allocation12 + $0x200] sm:$0xff]
      %v1103 = vld [vmem:[#allocation12 + $0x208] sm:$0xff]
      %v1104 = vld [vmem:[#allocation12 + $0x210] sm:$0xff]
      %v1105 = vld [vmem:[#allocation12 + $0x218] sm:$0xff]
      %v1106 = vld [vmem:[#allocation12 + $0x220] sm:$0xff]
      %v1107 = vld [vmem:[#allocation12 + $0x228] sm:$0xff]
      %v1108 = vld [vmem:[#allocation12 + $0x230] sm:$0xff]
      %v1109 = vld [vmem:[#allocation12 + $0x238] sm:$0xff]
      %v1110 = vld [vmem:[#allocation12 + $0x240] sm:$0xff]
      %v1111 = vld [vmem:[#allocation12 + $0x248] sm:$0xff]
      %v1112 = vld [vmem:[#allocation12 + $0x250] sm:$0xff]
      %v1113 = vld [vmem:[#allocation12 + $0x258] sm:$0xff]
      %v1114 = vld [vmem:[#allocation12 + $0x260] sm:$0xff]
      %v1115 = vld [vmem:[#allocation12 + $0x268] sm:$0xff]
      %v1116 = vld [vmem:[#allocation12 + $0x270] sm:$0xff]
      %v1117 = vld [vmem:[#allocation12 + $0x278] sm:$0xff]
      %v1118 = vld [vmem:[#allocation12 + $0x280] sm:$0xff]
      %v1119 = vld [vmem:[#allocation12 + $0x288] sm:$0xff]
      %v1120 = vld [vmem:[#allocation12 + $0x290] sm:$0xff]
      %v1121 = vld [vmem:[#allocation12 + $0x298] sm:$0xff]
      %v1122 = vld [vmem:[#allocation12 + $0x2a0] sm:$0xff]
      %v1123 = vld [vmem:[#allocation12 + $0x2a8] sm:$0xff]
      %v1124 = vld [vmem:[#allocation12 + $0x2b0] sm:$0xff]
      %v1125 = vld [vmem:[#allocation12 + $0x2b8] sm:$0xff]
      %v1126 = vld [vmem:[#allocation12 + $0x2c0] sm:$0xff]
      %v1127 = vld [vmem:[#allocation12 + $0x2c8] sm:$0xff]
      %v1128 = vld [vmem:[#allocation12 + $0x2d0] sm:$0xff]
      %v1129 = vld [vmem:[#allocation12 + $0x2d8] sm:$0xff]
      %v1130 = vld [vmem:[#allocation12 + $0x2e0] sm:$0xff]
      %v1131 = vld [vmem:[#allocation12 + $0x2e8] sm:$0xff]
      %v1132 = vld [vmem:[#allocation12 + $0x2f0] sm:$0xff]
      %v1133 = vld [vmem:[#allocation12 + $0x2f8] sm:$0xff]
      %v1134 = vld [vmem:[#allocation12 + $0x300] sm:$0xff]
      %v1135 = vld [vmem:[#allocation12 + $0x308] sm:$0xff]
      %v1136 = vld [vmem:[#allocation12 + $0x310] sm:$0xff]
      %v1137 = vld [vmem:[#allocation12 + $0x318] sm:$0xff]
      %v1138 = vld [vmem:[#allocation12 + $0x320] sm:$0xff]
      %v1139 = vld [vmem:[#allocation12 + $0x328] sm:$0xff]
      %v1140 = vld [vmem:[#allocation12 + $0x330] sm:$0xff]
      %v1141 = vld [vmem:[#allocation12 + $0x338] sm:$0xff]
      %v1142 = vld [vmem:[#allocation12 + $0x340] sm:$0xff]
      %v1143 = vld [vmem:[#allocation12 + $0x348] sm:$0xff]
      %v1144 = vld [vmem:[#allocation12 + $0x350] sm:$0xff]
      %v1145 = vld [vmem:[#allocation12 + $0x358] sm:$0xff]
      %v1146 = vld [vmem:[#allocation12 + $0x360] sm:$0xff]
      %v1147 = vld [vmem:[#allocation12 + $0x368] sm:$0xff]
      %v1148 = vld [vmem:[#allocation12 + $0x370] sm:$0xff]
      %v1149 = vld [vmem:[#allocation12 + $0x378] sm:$0xff]
      %v1150 = vld [vmem:[#allocation12 + $0x380] sm:$0xff]
      %v1151 = vld [vmem:[#allocation12 + $0x388] sm:$0xff]
      %v1152 = vld [vmem:[#allocation12 + $0x390] sm:$0xff]
      %v1153 = vld [vmem:[#allocation12 + $0x398] sm:$0xff]
      %v1154 = vld [vmem:[#allocation12 + $0x3a0] sm:$0xff]
      %v1155 = vld [vmem:[#allocation12 + $0x3a8] sm:$0xff]
      %v1156 = vld [vmem:[#allocation12 + $0x3b0] sm:$0xff]
      %v1157 = vld [vmem:[#allocation12 + $0x3b8] sm:$0xff]
      %v1158 = vld [vmem:[#allocation12 + $0x3c0] sm:$0xff]
      %v1159 = vld [vmem:[#allocation12 + $0x3c8] sm:$0xff]
      %v1160 = vld [vmem:[#allocation12 + $0x3d0] sm:$0xff]
      %v1161 = vld [vmem:[#allocation12 + $0x3d8] sm:$0xff]
      %v1162 = vld [vmem:[#allocation12 + $0x3e0] sm:$0xff]
      %v1163 = vld [vmem:[#allocation12 + $0x3e8] sm:$0xff]
      %v1164 = vld [vmem:[#allocation12 + $0x3f0] sm:$0xff]
      %v1165 = vld [vmem:[#allocation12 + $0x3f8] sm:$0xff]
      %v1166 = vld [vmem:[#allocation12 + $0x400] sm:$0xff]
      %v1167 = vld [vmem:[#allocation12 + $0x408] sm:$0xff]
      %v1168 = vld [vmem:[#allocation12 + $0x410] sm:$0xff]
      %v1169 = vld [vmem:[#allocation12 + $0x418] sm:$0xff]
      %v1170 = vld [vmem:[#allocation12 + $0x420] sm:$0xff]
      %v1171 = vld [vmem:[#allocation12 + $0x428] sm:$0xff]
      %v1172 = vld [vmem:[#allocation12 + $0x430] sm:$0xff]
      %v1173 = vld [vmem:[#allocation12 + $0x438] sm:$0xff]
      %v1174 = vld [vmem:[#allocation12 + $0x440] sm:$0xff]
      %v1175 = vld [vmem:[#allocation12 + $0x448] sm:$0xff]
      %v1176 = vld [vmem:[#allocation12 + $0x450] sm:$0xff]
      %v1177 = vld [vmem:[#allocation12 + $0x458] sm:$0xff]
      %v1178 = vld [vmem:[#allocation12 + $0x460] sm:$0xff]
      %v1179 = vld [vmem:[#allocation12 + $0x468] sm:$0xff]
      %v1180 = vld [vmem:[#allocation12 + $0x470] sm:$0xff]
      %v1181 = vld [vmem:[#allocation12 + $0x478] sm:$0xff]
      %v1182 = vld [vmem:[#allocation12 + $0x480] sm:$0xff]
      %v1183 = vld [vmem:[#allocation12 + $0x488] sm:$0xff]
      %v1184 = vld [vmem:[#allocation12 + $0x490] sm:$0xff]
      %v1185 = vld [vmem:[#allocation12 + $0x498] sm:$0xff]
      %v1186 = vld [vmem:[#allocation12 + $0x4a0] sm:$0xff]
      %v1187 = vld [vmem:[#allocation12 + $0x4a8] sm:$0xff]
      %v1188 = vld [vmem:[#allocation12 + $0x4b0] sm:$0xff]
      %v1189 = vld [vmem:[#allocation12 + $0x4b8] sm:$0xff]
      %v1190 = vld [vmem:[#allocation12 + $0x4c0] sm:$0xff]
      %v1191 = vld [vmem:[#allocation12 + $0x4c8] sm:$0xff]
      %v1192 = vld [vmem:[#allocation12 + $0x4d0] sm:$0xff]
      %v1193 = vld [vmem:[#allocation12 + $0x4d8] sm:$0xff]
      %v1194 = vld [vmem:[#allocation12 + $0x4e0] sm:$0xff]
      %v1195 = vld [vmem:[#allocation12 + $0x4e8] sm:$0xff]
      %v1196 = vld [vmem:[#allocation12 + $0x4f0] sm:$0xff]
      %v1197 = vld [vmem:[#allocation12 + $0x4f8] sm:$0xff]
      %v1198 = vld [vmem:[#allocation12 + $0x500] sm:$0xff]
      %v1199 = vld [vmem:[#allocation12 + $0x508] sm:$0xff]
      %v1200 = vld [vmem:[#allocation12 + $0x510] sm:$0xff]
      %v1201 = vld [vmem:[#allocation12 + $0x518] sm:$0xff]
      %v1202 = vld [vmem:[#allocation12 + $0x520] sm:$0xff]
      %v1203 = vld [vmem:[#allocation12 + $0x528] sm:$0xff]
      %v1204 = vld [vmem:[#allocation12 + $0x530] sm:$0xff]
      %v1205 = vld [vmem:[#allocation12 + $0x538] sm:$0xff]
      %v1206 = vld [vmem:[#allocation12 + $0x540] sm:$0xff]
      %v1207 = vld [vmem:[#allocation12 + $0x548] sm:$0xff]
      %v1208 = vld [vmem:[#allocation12 + $0x550] sm:$0xff]
      %v1209 = vld [vmem:[#allocation12 + $0x558] sm:$0xff]
      %v1210 = vld [vmem:[#allocation12 + $0x560] sm:$0xff]
      %v1211 = vld [vmem:[#allocation12 + $0x568] sm:$0xff]
      %v1212 = vld [vmem:[#allocation12 + $0x570] sm:$0xff]
      %v1213 = vld [vmem:[#allocation12 + $0x578] sm:$0xff]
      %v1214 = vld [vmem:[#allocation12 + $0x580] sm:$0xff]
      %v1215 = vld [vmem:[#allocation12 + $0x588] sm:$0xff]
      %v1216 = vld [vmem:[#allocation12 + $0x590] sm:$0xff]
      %v1217 = vld [vmem:[#allocation12 + $0x598] sm:$0xff]
      %v1218 = vld [vmem:[#allocation12 + $0x5a0] sm:$0xff]
      %v1219 = vld [vmem:[#allocation12 + $0x5a8] sm:$0xff]
      %v1220 = vld [vmem:[#allocation12 + $0x5b0] sm:$0xff]
      %v1221 = vld [vmem:[#allocation12 + $0x5b8] sm:$0xff]
      %v1222 = vld [vmem:[#allocation12 + $0x5c0] sm:$0xff]
      %v1223 = vld [vmem:[#allocation12 + $0x5c8] sm:$0xff]
      %v1224 = vld [vmem:[#allocation12 + $0x5d0] sm:$0xff]
      %v1225 = vld [vmem:[#allocation12 + $0x5d8] sm:$0xff]
      %v1226 = vld [vmem:[#allocation12 + $0x5e0] sm:$0xff]
      %v1227 = vld [vmem:[#allocation12 + $0x5e8] sm:$0xff]
      %v1228 = vld [vmem:[#allocation12 + $0x5f0] sm:$0xff]
      %v1229 = vld [vmem:[#allocation12 + $0x5f8] sm:$0xff]
      %v1230 = vld [vmem:[#allocation12 + $0x600] sm:$0xff]
      %v1231 = vld [vmem:[#allocation12 + $0x608] sm:$0xff]
      %v1232 = vld [vmem:[#allocation12 + $0x610] sm:$0xff]
      %v1233 = vld [vmem:[#allocation12 + $0x618] sm:$0xff]
      %v1234 = vld [vmem:[#allocation12 + $0x620] sm:$0xff]
      %v1235 = vld [vmem:[#allocation12 + $0x628] sm:$0xff]
      %v1236 = vld [vmem:[#allocation12 + $0x630] sm:$0xff]
      %v1237 = vld [vmem:[#allocation12 + $0x638] sm:$0xff]
      %v1238 = vld [vmem:[#allocation12 + $0x640] sm:$0xff]
      %v1239 = vld [vmem:[#allocation12 + $0x648] sm:$0xff]
      %v1240 = vld [vmem:[#allocation12 + $0x650] sm:$0xff]
      %v1241 = vld [vmem:[#allocation12 + $0x658] sm:$0xff]
      %v1242 = vld [vmem:[#allocation12 + $0x660] sm:$0xff]
      %v1243 = vld [vmem:[#allocation12 + $0x668] sm:$0xff]
      %v1244 = vld [vmem:[#allocation12 + $0x670] sm:$0xff]
      %v1245 = vld [vmem:[#allocation12 + $0x678] sm:$0xff]
      %v1246 = vld [vmem:[#allocation12 + $0x680] sm:$0xf]
      %v1247 = vld [vmem:[#allocation12 + $0x688] sm:$0xf]
      %v1248 = vld [vmem:[#allocation12 + $0x690] sm:$0xf]
      %v1249 = vld [vmem:[#allocation12 + $0x698] sm:$0xf]
      %v1250 = vld [vmem:[#allocation4] sm:$0xff]
      %v1251 = vld [vmem:[#allocation14] sm:$0xff]
      %v1252 = vld [vmem:[#allocation14 + $0x8] sm:$0xff]
      %v1253 = vld [vmem:[#allocation14 + $0x10] sm:$0xff]
      %v1254 = vld [vmem:[#allocation14 + $0x18] sm:$0xff]
      %v1255 = vld [vmem:[#allocation14 + $0x20] sm:$0xff]
      %v1256 = vld [vmem:[#allocation14 + $0x28] sm:$0xff]
      %v1257 = vld [vmem:[#allocation14 + $0x30] sm:$0xff]
      %v1258 = vld [vmem:[#allocation14 + $0x38] sm:$0xff]
      %v1259 = vld [vmem:[#allocation14 + $0x40] sm:$0xff]
      %v1260 = vld [vmem:[#allocation14 + $0x48] sm:$0xff]
      %v1261 = vld [vmem:[#allocation14 + $0x50] sm:$0xff]
      %v1262 = vld [vmem:[#allocation14 + $0x58] sm:$0xff]
      %v1263 = vld [vmem:[#allocation14 + $0x60] sm:$0xff]
      %v1264 = vld [vmem:[#allocation14 + $0x68] sm:$0xff]
      %v1265 = vld [vmem:[#allocation14 + $0x70] sm:$0xff]
      %v1266 = vld [vmem:[#allocation14 + $0x78] sm:$0xff]
      %v1267 = vld [vmem:[#allocation14 + $0x80] sm:$0xff]
      %v1268 = vld [vmem:[#allocation14 + $0x88] sm:$0xff]
      %v1269 = vld [vmem:[#allocation14 + $0x90] sm:$0xff]
      %v1270 = vld [vmem:[#allocation14 + $0x98] sm:$0xff]
      %v1271 = vld [vmem:[#allocation14 + $0xa0] sm:$0xff]
      %v1272 = vld [vmem:[#allocation14 + $0xa8] sm:$0xff]
      %v1273 = vld [vmem:[#allocation14 + $0xb0] sm:$0xff]
      %v1274 = vld [vmem:[#allocation14 + $0xb8] sm:$0xff]
      %v1275 = vld [vmem:[#allocation14 + $0xc0] sm:$0xff]
      %v1276 = vld [vmem:[#allocation14 + $0xc8] sm:$0xff]
      %v1277 = vld [vmem:[#allocation14 + $0xd0] sm:$0xff]
      %v1278 = vld [vmem:[#allocation14 + $0xd8] sm:$0xff]
      %v1279 = vld [vmem:[#allocation14 + $0xe0] sm:$0xff]
      %v1280 = vld [vmem:[#allocation14 + $0xe8] sm:$0xff]
      %v1281 = vld [vmem:[#allocation14 + $0xf0] sm:$0xff]
      %v1282 = vld [vmem:[#allocation14 + $0xf8] sm:$0xff]
      %v1283 = vld [vmem:[#allocation14 + $0x100] sm:$0xff]
      %v1284 = vld [vmem:[#allocation14 + $0x108] sm:$0xff]
      %v1285 = vld [vmem:[#allocation14 + $0x110] sm:$0xff]
      %v1286 = vld [vmem:[#allocation14 + $0x118] sm:$0xff]
      %v1287 = vld [vmem:[#allocation14 + $0x120] sm:$0xff]
      %v1288 = vld [vmem:[#allocation14 + $0x128] sm:$0xff]
      %v1289 = vld [vmem:[#allocation14 + $0x130] sm:$0xff]
      %v1290 = vld [vmem:[#allocation14 + $0x138] sm:$0xff]
      %v1291 = vld [vmem:[#allocation14 + $0x140] sm:$0xff]
      %v1292 = vld [vmem:[#allocation14 + $0x148] sm:$0xff]
      %v1293 = vld [vmem:[#allocation14 + $0x150] sm:$0xff]
      %v1294 = vld [vmem:[#allocation14 + $0x158] sm:$0xff]
      %v1295 = vld [vmem:[#allocation14 + $0x160] sm:$0xff]
      %v1296 = vld [vmem:[#allocation14 + $0x168] sm:$0xff]
      %v1297 = vld [vmem:[#allocation14 + $0x170] sm:$0xff]
      %v1298 = vld [vmem:[#allocation14 + $0x178] sm:$0xff]
      %v1299 = vld [vmem:[#allocation14 + $0x180] sm:$0xff]
      %v1300 = vld [vmem:[#allocation14 + $0x188] sm:$0xff]
      %v1301 = vld [vmem:[#allocation14 + $0x190] sm:$0xff]
      %v1302 = vld [vmem:[#allocation14 + $0x198] sm:$0xff]
      %v1303 = vld [vmem:[#allocation14 + $0x1a0] sm:$0xff]
      %v1304 = vld [vmem:[#allocation14 + $0x1a8] sm:$0xff]
      %v1305 = vld [vmem:[#allocation14 + $0x1b0] sm:$0xff]
      %v1306 = vld [vmem:[#allocation14 + $0x1b8] sm:$0xff]
      %v1307 = vld [vmem:[#allocation14 + $0x1c0] sm:$0xff]
      %v1308 = vld [vmem:[#allocation14 + $0x1c8] sm:$0xff]
      %v1309 = vld [vmem:[#allocation14 + $0x1d0] sm:$0xff]
      %v1310 = vld [vmem:[#allocation14 + $0x1d8] sm:$0xff]
      %v1311 = vld [vmem:[#allocation14 + $0x1e0] sm:$0xff]
      %v1312 = vld [vmem:[#allocation14 + $0x1e8] sm:$0xff]
      %v1313 = vld [vmem:[#allocation14 + $0x1f0] sm:$0xff]
      %v1314 = vld [vmem:[#allocation14 + $0x1f8] sm:$0xff]
      %1315 = vmatpush.msra.mxu0 %v1311
      %1316 = vmatpush.msra.mxu0 %v1307
      %1317 = vmatpush.msra.mxu0 %v1303
      %1318 = vmatpush.msra.mxu0 %v1299
      %1319 = vmatpush.msra.mxu0 %v1295
      %1320 = vmatpush.msra.mxu0 %v1291
      %1321 = vmatpush.msra.mxu0 %v1287
      %1322 = vmatpush.msra.mxu0 %v1283
      %1323 = vmatpush.msra.mxu0 %v1279
      %1324 = vmatpush.msra.mxu0 %v1275
      %1325 = vmatpush.msra.mxu0 %v1271
      %1326 = vmatpush.msra.mxu0 %v1267
      %1327 = vmatpush.msra.mxu0 %v1263
      %1328 = vmatpush.msra.mxu0 %v1259
      %1329 = vmatpush.msra.mxu0 %v1255
      %1330 = vmatpush.msra.mxu0 %v1251
      %1331 = vmatmul.f32.gmra.mxu0 %v1250
      %v1332 = vpop.f32.mrf.mxu0
      %v1333 = vadd.f32 0.0, %v1332
      %1334 = vdwg.mxu0
      %1335 = vmatpush.msra.mxu0 %v1312
      %1336 = vmatpush.msra.mxu0 %v1308
      %1337 = vmatpush.msra.mxu0 %v1304
      %1338 = vmatpush.msra.mxu0 %v1300
      %1339 = vmatpush.msra.mxu0 %v1296
      %1340 = vmatpush.msra.mxu0 %v1292
      %1341 = vmatpush.msra.mxu0 %v1288
      %1342 = vmatpush.msra.mxu0 %v1284
      %1343 = vmatpush.msra.mxu0 %v1280
      %1344 = vmatpush.msra.mxu0 %v1276
      %1345 = vmatpush.msra.mxu0 %v1272
      %1346 = vmatpush.msra.mxu0 %v1268
      %1347 = vmatpush.msra.mxu0 %v1264
      %1348 = vmatpush.msra.mxu0 %v1260
      %1349 = vmatpush.msra.mxu0 %v1256
      %1350 = vmatpush.msra.mxu0 %v1252
      %1351 = vmatmul.f32.gmra.mxu0 %v1250
      %v1352 = vpop.f32.mrf.mxu0
      %v1353 = vadd.f32 0.0, %v1352
      %1354 = vdwg.mxu0
      %1355 = vmatpush.msra.mxu0 %v1313
      %1356 = vmatpush.msra.mxu0 %v1309
      %1357 = vmatpush.msra.mxu0 %v1305
      %1358 = vmatpush.msra.mxu0 %v1301
      %1359 = vmatpush.msra.mxu0 %v1297
      %1360 = vmatpush.msra.mxu0 %v1293
      %1361 = vmatpush.msra.mxu0 %v1289
      %1362 = vmatpush.msra.mxu0 %v1285
      %1363 = vmatpush.msra.mxu0 %v1281
      %1364 = vmatpush.msra.mxu0 %v1277
      %1365 = vmatpush.msra.mxu0 %v1273
      %1366 = vmatpush.msra.mxu0 %v1269
      %1367 = vmatpush.msra.mxu0 %v1265
      %1368 = vmatpush.msra.mxu0 %v1261
      %1369 = vmatpush.msra.mxu0 %v1257
      %1370 = vmatpush.msra.mxu0 %v1253
      %1371 = vmatmul.f32.gmra.mxu0 %v1250
      %v1372 = vpop.f32.mrf.mxu0
      %v1373 = vadd.f32 0.0, %v1372
      %1374 = vdwg.mxu0
      %1375 = vmatpush.msra.mxu0 %v1314
      %1376 = vmatpush.msra.mxu0 %v1310
      %1377 = vmatpush.msra.mxu0 %v1306
      %1378 = vmatpush.msra.mxu0 %v1302
      %1379 = vmatpush.msra.mxu0 %v1298
      %1380 = vmatpush.msra.mxu0 %v1294
      %1381 = vmatpush.msra.mxu0 %v1290
      %1382 = vmatpush.msra.mxu0 %v1286
      %1383 = vmatpush.msra.mxu0 %v1282
      %1384 = vmatpush.msra.mxu0 %v1278
      %1385 = vmatpush.msra.mxu0 %v1274
      %1386 = vmatpush.msra.mxu0 %v1270
      %1387 = vmatpush.msra.mxu0 %v1266
      %1388 = vmatpush.msra.mxu0 %v1262
      %1389 = vmatpush.msra.mxu0 %v1258
      %1390 = vmatpush.msra.mxu0 %v1254
      %1391 = vmatmul.f32.gmra.mxu0 %v1250
      %v1392 = vpop.f32.mrf.mxu0
      %v1393 = vadd.f32 0.0, %v1392
      %1394 = vdwg.mxu0
      %vm1395 = vcmask 293888
      %v1397 = vsel %vm1395, %v1037, 0
      %vm1399 = vcmask 1043456
      %v1401 = vsel %vm1399, %v1246, 0
      %v1404 = vsel %vm1399, %v1247, 0
      %v1407 = vsel %vm1399, %v1248, 0
      %v1410 = vsel %vm1399, %v1249, 0
      %1412 = vmatpush.msra.mxu0 %v1098
      %1413 = vmatpush.msra.mxu0 %v1094
      %1414 = vmatpush.msra.mxu0 %v1090
      %1415 = vmatpush.msra.mxu0 %v1086
      %1416 = vmatpush.msra.mxu0 %v1082
      %1417 = vmatpush.msra.mxu0 %v1078
      %1418 = vmatpush.msra.mxu0 %v1074
      %1419 = vmatpush.msra.mxu0 %v1070
      %1420 = vmatpush.msra.mxu0 %v1066
      %1421 = vmatpush.msra.mxu0 %v1062
      %1422 = vmatpush.msra.mxu0 %v1058
      %1423 = vmatpush.msra.mxu0 %v1054
      %1424 = vmatpush.msra.mxu0 %v1050
      %1425 = vmatpush.msra.mxu0 %v1046
      %1426 = vmatpush.msra.mxu0 %v1042
      %1427 = vmatpush.msra.mxu0 %v1038
      %1428 = vmatmul.f32.gmra.mxu0 %v1034
      %v1429 = vpop.f32.mrf.mxu0
      %v1430 = vadd.f32 %v1333, %v1429
      %1431 = vdwg.mxu0
      %1432 = vmatpush.msra.mxu0 %v1162
      %1433 = vmatpush.msra.mxu0 %v1158
      %1434 = vmatpush.msra.mxu0 %v1154
      %1435 = vmatpush.msra.mxu0 %v1150
      %1436 = vmatpush.msra.mxu0 %v1146
      %1437 = vmatpush.msra.mxu0 %v1142
      %1438 = vmatpush.msra.mxu0 %v1138
      %1439 = vmatpush.msra.mxu0 %v1134
      %1440 = vmatpush.msra.mxu0 %v1130
      %1441 = vmatpush.msra.mxu0 %v1126
      %1442 = vmatpush.msra.mxu0 %v1122
      %1443 = vmatpush.msra.mxu0 %v1118
      %1444 = vmatpush.msra.mxu0 %v1114
      %1445 = vmatpush.msra.mxu0 %v1110
      %1446 = vmatpush.msra.mxu0 %v1106
      %1447 = vmatpush.msra.mxu0 %v1102
      %1448 = vmatmul.f32.gmra.mxu0 %v1035
      %v1449 = vpop.f32.mrf.mxu0
      %v1450 = vadd.f32 %v1430, %v1449
      %1451 = vdwg.mxu0
      %1452 = vmatpush.msra.mxu0 %v1226
      %1453 = vmatpush.msra.mxu0 %v1222
      %1454 = vmatpush.msra.mxu0 %v1218
      %1455 = vmatpush.msra.mxu0 %v1214
      %1456 = vmatpush.msra.mxu0 %v1210
      %1457 = vmatpush.msra.mxu0 %v1206
      %1458 = vmatpush.msra.mxu0 %v1202
      %1459 = vmatpush.msra.mxu0 %v1198
      %1460 = vmatpush.msra.mxu0 %v1194
      %1461 = vmatpush.msra.mxu0 %v1190
      %1462 = vmatpush.msra.mxu0 %v1186
      %1463 = vmatpush.msra.mxu0 %v1182
      %1464 = vmatpush.msra.mxu0 %v1178
      %1465 = vmatpush.msra.mxu0 %v1174
      %1466 = vmatpush.msra.mxu0 %v1170
      %1467 = vmatpush.msra.mxu0 %v1166
      %1468 = vmatmul.f32.gmra.mxu0 %v1036
      %v1469 = vpop.f32.mrf.mxu0
      %v1470 = vadd.f32 %v1450, %v1469
      %1471 = vdwg.mxu0
      %1472 = vmatpush.msra.mxu0 0.0
      %1473 = vmatpush.msra.mxu0 0.0
      %1474 = vmatpush.msra.mxu0 0.0
      %1475 = vmatpush.msra.mxu0 0.0
      %1476 = vmatpush.msra.mxu0 0.0
      %1477 = vmatpush.msra.mxu0 0.0
      %1478 = vmatpush.msra.mxu0 0.0
      %1479 = vmatpush.msra.mxu0 0.0
      %1480 = vmatpush.msra.mxu0 0.0
      %1481 = vmatpush.msra.mxu0 0.0
      %1482 = vmatpush.msra.mxu0 0.0
      %1483 = vmatpush.msra.mxu0 %v1401
      %1484 = vmatpush.msra.mxu0 %v1242
      %1485 = vmatpush.msra.mxu0 %v1238
      %1486 = vmatpush.msra.mxu0 %v1234
      %1487 = vmatpush.msra.mxu0 %v1230
      %1488 = vmatmul.f32.gmra.mxu0 %v1397
      %v1489 = vpop.f32.mrf.mxu0
      %v1490 = vadd.f32 %v1470, %v1489
      %1491 = vdwg.mxu0
      %1492 = vmatpush.msra.mxu0 %v1099
      %1493 = vmatpush.msra.mxu0 %v1095
      %1494 = vmatpush.msra.mxu0 %v1091
      %1495 = vmatpush.msra.mxu0 %v1087
      %1496 = vmatpush.msra.mxu0 %v1083
      %1497 = vmatpush.msra.mxu0 %v1079
      %1498 = vmatpush.msra.mxu0 %v1075
      %1499 = vmatpush.msra.mxu0 %v1071
      %1500 = vmatpush.msra.mxu0 %v1067
      %1501 = vmatpush.msra.mxu0 %v1063
      %1502 = vmatpush.msra.mxu0 %v1059
      %1503 = vmatpush.msra.mxu0 %v1055
      %1504 = vmatpush.msra.mxu0 %v1051
      %1505 = vmatpush.msra.mxu0 %v1047
      %1506 = vmatpush.msra.mxu0 %v1043
      %1507 = vmatpush.msra.mxu0 %v1039
      %1508 = vmatmul.f32.gmra.mxu0 %v1034
      %v1509 = vpop.f32.mrf.mxu0
      %v1510 = vadd.f32 %v1353, %v1509
      %1511 = vdwg.mxu0
      %1512 = vmatpush.msra.mxu0 %v1163
      %1513 = vmatpush.msra.mxu0 %v1159
      %1514 = vmatpush.msra.mxu0 %v1155
      %1515 = vmatpush.msra.mxu0 %v1151
      %1516 = vmatpush.msra.mxu0 %v1147
      %1517 = vmatpush.msra.mxu0 %v1143
      %1518 = vmatpush.msra.mxu0 %v1139
      %1519 = vmatpush.msra.mxu0 %v1135
      %1520 = vmatpush.msra.mxu0 %v1131
      %1521 = vmatpush.msra.mxu0 %v1127
      %1522 = vmatpush.msra.mxu0 %v1123
      %1523 = vmatpush.msra.mxu0 %v1119
      %1524 = vmatpush.msra.mxu0 %v1115
      %1525 = vmatpush.msra.mxu0 %v1111
      %1526 = vmatpush.msra.mxu0 %v1107
      %1527 = vmatpush.msra.mxu0 %v1103
      %1528 = vmatmul.f32.gmra.mxu0 %v1035
      %v1529 = vpop.f32.mrf.mxu0
      %v1530 = vadd.f32 %v1510, %v1529
      %1531 = vdwg.mxu0
      %1532 = vmatpush.msra.mxu0 %v1227
      %1533 = vmatpush.msra.mxu0 %v1223
      %1534 = vmatpush.msra.mxu0 %v1219
      %1535 = vmatpush.msra.mxu0 %v1215
      %1536 = vmatpush.msra.mxu0 %v1211
      %1537 = vmatpush.msra.mxu0 %v1207
      %1538 = vmatpush.msra.mxu0 %v1203
      %1539 = vmatpush.msra.mxu0 %v1199
      %1540 = vmatpush.msra.mxu0 %v1195
      %1541 = vmatpush.msra.mxu0 %v1191
      %1542 = vmatpush.msra.mxu0 %v1187
      %1543 = vmatpush.msra.mxu0 %v1183
      %1544 = vmatpush.msra.mxu0 %v1179
      %1545 = vmatpush.msra.mxu0 %v1175
      %1546 = vmatpush.msra.mxu0 %v1171
      %1547 = vmatpush.msra.mxu0 %v1167
      %1548 = vmatmul.f32.gmra.mxu0 %v1036
      %v1549 = vpop.f32.mrf.mxu0
      %v1550 = vadd.f32 %v1530, %v1549
      %1551 = vdwg.mxu0
      %1552 = vmatpush.msra.mxu0 0.0
      %1553 = vmatpush.msra.mxu0 0.0
      %1554 = vmatpush.msra.mxu0 0.0
      %1555 = vmatpush.msra.mxu0 0.0
      %1556 = vmatpush.msra.mxu0 0.0
      %1557 = vmatpush.msra.mxu0 0.0
      %1558 = vmatpush.msra.mxu0 0.0
      %1559 = vmatpush.msra.mxu0 0.0
      %1560 = vmatpush.msra.mxu0 0.0
      %1561 = vmatpush.msra.mxu0 0.0
      %1562 = vmatpush.msra.mxu0 0.0
      %1563 = vmatpush.msra.mxu0 %v1404
      %1564 = vmatpush.msra.mxu0 %v1243
      %1565 = vmatpush.msra.mxu0 %v1239
      %1566 = vmatpush.msra.mxu0 %v1235
      %1567 = vmatpush.msra.mxu0 %v1231
      %1568 = vmatmul.f32.gmra.mxu0 %v1397
      %v1569 = vpop.f32.mrf.mxu0
      %v1570 = vadd.f32 %v1550, %v1569
      %1571 = vdwg.mxu0
      %1572 = vmatpush.msra.mxu0 %v1100
      %1573 = vmatpush.msra.mxu0 %v1096
      %1574 = vmatpush.msra.mxu0 %v1092
      %1575 = vmatpush.msra.mxu0 %v1088
      %1576 = vmatpush.msra.mxu0 %v1084
      %1577 = vmatpush.msra.mxu0 %v1080
      %1578 = vmatpush.msra.mxu0 %v1076
      %1579 = vmatpush.msra.mxu0 %v1072
      %1580 = vmatpush.msra.mxu0 %v1068
      %1581 = vmatpush.msra.mxu0 %v1064
      %1582 = vmatpush.msra.mxu0 %v1060
      %1583 = vmatpush.msra.mxu0 %v1056
      %1584 = vmatpush.msra.mxu0 %v1052
      %1585 = vmatpush.msra.mxu0 %v1048
      %1586 = vmatpush.msra.mxu0 %v1044
      %1587 = vmatpush.msra.mxu0 %v1040
      %1588 = vmatmul.f32.gmra.mxu0 %v1034
      %v1589 = vpop.f32.mrf.mxu0
      %v1590 = vadd.f32 %v1373, %v1589
      %1591 = vdwg.mxu0
      %1592 = vmatpush.msra.mxu0 %v1164
      %1593 = vmatpush.msra.mxu0 %v1160
      %1594 = vmatpush.msra.mxu0 %v1156
      %1595 = vmatpush.msra.mxu0 %v1152
      %1596 = vmatpush.msra.mxu0 %v1148
      %1597 = vmatpush.msra.mxu0 %v1144
      %1598 = vmatpush.msra.mxu0 %v1140
      %1599 = vmatpush.msra.mxu0 %v1136
      %1600 = vmatpush.msra.mxu0 %v1132
      %1601 = vmatpush.msra.mxu0 %v1128
      %1602 = vmatpush.msra.mxu0 %v1124
      %1603 = vmatpush.msra.mxu0 %v1120
      %1604 = vmatpush.msra.mxu0 %v1116
      %1605 = vmatpush.msra.mxu0 %v1112
      %1606 = vmatpush.msra.mxu0 %v1108
      %1607 = vmatpush.msra.mxu0 %v1104
      %1608 = vmatmul.f32.gmra.mxu0 %v1035
      %v1609 = vpop.f32.mrf.mxu0
      %v1610 = vadd.f32 %v1590, %v1609
      %1611 = vdwg.mxu0
      %1612 = vmatpush.msra.mxu0 %v1228
      %1613 = vmatpush.msra.mxu0 %v1224
      %1614 = vmatpush.msra.mxu0 %v1220
      %1615 = vmatpush.msra.mxu0 %v1216
      %1616 = vmatpush.msra.mxu0 %v1212
      %1617 = vmatpush.msra.mxu0 %v1208
      %1618 = vmatpush.msra.mxu0 %v1204
      %1619 = vmatpush.msra.mxu0 %v1200
      %1620 = vmatpush.msra.mxu0 %v1196
      %1621 = vmatpush.msra.mxu0 %v1192
      %1622 = vmatpush.msra.mxu0 %v1188
      %1623 = vmatpush.msra.mxu0 %v1184
      %1624 = vmatpush.msra.mxu0 %v1180
      %1625 = vmatpush.msra.mxu0 %v1176
      %1626 = vmatpush.msra.mxu0 %v1172
      %1627 = vmatpush.msra.mxu0 %v1168
      %1628 = vmatmul.f32.gmra.mxu0 %v1036
      %v1629 = vpop.f32.mrf.mxu0
      %v1630 = vadd.f32 %v1610, %v1629
      %1631 = vdwg.mxu0
      %1632 = vmatpush.msra.mxu0 0.0
      %1633 = vmatpush.msra.mxu0 0.0
      %1634 = vmatpush.msra.mxu0 0.0
      %1635 = vmatpush.msra.mxu0 0.0
      %1636 = vmatpush.msra.mxu0 0.0
      %1637 = vmatpush.msra.mxu0 0.0
      %1638 = vmatpush.msra.mxu0 0.0
      %1639 = vmatpush.msra.mxu0 0.0
      %1640 = vmatpush.msra.mxu0 0.0
      %1641 = vmatpush.msra.mxu0 0.0
      %1642 = vmatpush.msra.mxu0 0.0
      %1643 = vmatpush.msra.mxu0 %v1407
      %1644 = vmatpush.msra.mxu0 %v1244
      %1645 = vmatpush.msra.mxu0 %v1240
      %1646 = vmatpush.msra.mxu0 %v1236
      %1647 = vmatpush.msra.mxu0 %v1232
      %1648 = vmatmul.f32.gmra.mxu0 %v1397
      %v1649 = vpop.f32.mrf.mxu0
      %v1650 = vadd.f32 %v1630, %v1649
      %1651 = vdwg.mxu0
      %1652 = vmatpush.msra.mxu0 %v1101
      %1653 = vmatpush.msra.mxu0 %v1097
      %1654 = vmatpush.msra.mxu0 %v1093
      %1655 = vmatpush.msra.mxu0 %v1089
      %1656 = vmatpush.msra.mxu0 %v1085
      %1657 = vmatpush.msra.mxu0 %v1081
      %1658 = vmatpush.msra.mxu0 %v1077
      %1659 = vmatpush.msra.mxu0 %v1073
      %1660 = vmatpush.msra.mxu0 %v1069
      %1661 = vmatpush.msra.mxu0 %v1065
      %1662 = vmatpush.msra.mxu0 %v1061
      %1663 = vmatpush.msra.mxu0 %v1057
      %1664 = vmatpush.msra.mxu0 %v1053
      %1665 = vmatpush.msra.mxu0 %v1049
      %1666 = vmatpush.msra.mxu0 %v1045
      %1667 = vmatpush.msra.mxu0 %v1041
      %1668 = vmatmul.f32.gmra.mxu0 %v1034
      %v1669 = vpop.f32.mrf.mxu0
      %v1670 = vadd.f32 %v1393, %v1669
      %1671 = vdwg.mxu0
      %1672 = vmatpush.msra.mxu0 %v1165
      %1673 = vmatpush.msra.mxu0 %v1161
      %1674 = vmatpush.msra.mxu0 %v1157
      %1675 = vmatpush.msra.mxu0 %v1153
      %1676 = vmatpush.msra.mxu0 %v1149
      %1677 = vmatpush.msra.mxu0 %v1145
      %1678 = vmatpush.msra.mxu0 %v1141
      %1679 = vmatpush.msra.mxu0 %v1137
      %1680 = vmatpush.msra.mxu0 %v1133
      %1681 = vmatpush.msra.mxu0 %v1129
      %1682 = vmatpush.msra.mxu0 %v1125
      %1683 = vmatpush.msra.mxu0 %v1121
      %1684 = vmatpush.msra.mxu0 %v1117
      %1685 = vmatpush.msra.mxu0 %v1113
      %1686 = vmatpush.msra.mxu0 %v1109
      %1687 = vmatpush.msra.mxu0 %v1105
      %1688 = vmatmul.f32.gmra.mxu0 %v1035
      %v1689 = vpop.f32.mrf.mxu0
      %v1690 = vadd.f32 %v1670, %v1689
      %1691 = vdwg.mxu0
      %1692 = vmatpush.msra.mxu0 %v1229
      %1693 = vmatpush.msra.mxu0 %v1225
      %1694 = vmatpush.msra.mxu0 %v1221
      %1695 = vmatpush.msra.mxu0 %v1217
      %1696 = vmatpush.msra.mxu0 %v1213
      %1697 = vmatpush.msra.mxu0 %v1209
      %1698 = vmatpush.msra.mxu0 %v1205
      %1699 = vmatpush.msra.mxu0 %v1201
      %1700 = vmatpush.msra.mxu0 %v1197
      %1701 = vmatpush.msra.mxu0 %v1193
      %1702 = vmatpush.msra.mxu0 %v1189
      %1703 = vmatpush.msra.mxu0 %v1185
      %1704 = vmatpush.msra.mxu0 %v1181
      %1705 = vmatpush.msra.mxu0 %v1177
      %1706 = vmatpush.msra.mxu0 %v1173
      %1707 = vmatpush.msra.mxu0 %v1169
      %1708 = vmatmul.f32.gmra.mxu0 %v1036
      %v1709 = vpop.f32.mrf.mxu0
      %v1710 = vadd.f32 %v1690, %v1709
      %1711 = vdwg.mxu0
      %1712 = vmatpush.msra.mxu0 0.0
      %1713 = vmatpush.msra.mxu0 0.0
      %1714 = vmatpush.msra.mxu0 0.0
      %1715 = vmatpush.msra.mxu0 0.0
      %1716 = vmatpush.msra.mxu0 0.0
      %1717 = vmatpush.msra.mxu0 0.0
      %1718 = vmatpush.msra.mxu0 0.0
      %1719 = vmatpush.msra.mxu0 0.0
      %1720 = vmatpush.msra.mxu0 0.0
      %1721 = vmatpush.msra.mxu0 0.0
      %1722 = vmatpush.msra.mxu0 0.0
      %1723 = vmatpush.msra.mxu0 %v1410
      %1724 = vmatpush.msra.mxu0 %v1245
      %1725 = vmatpush.msra.mxu0 %v1241
      %1726 = vmatpush.msra.mxu0 %v1237
      %1727 = vmatpush.msra.mxu0 %v1233
      %1728 = vmatmul.f32.gmra.mxu0 %v1397
      %v1729 = vpop.f32.mrf.mxu0
      %v1730 = vadd.f32 %v1710, %v1729
      %1731 = vdwg.mxu0
      %v1732 = vld [vmem:[%s6] sm:$0xf]
      %v1734 = vperm.slane %v1732, 0
      %v1735 = vperm.slane %v1732, 1
      %v1736 = vperm.slane %v1732, 2
      %v1737 = vperm.slane %v1732, 3
      %v1742 = vadd.f32 %v1490, %v1734
      %v1743 = vadd.f32 %v1570, %v1735
      %v1744 = vadd.f32 %v1650, %v1736
      %v1745 = vadd.f32 %v1730, %v1737
      %v1746 = vld [vmem:[#allocation5] sm:$0xff]
      %v1747 = vsub.f32 0.0, %v1742
      %v1748 = vmul.f32 %v1747, 1.442695
      %v1749 = vpow.pop %v1748
      %v1750 = vadd.f32 %v1749, 1.0
      %v1751 = vrcp.pop %v1750
      %v1752 = vmul.f32 %v1750, %v1751
      %v1753 = vsub.f32 1.0, %v1752
      %v1754 = vmul.f32 %v1751, %v1753
      %v1755 = vadd.f32 %v1751, %v1754
      %vm1756 = vweird.f32 %v1750
      %vm1757 = vweird.f32 %v1751
      %vm1758 = vmor %vm1756, %vm1757
      %v1759 = vsel %vm1758, %v1751, %v1755
      %v1760 = vand.u32 2147483647, %v1750
      %vm1761 = vcmp.eq.f32.partialorder %v1760, 8.507059e+37
      %v1762 = vand.u32 %v1750, 2147483648
      %v1763 = vor.u32 1.1754944e-38, %v1762
      %v1764 = vsel %vm1761, %v1763, %v1759
      %v1765 = vmul.f32 1.0, %v1764
      %v1766 = vsub.f32 0.0, %v1743
      %v1767 = vmul.f32 %v1766, 1.442695
      %v1768 = vpow.pop %v1767
      %v1769 = vadd.f32 %v1768, 1.0
      %v1770 = vrcp.pop %v1769
      %v1771 = vmul.f32 %v1769, %v1770
      %v1772 = vsub.f32 1.0, %v1771
      %v1773 = vmul.f32 %v1770, %v1772
      %v1774 = vadd.f32 %v1770, %v1773
      %vm1775 = vweird.f32 %v1769
      %vm1776 = vweird.f32 %v1770
      %vm1777 = vmor %vm1775, %vm1776
      %v1778 = vsel %vm1777, %v1770, %v1774
      %v1779 = vand.u32 2147483647, %v1769
      %vm1780 = vcmp.eq.f32.partialorder %v1779, 8.507059e+37
      %v1781 = vand.u32 %v1769, 2147483648
      %v1782 = vor.u32 1.1754944e-38, %v1781
      %v1783 = vsel %vm1780, %v1782, %v1778
      %v1784 = vmul.f32 1.0, %v1783
      %v1785 = vtanh.pop %v1744
      %v1786 = vsub.f32 0.0, %v1745
      %v1787 = vmul.f32 %v1786, 1.442695
      %v1788 = vpow.pop %v1787
      %v1789 = vadd.f32 %v1788, 1.0
      %v1790 = vrcp.pop %v1789
      %v1791 = vmul.f32 %v1789, %v1790
      %v1792 = vsub.f32 1.0, %v1791
      %v1793 = vmul.f32 %v1790, %v1792
      %v1794 = vadd.f32 %v1790, %v1793
      %vm1795 = vweird.f32 %v1789
      %vm1796 = vweird.f32 %v1790
      %vm1797 = vmor %vm1795, %vm1796
      %v1798 = vsel %vm1797, %v1790, %v1794
      %v1799 = vand.u32 2147483647, %v1789
      %vm1800 = vcmp.eq.f32.partialorder %v1799, 8.507059e+37
      %v1801 = vand.u32 %v1789, 2147483648
      %v1802 = vor.u32 1.1754944e-38, %v1801
      %v1803 = vsel %vm1800, %v1802, %v1798
      %v1804 = vmul.f32 1.0, %v1803
      %v1805 = vmul.f32 %v1784, %v1746
      %v1806 = vmul.f32 %v1765, %v1785
      %v1807 = vadd.f32 %v1805, %v1806
      %v1808 = vtanh.pop %v1807
      %v1809 = vmul.f32 %v1804, %v1808
      %1810 = vst [vmem:[#allocation4] sm:$0xff] %v1809
      %1811 = vst [vmem:[#allocation5] sm:$0xff] %v1807
      %s1812 = smul.u32 %s1030, 8
      %s1813 = scalar_lea.vmem [#allocation3], %s1812
      %1814 = vst [vmem:[%s1813] sm:$0xff] %v1809
    $region129: #{tpu_custom_call.1} parent=1 // loop_footer
      %s1029 = sadd.s32 1, %s1025
    $region130: #{tpu_custom_call.1} parent=1 // loop_footer_branch
      %1024 = sbr.rel target = $region126
    $region131: #{tpu_custom_call.1} parent=1 // loop_exit
      _
    %1815 = vst [vmem:[#allocation4] sm:$0xff] 0.0
    %1816 = vst [vmem:[#allocation5] sm:$0xff] 0.0
    loop: start=0, step=1, limit=8
    $region132: #{tpu_custom_call.1} parent=1 // loop_pre_header
      _
    $region133: #{tpu_custom_call.1} parent=1 // loop_header
      %s1818 = sphi 0, %s1822
      %p1819 = scmp.ge.s32.totalorder %s1818, 8
    $region134: #{tpu_custom_call.1} parent=1 // loop_header_branch
      %1821 = sbr.rel (%p1819) target = $region138
    $region135: #{tpu_custom_call.1} parent=1 // loop_body
      %s1823 = smul.u32 %s1818, 8
      %s1824 = scalar_lea.vmem [#allocation2], %s1823
      %v1825 = vld [vmem:[%s1824] sm:$0xff]
      %v1826 = vld [vmem:[#allocation15] sm:$0xff]
      %v1827 = vld [vmem:[#allocation15 + $0x8] sm:$0xff]
      %v1828 = vld [vmem:[#allocation15 + $0x10] sm:$0xff]
      %v1829 = vld [vmem:[#allocation15 + $0x18] sm:$0xff]
      %v1830 = vld [vmem:[#allocation15 + $0x20] sm:$0xff]
      %v1831 = vld [vmem:[#allocation15 + $0x28] sm:$0xff]
      %v1832 = vld [vmem:[#allocation15 + $0x30] sm:$0xff]
      %v1833 = vld [vmem:[#allocation15 + $0x38] sm:$0xff]
      %v1834 = vld [vmem:[#allocation15 + $0x40] sm:$0xff]
      %v1835 = vld [vmem:[#allocation15 + $0x48] sm:$0xff]
      %v1836 = vld [vmem:[#allocation15 + $0x50] sm:$0xff]
      %v1837 = vld [vmem:[#allocation15 + $0x58] sm:$0xff]
      %v1838 = vld [vmem:[#allocation15 + $0x60] sm:$0xff]
      %v1839 = vld [vmem:[#allocation15 + $0x68] sm:$0xff]
      %v1840 = vld [vmem:[#allocation15 + $0x70] sm:$0xff]
      %v1841 = vld [vmem:[#allocation15 + $0x78] sm:$0xff]
      %v1842 = vld [vmem:[#allocation15 + $0x80] sm:$0xff]
      %v1843 = vld [vmem:[#allocation15 + $0x88] sm:$0xff]
      %v1844 = vld [vmem:[#allocation15 + $0x90] sm:$0xff]
      %v1845 = vld [vmem:[#allocation15 + $0x98] sm:$0xff]
      %v1846 = vld [vmem:[#allocation15 + $0xa0] sm:$0xff]
      %v1847 = vld [vmem:[#allocation15 + $0xa8] sm:$0xff]
      %v1848 = vld [vmem:[#allocation15 + $0xb0] sm:$0xff]
      %v1849 = vld [vmem:[#allocation15 + $0xb8] sm:$0xff]
      %v1850 = vld [vmem:[#allocation15 + $0xc0] sm:$0xff]
      %v1851 = vld [vmem:[#allocation15 + $0xc8] sm:$0xff]
      %v1852 = vld [vmem:[#allocation15 + $0xd0] sm:$0xff]
      %v1853 = vld [vmem:[#allocation15 + $0xd8] sm:$0xff]
      %v1854 = vld [vmem:[#allocation15 + $0xe0] sm:$0xff]
      %v1855 = vld [vmem:[#allocation15 + $0xe8] sm:$0xff]
      %v1856 = vld [vmem:[#allocation15 + $0xf0] sm:$0xff]
      %v1857 = vld [vmem:[#allocation15 + $0xf8] sm:$0xff]
      %v1858 = vld [vmem:[#allocation15 + $0x100] sm:$0xff]
      %v1859 = vld [vmem:[#allocation15 + $0x108] sm:$0xff]
      %v1860 = vld [vmem:[#allocation15 + $0x110] sm:$0xff]
      %v1861 = vld [vmem:[#allocation15 + $0x118] sm:$0xff]
      %v1862 = vld [vmem:[#allocation15 + $0x120] sm:$0xff]
      %v1863 = vld [vmem:[#allocation15 + $0x128] sm:$0xff]
      %v1864 = vld [vmem:[#allocation15 + $0x130] sm:$0xff]
      %v1865 = vld [vmem:[#allocation15 + $0x138] sm:$0xff]
      %v1866 = vld [vmem:[#allocation15 + $0x140] sm:$0xff]
      %v1867 = vld [vmem:[#allocation15 + $0x148] sm:$0xff]
      %v1868 = vld [vmem:[#allocation15 + $0x150] sm:$0xff]
      %v1869 = vld [vmem:[#allocation15 + $0x158] sm:$0xff]
      %v1870 = vld [vmem:[#allocation15 + $0x160] sm:$0xff]
      %v1871 = vld [vmem:[#allocation15 + $0x168] sm:$0xff]
      %v1872 = vld [vmem:[#allocation15 + $0x170] sm:$0xff]
      %v1873 = vld [vmem:[#allocation15 + $0x178] sm:$0xff]
      %v1874 = vld [vmem:[#allocation15 + $0x180] sm:$0xff]
      %v1875 = vld [vmem:[#allocation15 + $0x188] sm:$0xff]
      %v1876 = vld [vmem:[#allocation15 + $0x190] sm:$0xff]
      %v1877 = vld [vmem:[#allocation15 + $0x198] sm:$0xff]
      %v1878 = vld [vmem:[#allocation15 + $0x1a0] sm:$0xff]
      %v1879 = vld [vmem:[#allocation15 + $0x1a8] sm:$0xff]
      %v1880 = vld [vmem:[#allocation15 + $0x1b0] sm:$0xff]
      %v1881 = vld [vmem:[#allocation15 + $0x1b8] sm:$0xff]
      %v1882 = vld [vmem:[#allocation15 + $0x1c0] sm:$0xff]
      %v1883 = vld [vmem:[#allocation15 + $0x1c8] sm:$0xff]
      %v1884 = vld [vmem:[#allocation15 + $0x1d0] sm:$0xff]
      %v1885 = vld [vmem:[#allocation15 + $0x1d8] sm:$0xff]
      %v1886 = vld [vmem:[#allocation15 + $0x1e0] sm:$0xff]
      %v1887 = vld [vmem:[#allocation15 + $0x1e8] sm:$0xff]
      %v1888 = vld [vmem:[#allocation15 + $0x1f0] sm:$0xff]
      %v1889 = vld [vmem:[#allocation15 + $0x1f8] sm:$0xff]
      %s1890 = scalar_lea.vmem [#allocation3], %s1823
      %v1891 = vld [vmem:[%s1890] sm:$0xff]
      %v1892 = vld [vmem:[#allocation17] sm:$0xff]
      %v1893 = vld [vmem:[#allocation17 + $0x8] sm:$0xff]
      %v1894 = vld [vmem:[#allocation17 + $0x10] sm:$0xff]
      %v1895 = vld [vmem:[#allocation17 + $0x18] sm:$0xff]
      %v1896 = vld [vmem:[#allocation17 + $0x20] sm:$0xff]
      %v1897 = vld [vmem:[#allocation17 + $0x28] sm:$0xff]
      %v1898 = vld [vmem:[#allocation17 + $0x30] sm:$0xff]
      %v1899 = vld [vmem:[#allocation17 + $0x38] sm:$0xff]
      %v1900 = vld [vmem:[#allocation17 + $0x40] sm:$0xff]
      %v1901 = vld [vmem:[#allocation17 + $0x48] sm:$0xff]
      %v1902 = vld [vmem:[#allocation17 + $0x50] sm:$0xff]
      %v1903 = vld [vmem:[#allocation17 + $0x58] sm:$0xff]
      %v1904 = vld [vmem:[#allocation17 + $0x60] sm:$0xff]
      %v1905 = vld [vmem:[#allocation17 + $0x68] sm:$0xff]
      %v1906 = vld [vmem:[#allocation17 + $0x70] sm:$0xff]
      %v1907 = vld [vmem:[#allocation17 + $0x78] sm:$0xff]
      %v1908 = vld [vmem:[#allocation17 + $0x80] sm:$0xff]
      %v1909 = vld [vmem:[#allocation17 + $0x88] sm:$0xff]
      %v1910 = vld [vmem:[#allocation17 + $0x90] sm:$0xff]
      %v1911 = vld [vmem:[#allocation17 + $0x98] sm:$0xff]
      %v1912 = vld [vmem:[#allocation17 + $0xa0] sm:$0xff]
      %v1913 = vld [vmem:[#allocation17 + $0xa8] sm:$0xff]
      %v1914 = vld [vmem:[#allocation17 + $0xb0] sm:$0xff]
      %v1915 = vld [vmem:[#allocation17 + $0xb8] sm:$0xff]
      %v1916 = vld [vmem:[#allocation17 + $0xc0] sm:$0xff]
      %v1917 = vld [vmem:[#allocation17 + $0xc8] sm:$0xff]
      %v1918 = vld [vmem:[#allocation17 + $0xd0] sm:$0xff]
      %v1919 = vld [vmem:[#allocation17 + $0xd8] sm:$0xff]
      %v1920 = vld [vmem:[#allocation17 + $0xe0] sm:$0xff]
      %v1921 = vld [vmem:[#allocation17 + $0xe8] sm:$0xff]
      %v1922 = vld [vmem:[#allocation17 + $0xf0] sm:$0xff]
      %v1923 = vld [vmem:[#allocation17 + $0xf8] sm:$0xff]
      %v1924 = vld [vmem:[#allocation17 + $0x100] sm:$0xff]
      %v1925 = vld [vmem:[#allocation17 + $0x108] sm:$0xff]
      %v1926 = vld [vmem:[#allocation17 + $0x110] sm:$0xff]
      %v1927 = vld [vmem:[#allocation17 + $0x118] sm:$0xff]
      %v1928 = vld [vmem:[#allocation17 + $0x120] sm:$0xff]
      %v1929 = vld [vmem:[#allocation17 + $0x128] sm:$0xff]
      %v1930 = vld [vmem:[#allocation17 + $0x130] sm:$0xff]
      %v1931 = vld [vmem:[#allocation17 + $0x138] sm:$0xff]
      %v1932 = vld [vmem:[#allocation17 + $0x140] sm:$0xff]
      %v1933 = vld [vmem:[#allocation17 + $0x148] sm:$0xff]
      %v1934 = vld [vmem:[#allocation17 + $0x150] sm:$0xff]
      %v1935 = vld [vmem:[#allocation17 + $0x158] sm:$0xff]
      %v1936 = vld [vmem:[#allocation17 + $0x160] sm:$0xff]
      %v1937 = vld [vmem:[#allocation17 + $0x168] sm:$0xff]
      %v1938 = vld [vmem:[#allocation17 + $0x170] sm:$0xff]
      %v1939 = vld [vmem:[#allocation17 + $0x178] sm:$0xff]
      %v1940 = vld [vmem:[#allocation17 + $0x180] sm:$0xff]
      %v1941 = vld [vmem:[#allocation17 + $0x188] sm:$0xff]
      %v1942 = vld [vmem:[#allocation17 + $0x190] sm:$0xff]
      %v1943 = vld [vmem:[#allocation17 + $0x198] sm:$0xff]
      %v1944 = vld [vmem:[#allocation17 + $0x1a0] sm:$0xff]
      %v1945 = vld [vmem:[#allocation17 + $0x1a8] sm:$0xff]
      %v1946 = vld [vmem:[#allocation17 + $0x1b0] sm:$0xff]
      %v1947 = vld [vmem:[#allocation17 + $0x1b8] sm:$0xff]
      %v1948 = vld [vmem:[#allocation17 + $0x1c0] sm:$0xff]
      %v1949 = vld [vmem:[#allocation17 + $0x1c8] sm:$0xff]
      %v1950 = vld [vmem:[#allocation17 + $0x1d0] sm:$0xff]
      %v1951 = vld [vmem:[#allocation17 + $0x1d8] sm:$0xff]
      %v1952 = vld [vmem:[#allocation17 + $0x1e0] sm:$0xff]
      %v1953 = vld [vmem:[#allocation17 + $0x1e8] sm:$0xff]
      %v1954 = vld [vmem:[#allocation17 + $0x1f0] sm:$0xff]
      %v1955 = vld [vmem:[#allocation17 + $0x1f8] sm:$0xff]
      %1956 = vmatpush.msra.mxu0 %v1952
      %1957 = vmatpush.msra.mxu0 %v1948
      %1958 = vmatpush.msra.mxu0 %v1944
      %1959 = vmatpush.msra.mxu0 %v1940
      %1960 = vmatpush.msra.mxu0 %v1936
      %1961 = vmatpush.msra.mxu0 %v1932
      %1962 = vmatpush.msra.mxu0 %v1928
      %1963 = vmatpush.msra.mxu0 %v1924
      %1964 = vmatpush.msra.mxu0 %v1920
      %1965 = vmatpush.msra.mxu0 %v1916
      %1966 = vmatpush.msra.mxu0 %v1912
      %1967 = vmatpush.msra.mxu0 %v1908
      %1968 = vmatpush.msra.mxu0 %v1904
      %1969 = vmatpush.msra.mxu0 %v1900
      %1970 = vmatpush.msra.mxu0 %v1896
      %1971 = vmatpush.msra.mxu0 %v1892
      %1972 = vmatmul.f32.gmra.mxu0 %v1891
      %v1973 = vpop.f32.mrf.mxu0
      %v1974 = vadd.f32 0.0, %v1973
      %1975 = vdwg.mxu0
      %1976 = vmatpush.msra.mxu0 %v1953
      %1977 = vmatpush.msra.mxu0 %v1949
      %1978 = vmatpush.msra.mxu0 %v1945
      %1979 = vmatpush.msra.mxu0 %v1941
      %1980 = vmatpush.msra.mxu0 %v1937
      %1981 = vmatpush.msra.mxu0 %v1933
      %1982 = vmatpush.msra.mxu0 %v1929
      %1983 = vmatpush.msra.mxu0 %v1925
      %1984 = vmatpush.msra.mxu0 %v1921
      %1985 = vmatpush.msra.mxu0 %v1917
      %1986 = vmatpush.msra.mxu0 %v1913
      %1987 = vmatpush.msra.mxu0 %v1909
      %1988 = vmatpush.msra.mxu0 %v1905
      %1989 = vmatpush.msra.mxu0 %v1901
      %1990 = vmatpush.msra.mxu0 %v1897
      %1991 = vmatpush.msra.mxu0 %v1893
      %1992 = vmatmul.f32.gmra.mxu0 %v1891
      %v1993 = vpop.f32.mrf.mxu0
      %v1994 = vadd.f32 0.0, %v1993
      %1995 = vdwg.mxu0
      %1996 = vmatpush.msra.mxu0 %v1954
      %1997 = vmatpush.msra.mxu0 %v1950
      %1998 = vmatpush.msra.mxu0 %v1946
      %1999 = vmatpush.msra.mxu0 %v1942
      %2000 = vmatpush.msra.mxu0 %v1938
      %2001 = vmatpush.msra.mxu0 %v1934
      %2002 = vmatpush.msra.mxu0 %v1930
      %2003 = vmatpush.msra.mxu0 %v1926
      %2004 = vmatpush.msra.mxu0 %v1922
      %2005 = vmatpush.msra.mxu0 %v1918
      %2006 = vmatpush.msra.mxu0 %v1914
      %2007 = vmatpush.msra.mxu0 %v1910
      %2008 = vmatpush.msra.mxu0 %v1906
      %2009 = vmatpush.msra.mxu0 %v1902
      %2010 = vmatpush.msra.mxu0 %v1898
      %2011 = vmatpush.msra.mxu0 %v1894
      %2012 = vmatmul.f32.gmra.mxu0 %v1891
      %v2013 = vpop.f32.mrf.mxu0
      %v2014 = vadd.f32 0.0, %v2013
      %2015 = vdwg.mxu0
      %2016 = vmatpush.msra.mxu0 %v1955
      %2017 = vmatpush.msra.mxu0 %v1951
      %2018 = vmatpush.msra.mxu0 %v1947
      %2019 = vmatpush.msra.mxu0 %v1943
      %2020 = vmatpush.msra.mxu0 %v1939
      %2021 = vmatpush.msra.mxu0 %v1935
      %2022 = vmatpush.msra.mxu0 %v1931
      %2023 = vmatpush.msra.mxu0 %v1927
      %2024 = vmatpush.msra.mxu0 %v1923
      %2025 = vmatpush.msra.mxu0 %v1919
      %2026 = vmatpush.msra.mxu0 %v1915
      %2027 = vmatpush.msra.mxu0 %v1911
      %2028 = vmatpush.msra.mxu0 %v1907
      %2029 = vmatpush.msra.mxu0 %v1903
      %2030 = vmatpush.msra.mxu0 %v1899
      %2031 = vmatpush.msra.mxu0 %v1895
      %2032 = vmatmul.f32.gmra.mxu0 %v1891
      %v2033 = vpop.f32.mrf.mxu0
      %v2034 = vadd.f32 0.0, %v2033
      %2035 = vdwg.mxu0
      %2036 = vmatpush.msra.mxu0 %v1886
      %2037 = vmatpush.msra.mxu0 %v1882
      %2038 = vmatpush.msra.mxu0 %v1878
      %2039 = vmatpush.msra.mxu0 %v1874
      %2040 = vmatpush.msra.mxu0 %v1870
      %2041 = vmatpush.msra.mxu0 %v1866
      %2042 = vmatpush.msra.mxu0 %v1862
      %2043 = vmatpush.msra.mxu0 %v1858
      %2044 = vmatpush.msra.mxu0 %v1854
      %2045 = vmatpush.msra.mxu0 %v1850
      %2046 = vmatpush.msra.mxu0 %v1846
      %2047 = vmatpush.msra.mxu0 %v1842
      %2048 = vmatpush.msra.mxu0 %v1838
      %2049 = vmatpush.msra.mxu0 %v1834
      %2050 = vmatpush.msra.mxu0 %v1830
      %2051 = vmatpush.msra.mxu0 %v1826
      %2052 = vmatmul.f32.gmra.mxu0 %v1825
      %v2053 = vpop.f32.mrf.mxu0
      %v2054 = vadd.f32 %v1974, %v2053
      %2055 = vdwg.mxu0
      %2056 = vmatpush.msra.mxu0 %v1887
      %2057 = vmatpush.msra.mxu0 %v1883
      %2058 = vmatpush.msra.mxu0 %v1879
      %2059 = vmatpush.msra.mxu0 %v1875
      %2060 = vmatpush.msra.mxu0 %v1871
      %2061 = vmatpush.msra.mxu0 %v1867
      %2062 = vmatpush.msra.mxu0 %v1863
      %2063 = vmatpush.msra.mxu0 %v1859
      %2064 = vmatpush.msra.mxu0 %v1855
      %2065 = vmatpush.msra.mxu0 %v1851
      %2066 = vmatpush.msra.mxu0 %v1847
      %2067 = vmatpush.msra.mxu0 %v1843
      %2068 = vmatpush.msra.mxu0 %v1839
      %2069 = vmatpush.msra.mxu0 %v1835
      %2070 = vmatpush.msra.mxu0 %v1831
      %2071 = vmatpush.msra.mxu0 %v1827
      %2072 = vmatmul.f32.gmra.mxu0 %v1825
      %v2073 = vpop.f32.mrf.mxu0
      %v2074 = vadd.f32 %v1994, %v2073
      %2075 = vdwg.mxu0
      %2076 = vmatpush.msra.mxu0 %v1888
      %2077 = vmatpush.msra.mxu0 %v1884
      %2078 = vmatpush.msra.mxu0 %v1880
      %2079 = vmatpush.msra.mxu0 %v1876
      %2080 = vmatpush.msra.mxu0 %v1872
      %2081 = vmatpush.msra.mxu0 %v1868
      %2082 = vmatpush.msra.mxu0 %v1864
      %2083 = vmatpush.msra.mxu0 %v1860
      %2084 = vmatpush.msra.mxu0 %v1856
      %2085 = vmatpush.msra.mxu0 %v1852
      %2086 = vmatpush.msra.mxu0 %v1848
      %2087 = vmatpush.msra.mxu0 %v1844
      %2088 = vmatpush.msra.mxu0 %v1840
      %2089 = vmatpush.msra.mxu0 %v1836
      %2090 = vmatpush.msra.mxu0 %v1832
      %2091 = vmatpush.msra.mxu0 %v1828
      %2092 = vmatmul.f32.gmra.mxu0 %v1825
      %v2093 = vpop.f32.mrf.mxu0
      %v2094 = vadd.f32 %v2014, %v2093
      %2095 = vdwg.mxu0
      %2096 = vmatpush.msra.mxu0 %v1889
      %2097 = vmatpush.msra.mxu0 %v1885
      %2098 = vmatpush.msra.mxu0 %v1881
      %2099 = vmatpush.msra.mxu0 %v1877
      %2100 = vmatpush.msra.mxu0 %v1873
      %2101 = vmatpush.msra.mxu0 %v1869
      %2102 = vmatpush.msra.mxu0 %v1865
      %2103 = vmatpush.msra.mxu0 %v1861
      %2104 = vmatpush.msra.mxu0 %v1857
      %2105 = vmatpush.msra.mxu0 %v1853
      %2106 = vmatpush.msra.mxu0 %v1849
      %2107 = vmatpush.msra.mxu0 %v1845
      %2108 = vmatpush.msra.mxu0 %v1841
      %2109 = vmatpush.msra.mxu0 %v1837
      %2110 = vmatpush.msra.mxu0 %v1833
      %2111 = vmatpush.msra.mxu0 %v1829
      %2112 = vmatmul.f32.gmra.mxu0 %v1825
      %v2113 = vpop.f32.mrf.mxu0
      %v2114 = vadd.f32 %v2034, %v2113
      %2115 = vdwg.mxu0
      %v2116 = vld [vmem:[#allocation4] sm:$0xff]
      %v2117 = vld [vmem:[#allocation18] sm:$0xff]
      %v2118 = vld [vmem:[#allocation18 + $0x8] sm:$0xff]
      %v2119 = vld [vmem:[#allocation18 + $0x10] sm:$0xff]
      %v2120 = vld [vmem:[#allocation18 + $0x18] sm:$0xff]
      %v2121 = vld [vmem:[#allocation18 + $0x20] sm:$0xff]
      %v2122 = vld [vmem:[#allocation18 + $0x28] sm:$0xff]
      %v2123 = vld [vmem:[#allocation18 + $0x30] sm:$0xff]
      %v2124 = vld [vmem:[#allocation18 + $0x38] sm:$0xff]
      %v2125 = vld [vmem:[#allocation18 + $0x40] sm:$0xff]
      %v2126 = vld [vmem:[#allocation18 + $0x48] sm:$0xff]
      %v2127 = vld [vmem:[#allocation18 + $0x50] sm:$0xff]
      %v2128 = vld [vmem:[#allocation18 + $0x58] sm:$0xff]
      %v2129 = vld [vmem:[#allocation18 + $0x60] sm:$0xff]
      %v2130 = vld [vmem:[#allocation18 + $0x68] sm:$0xff]
      %v2131 = vld [vmem:[#allocation18 + $0x70] sm:$0xff]
      %v2132 = vld [vmem:[#allocation18 + $0x78] sm:$0xff]
      %v2133 = vld [vmem:[#allocation18 + $0x80] sm:$0xff]
      %v2134 = vld [vmem:[#allocation18 + $0x88] sm:$0xff]
      %v2135 = vld [vmem:[#allocation18 + $0x90] sm:$0xff]
      %v2136 = vld [vmem:[#allocation18 + $0x98] sm:$0xff]
      %v2137 = vld [vmem:[#allocation18 + $0xa0] sm:$0xff]
      %v2138 = vld [vmem:[#allocation18 + $0xa8] sm:$0xff]
      %v2139 = vld [vmem:[#allocation18 + $0xb0] sm:$0xff]
      %v2140 = vld [vmem:[#allocation18 + $0xb8] sm:$0xff]
      %v2141 = vld [vmem:[#allocation18 + $0xc0] sm:$0xff]
      %v2142 = vld [vmem:[#allocation18 + $0xc8] sm:$0xff]
      %v2143 = vld [vmem:[#allocation18 + $0xd0] sm:$0xff]
      %v2144 = vld [vmem:[#allocation18 + $0xd8] sm:$0xff]
      %v2145 = vld [vmem:[#allocation18 + $0xe0] sm:$0xff]
      %v2146 = vld [vmem:[#allocation18 + $0xe8] sm:$0xff]
      %v2147 = vld [vmem:[#allocation18 + $0xf0] sm:$0xff]
      %v2148 = vld [vmem:[#allocation18 + $0xf8] sm:$0xff]
      %v2149 = vld [vmem:[#allocation18 + $0x100] sm:$0xff]
      %v2150 = vld [vmem:[#allocation18 + $0x108] sm:$0xff]
      %v2151 = vld [vmem:[#allocation18 + $0x110] sm:$0xff]
      %v2152 = vld [vmem:[#allocation18 + $0x118] sm:$0xff]
      %v2153 = vld [vmem:[#allocation18 + $0x120] sm:$0xff]
      %v2154 = vld [vmem:[#allocation18 + $0x128] sm:$0xff]
      %v2155 = vld [vmem:[#allocation18 + $0x130] sm:$0xff]
      %v2156 = vld [vmem:[#allocation18 + $0x138] sm:$0xff]
      %v2157 = vld [vmem:[#allocation18 + $0x140] sm:$0xff]
      %v2158 = vld [vmem:[#allocation18 + $0x148] sm:$0xff]
      %v2159 = vld [vmem:[#allocation18 + $0x150] sm:$0xff]
      %v2160 = vld [vmem:[#allocation18 + $0x158] sm:$0xff]
      %v2161 = vld [vmem:[#allocation18 + $0x160] sm:$0xff]
      %v2162 = vld [vmem:[#allocation18 + $0x168] sm:$0xff]
      %v2163 = vld [vmem:[#allocation18 + $0x170] sm:$0xff]
      %v2164 = vld [vmem:[#allocation18 + $0x178] sm:$0xff]
      %v2165 = vld [vmem:[#allocation18 + $0x180] sm:$0xff]
      %v2166 = vld [vmem:[#allocation18 + $0x188] sm:$0xff]
      %v2167 = vld [vmem:[#allocation18 + $0x190] sm:$0xff]
      %v2168 = vld [vmem:[#allocation18 + $0x198] sm:$0xff]
      %v2169 = vld [vmem:[#allocation18 + $0x1a0] sm:$0xff]
      %v2170 = vld [vmem:[#allocation18 + $0x1a8] sm:$0xff]
      %v2171 = vld [vmem:[#allocation18 + $0x1b0] sm:$0xff]
      %v2172 = vld [vmem:[#allocation18 + $0x1b8] sm:$0xff]
      %v2173 = vld [vmem:[#allocation18 + $0x1c0] sm:$0xff]
      %v2174 = vld [vmem:[#allocation18 + $0x1c8] sm:$0xff]
      %v2175 = vld [vmem:[#allocation18 + $0x1d0] sm:$0xff]
      %v2176 = vld [vmem:[#allocation18 + $0x1d8] sm:$0xff]
      %v2177 = vld [vmem:[#allocation18 + $0x1e0] sm:$0xff]
      %v2178 = vld [vmem:[#allocation18 + $0x1e8] sm:$0xff]
      %v2179 = vld [vmem:[#allocation18 + $0x1f0] sm:$0xff]
      %v2180 = vld [vmem:[#allocation18 + $0x1f8] sm:$0xff]
      %2181 = vmatpush.msra.mxu0 %v2177
      %2182 = vmatpush.msra.mxu0 %v2173
      %2183 = vmatpush.msra.mxu0 %v2169
      %2184 = vmatpush.msra.mxu0 %v2165
      %2185 = vmatpush.msra.mxu0 %v2161
      %2186 = vmatpush.msra.mxu0 %v2157
      %2187 = vmatpush.msra.mxu0 %v2153
      %2188 = vmatpush.msra.mxu0 %v2149
      %2189 = vmatpush.msra.mxu0 %v2145
      %2190 = vmatpush.msra.mxu0 %v2141
      %2191 = vmatpush.msra.mxu0 %v2137
      %2192 = vmatpush.msra.mxu0 %v2133
      %2193 = vmatpush.msra.mxu0 %v2129
      %2194 = vmatpush.msra.mxu0 %v2125
      %2195 = vmatpush.msra.mxu0 %v2121
      %2196 = vmatpush.msra.mxu0 %v2117
      %2197 = vmatmul.f32.gmra.mxu0 %v2116
      %v2198 = vpop.f32.mrf.mxu0
      %v2199 = vadd.f32 0.0, %v2198
      %2200 = vdwg.mxu0
      %2201 = vmatpush.msra.mxu0 %v2178
      %2202 = vmatpush.msra.mxu0 %v2174
      %2203 = vmatpush.msra.mxu0 %v2170
      %2204 = vmatpush.msra.mxu0 %v2166
      %2205 = vmatpush.msra.mxu0 %v2162
      %2206 = vmatpush.msra.mxu0 %v2158
      %2207 = vmatpush.msra.mxu0 %v2154
      %2208 = vmatpush.msra.mxu0 %v2150
      %2209 = vmatpush.msra.mxu0 %v2146
      %2210 = vmatpush.msra.mxu0 %v2142
      %2211 = vmatpush.msra.mxu0 %v2138
      %2212 = vmatpush.msra.mxu0 %v2134
      %2213 = vmatpush.msra.mxu0 %v2130
      %2214 = vmatpush.msra.mxu0 %v2126
      %2215 = vmatpush.msra.mxu0 %v2122
      %2216 = vmatpush.msra.mxu0 %v2118
      %2217 = vmatmul.f32.gmra.mxu0 %v2116
      %v2218 = vpop.f32.mrf.mxu0
      %v2219 = vadd.f32 0.0, %v2218
      %2220 = vdwg.mxu0
      %2221 = vmatpush.msra.mxu0 %v2179
      %2222 = vmatpush.msra.mxu0 %v2175
      %2223 = vmatpush.msra.mxu0 %v2171
      %2224 = vmatpush.msra.mxu0 %v2167
      %2225 = vmatpush.msra.mxu0 %v2163
      %2226 = vmatpush.msra.mxu0 %v2159
      %2227 = vmatpush.msra.mxu0 %v2155
      %2228 = vmatpush.msra.mxu0 %v2151
      %2229 = vmatpush.msra.mxu0 %v2147
      %2230 = vmatpush.msra.mxu0 %v2143
      %2231 = vmatpush.msra.mxu0 %v2139
      %2232 = vmatpush.msra.mxu0 %v2135
      %2233 = vmatpush.msra.mxu0 %v2131
      %2234 = vmatpush.msra.mxu0 %v2127
      %2235 = vmatpush.msra.mxu0 %v2123
      %2236 = vmatpush.msra.mxu0 %v2119
      %2237 = vmatmul.f32.gmra.mxu0 %v2116
      %v2238 = vpop.f32.mrf.mxu0
      %v2239 = vadd.f32 0.0, %v2238
      %2240 = vdwg.mxu0
      %2241 = vmatpush.msra.mxu0 %v2180
      %2242 = vmatpush.msra.mxu0 %v2176
      %2243 = vmatpush.msra.mxu0 %v2172
      %2244 = vmatpush.msra.mxu0 %v2168
      %2245 = vmatpush.msra.mxu0 %v2164
      %2246 = vmatpush.msra.mxu0 %v2160
      %2247 = vmatpush.msra.mxu0 %v2156
      %2248 = vmatpush.msra.mxu0 %v2152
      %2249 = vmatpush.msra.mxu0 %v2148
      %2250 = vmatpush.msra.mxu0 %v2144
      %2251 = vmatpush.msra.mxu0 %v2140
      %2252 = vmatpush.msra.mxu0 %v2136
      %2253 = vmatpush.msra.mxu0 %v2132
      %2254 = vmatpush.msra.mxu0 %v2128
      %2255 = vmatpush.msra.mxu0 %v2124
      %2256 = vmatpush.msra.mxu0 %v2120
      %2257 = vmatmul.f32.gmra.mxu0 %v2116
      %v2258 = vpop.f32.mrf.mxu0
      %v2259 = vadd.f32 0.0, %v2258
      %2260 = vdwg.mxu0
      %v2261 = vadd.f32 %v2054, %v2199
      %v2262 = vadd.f32 %v2074, %v2219
      %v2263 = vadd.f32 %v2094, %v2239
      %v2264 = vadd.f32 %v2114, %v2259
      %v2265 = vld [vmem:[%s10] sm:$0xf]
      %v2267 = vperm.slane %v2265, 0
      %v2268 = vperm.slane %v2265, 1
      %v2269 = vperm.slane %v2265, 2
      %v2270 = vperm.slane %v2265, 3
      %v2275 = vadd.f32 %v2261, %v2267
      %v2276 = vadd.f32 %v2262, %v2268
      %v2277 = vadd.f32 %v2263, %v2269
      %v2278 = vadd.f32 %v2264, %v2270
      %v2279 = vld [vmem:[#allocation5] sm:$0xff]
      %v2280 = vsub.f32 0.0, %v2275
      %v2281 = vmul.f32 %v2280, 1.442695
      %v2282 = vpow.pop %v2281
      %v2283 = vadd.f32 %v2282, 1.0
      %v2284 = vrcp.pop %v2283
      %v2285 = vmul.f32 %v2283, %v2284
      %v2286 = vsub.f32 1.0, %v2285
      %v2287 = vmul.f32 %v2284, %v2286
      %v2288 = vadd.f32 %v2284, %v2287
      %vm2289 = vweird.f32 %v2283
      %vm2290 = vweird.f32 %v2284
      %vm2291 = vmor %vm2289, %vm2290
      %v2292 = vsel %vm2291, %v2284, %v2288
      %v2293 = vand.u32 2147483647, %v2283
      %vm2294 = vcmp.eq.f32.partialorder %v2293, 8.507059e+37
      %v2295 = vand.u32 %v2283, 2147483648
      %v2296 = vor.u32 1.1754944e-38, %v2295
      %v2297 = vsel %vm2294, %v2296, %v2292
      %v2298 = vmul.f32 1.0, %v2297
      %v2299 = vsub.f32 0.0, %v2276
      %v2300 = vmul.f32 %v2299, 1.442695
      %v2301 = vpow.pop %v2300
      %v2302 = vadd.f32 %v2301, 1.0
      %v2303 = vrcp.pop %v2302
      %v2304 = vmul.f32 %v2302, %v2303
      %v2305 = vsub.f32 1.0, %v2304
      %v2306 = vmul.f32 %v2303, %v2305
      %v2307 = vadd.f32 %v2303, %v2306
      %vm2308 = vweird.f32 %v2302
      %vm2309 = vweird.f32 %v2303
      %vm2310 = vmor %vm2308, %vm2309
      %v2311 = vsel %vm2310, %v2303, %v2307
      %v2312 = vand.u32 2147483647, %v2302
      %vm2313 = vcmp.eq.f32.partialorder %v2312, 8.507059e+37
      %v2314 = vand.u32 %v2302, 2147483648
      %v2315 = vor.u32 1.1754944e-38, %v2314
      %v2316 = vsel %vm2313, %v2315, %v2311
      %v2317 = vmul.f32 1.0, %v2316
      %v2318 = vtanh.pop %v2277
      %v2319 = vsub.f32 0.0, %v2278
      %v2320 = vmul.f32 %v2319, 1.442695
      %v2321 = vpow.pop %v2320
      %v2322 = vadd.f32 %v2321, 1.0
      %v2323 = vrcp.pop %v2322
      %v2324 = vmul.f32 %v2322, %v2323
      %v2325 = vsub.f32 1.0, %v2324
      %v2326 = vmul.f32 %v2323, %v2325
      %v2327 = vadd.f32 %v2323, %v2326
      %vm2328 = vweird.f32 %v2322
      %vm2329 = vweird.f32 %v2323
      %vm2330 = vmor %vm2328, %vm2329
      %v2331 = vsel %vm2330, %v2323, %v2327
      %v2332 = vand.u32 2147483647, %v2322
      %vm2333 = vcmp.eq.f32.partialorder %v2332, 8.507059e+37
      %v2334 = vand.u32 %v2322, 2147483648
      %v2335 = vor.u32 1.1754944e-38, %v2334
      %v2336 = vsel %vm2333, %v2335, %v2331
      %v2337 = vmul.f32 1.0, %v2336
      %v2338 = vmul.f32 %v2317, %v2279
      %v2339 = vmul.f32 %v2298, %v2318
      %v2340 = vadd.f32 %v2338, %v2339
      %v2341 = vtanh.pop %v2340
      %v2342 = vmul.f32 %v2337, %v2341
      %2343 = vst [vmem:[#allocation4] sm:$0xff] %v2342
      %2344 = vst [vmem:[#allocation5] sm:$0xff] %v2340
    $region136: #{tpu_custom_call.1} parent=1 // loop_footer
      %s1822 = sadd.s32 1, %s1818
    $region137: #{tpu_custom_call.1} parent=1 // loop_footer_branch
      %1817 = sbr.rel target = $region133
    $region138: #{tpu_custom_call.1} parent=1 // loop_exit
      _
    %v2345 = vld [vmem:[#allocation4] sm:$0xff]
    %s2346 = scalar_lea.vmem [#allocation2], 56
    %v2347 = vld [vmem:[%s2346] sm:$0xff]
    %v2348 = vld [vmem:[#allocation20] sm:$0xff]
    %v2349 = vld [vmem:[#allocation20 + $0x8] sm:$0xff]
    %v2350 = vld [vmem:[#allocation20 + $0x10] sm:$0xff]
    %v2351 = vld [vmem:[#allocation20 + $0x18] sm:$0xff]
    %v2352 = vld [vmem:[#allocation20 + $0x20] sm:$0xff]
    %v2353 = vld [vmem:[#allocation20 + $0x28] sm:$0xff]
    %v2354 = vld [vmem:[#allocation20 + $0x30] sm:$0xff]
    %v2355 = vld [vmem:[#allocation20 + $0x38] sm:$0xff]
    %v2356 = vld [vmem:[#allocation20 + $0x40] sm:$0xff]
    %v2357 = vld [vmem:[#allocation20 + $0x48] sm:$0xff]
    %v2358 = vld [vmem:[#allocation20 + $0x50] sm:$0xff]
    %v2359 = vld [vmem:[#allocation20 + $0x58] sm:$0xff]
    %v2360 = vld [vmem:[#allocation20 + $0x60] sm:$0xff]
    %v2361 = vld [vmem:[#allocation20 + $0x68] sm:$0xff]
    %v2362 = vld [vmem:[#allocation20 + $0x70] sm:$0xff]
    %v2363 = vld [vmem:[#allocation20 + $0x78] sm:$0xff]
    %v2364 = vld [vmem:[#allocation20 + $0x80] sm:$0xff]
    %v2365 = vld [vmem:[#allocation20 + $0x88] sm:$0xff]
    %v2366 = vld [vmem:[#allocation20 + $0x90] sm:$0xff]
    %v2367 = vld [vmem:[#allocation20 + $0x98] sm:$0xff]
    %v2368 = vld [vmem:[#allocation20 + $0xa0] sm:$0xff]
    %v2369 = vld [vmem:[#allocation20 + $0xa8] sm:$0xff]
    %v2370 = vld [vmem:[#allocation20 + $0xb0] sm:$0xff]
    %v2371 = vld [vmem:[#allocation20 + $0xb8] sm:$0xff]
    %v2372 = vld [vmem:[#allocation20 + $0xc0] sm:$0xff]
    %v2373 = vld [vmem:[#allocation20 + $0xc8] sm:$0xff]
    %v2374 = vld [vmem:[#allocation20 + $0xd0] sm:$0xff]
    %v2375 = vld [vmem:[#allocation20 + $0xd8] sm:$0xff]
    %v2376 = vld [vmem:[#allocation20 + $0xe0] sm:$0xff]
    %v2377 = vld [vmem:[#allocation20 + $0xe8] sm:$0xff]
    %v2378 = vld [vmem:[#allocation20 + $0xf0] sm:$0xff]
    %v2379 = vld [vmem:[#allocation20 + $0xf8] sm:$0xff]
    %v2380 = vld [vmem:[#allocation20 + $0x100] sm:$0xff]
    %v2381 = vld [vmem:[#allocation20 + $0x108] sm:$0xff]
    %v2382 = vld [vmem:[#allocation20 + $0x110] sm:$0xff]
    %v2383 = vld [vmem:[#allocation20 + $0x118] sm:$0xff]
    %v2384 = vld [vmem:[#allocation20 + $0x120] sm:$0xff]
    %v2385 = vld [vmem:[#allocation20 + $0x128] sm:$0xff]
    %v2386 = vld [vmem:[#allocation20 + $0x130] sm:$0xff]
    %v2387 = vld [vmem:[#allocation20 + $0x138] sm:$0xff]
    %v2388 = vld [vmem:[#allocation20 + $0x140] sm:$0xff]
    %v2389 = vld [vmem:[#allocation20 + $0x148] sm:$0xff]
    %v2390 = vld [vmem:[#allocation20 + $0x150] sm:$0xff]
    %v2391 = vld [vmem:[#allocation20 + $0x158] sm:$0xff]
    %v2392 = vld [vmem:[#allocation20 + $0x160] sm:$0xff]
    %v2393 = vld [vmem:[#allocation20 + $0x168] sm:$0xff]
    %v2394 = vld [vmem:[#allocation20 + $0x170] sm:$0xff]
    %v2395 = vld [vmem:[#allocation20 + $0x178] sm:$0xff]
    %v2396 = vld [vmem:[#allocation20 + $0x180] sm:$0xff]
    %v2397 = vld [vmem:[#allocation20 + $0x188] sm:$0xff]
    %v2398 = vld [vmem:[#allocation20 + $0x190] sm:$0xff]
    %v2399 = vld [vmem:[#allocation20 + $0x198] sm:$0xff]
    %v2400 = vld [vmem:[#allocation20 + $0x1a0] sm:$0xff]
    %v2401 = vld [vmem:[#allocation20 + $0x1a8] sm:$0xff]
    %v2402 = vld [vmem:[#allocation20 + $0x1b0] sm:$0xff]
    %v2403 = vld [vmem:[#allocation20 + $0x1b8] sm:$0xff]
    %v2404 = vld [vmem:[#allocation20 + $0x1c0] sm:$0xff]
    %v2405 = vld [vmem:[#allocation20 + $0x1c8] sm:$0xff]
    %v2406 = vld [vmem:[#allocation20 + $0x1d0] sm:$0xff]
    %v2407 = vld [vmem:[#allocation20 + $0x1d8] sm:$0xff]
    %v2408 = vld [vmem:[#allocation20 + $0x1e0] sm:$0xff]
    %v2409 = vld [vmem:[#allocation20 + $0x1e8] sm:$0xff]
    %v2410 = vld [vmem:[#allocation20 + $0x1f0] sm:$0xff]
    %v2411 = vld [vmem:[#allocation20 + $0x1f8] sm:$0xff]
    %s2412 = scalar_lea.vmem [#allocation3], 56
    %v2413 = vld [vmem:[%s2412] sm:$0xff]
    %v2414 = vld [vmem:[#allocation21] sm:$0xff]
    %v2415 = vld [vmem:[#allocation21 + $0x8] sm:$0xff]
    %v2416 = vld [vmem:[#allocation21 + $0x10] sm:$0xff]
    %v2417 = vld [vmem:[#allocation21 + $0x18] sm:$0xff]
    %v2418 = vld [vmem:[#allocation21 + $0x20] sm:$0xff]
    %v2419 = vld [vmem:[#allocation21 + $0x28] sm:$0xff]
    %v2420 = vld [vmem:[#allocation21 + $0x30] sm:$0xff]
    %v2421 = vld [vmem:[#allocation21 + $0x38] sm:$0xff]
    %v2422 = vld [vmem:[#allocation21 + $0x40] sm:$0xff]
    %v2423 = vld [vmem:[#allocation21 + $0x48] sm:$0xff]
    %v2424 = vld [vmem:[#allocation21 + $0x50] sm:$0xff]
    %v2425 = vld [vmem:[#allocation21 + $0x58] sm:$0xff]
    %v2426 = vld [vmem:[#allocation21 + $0x60] sm:$0xff]
    %v2427 = vld [vmem:[#allocation21 + $0x68] sm:$0xff]
    %v2428 = vld [vmem:[#allocation21 + $0x70] sm:$0xff]
    %v2429 = vld [vmem:[#allocation21 + $0x78] sm:$0xff]
    %v2430 = vld [vmem:[#allocation21 + $0x80] sm:$0xff]
    %v2431 = vld [vmem:[#allocation21 + $0x88] sm:$0xff]
    %v2432 = vld [vmem:[#allocation21 + $0x90] sm:$0xff]
    %v2433 = vld [vmem:[#allocation21 + $0x98] sm:$0xff]
    %v2434 = vld [vmem:[#allocation21 + $0xa0] sm:$0xff]
    %v2435 = vld [vmem:[#allocation21 + $0xa8] sm:$0xff]
    %v2436 = vld [vmem:[#allocation21 + $0xb0] sm:$0xff]
    %v2437 = vld [vmem:[#allocation21 + $0xb8] sm:$0xff]
    %v2438 = vld [vmem:[#allocation21 + $0xc0] sm:$0xff]
    %v2439 = vld [vmem:[#allocation21 + $0xc8] sm:$0xff]
    %v2440 = vld [vmem:[#allocation21 + $0xd0] sm:$0xff]
    %v2441 = vld [vmem:[#allocation21 + $0xd8] sm:$0xff]
    %v2442 = vld [vmem:[#allocation21 + $0xe0] sm:$0xff]
    %v2443 = vld [vmem:[#allocation21 + $0xe8] sm:$0xff]
    %v2444 = vld [vmem:[#allocation21 + $0xf0] sm:$0xff]
    %v2445 = vld [vmem:[#allocation21 + $0xf8] sm:$0xff]
    %v2446 = vld [vmem:[#allocation21 + $0x100] sm:$0xff]
    %v2447 = vld [vmem:[#allocation21 + $0x108] sm:$0xff]
    %v2448 = vld [vmem:[#allocation21 + $0x110] sm:$0xff]
    %v2449 = vld [vmem:[#allocation21 + $0x118] sm:$0xff]
    %v2450 = vld [vmem:[#allocation21 + $0x120] sm:$0xff]
    %v2451 = vld [vmem:[#allocation21 + $0x128] sm:$0xff]
    %v2452 = vld [vmem:[#allocation21 + $0x130] sm:$0xff]
    %v2453 = vld [vmem:[#allocation21 + $0x138] sm:$0xff]
    %v2454 = vld [vmem:[#allocation21 + $0x140] sm:$0xff]
    %v2455 = vld [vmem:[#allocation21 + $0x148] sm:$0xff]
    %v2456 = vld [vmem:[#allocation21 + $0x150] sm:$0xff]
    %v2457 = vld [vmem:[#allocation21 + $0x158] sm:$0xff]
    %v2458 = vld [vmem:[#allocation21 + $0x160] sm:$0xff]
    %v2459 = vld [vmem:[#allocation21 + $0x168] sm:$0xff]
    %v2460 = vld [vmem:[#allocation21 + $0x170] sm:$0xff]
    %v2461 = vld [vmem:[#allocation21 + $0x178] sm:$0xff]
    %v2462 = vld [vmem:[#allocation21 + $0x180] sm:$0xff]
    %v2463 = vld [vmem:[#allocation21 + $0x188] sm:$0xff]
    %v2464 = vld [vmem:[#allocation21 + $0x190] sm:$0xff]
    %v2465 = vld [vmem:[#allocation21 + $0x198] sm:$0xff]
    %v2466 = vld [vmem:[#allocation21 + $0x1a0] sm:$0xff]
    %v2467 = vld [vmem:[#allocation21 + $0x1a8] sm:$0xff]
    %v2468 = vld [vmem:[#allocation21 + $0x1b0] sm:$0xff]
    %v2469 = vld [vmem:[#allocation21 + $0x1b8] sm:$0xff]
    %v2470 = vld [vmem:[#allocation21 + $0x1c0] sm:$0xff]
    %v2471 = vld [vmem:[#allocation21 + $0x1c8] sm:$0xff]
    %v2472 = vld [vmem:[#allocation21 + $0x1d0] sm:$0xff]
    %v2473 = vld [vmem:[#allocation21 + $0x1d8] sm:$0xff]
    %v2474 = vld [vmem:[#allocation21 + $0x1e0] sm:$0xff]
    %v2475 = vld [vmem:[#allocation21 + $0x1e8] sm:$0xff]
    %v2476 = vld [vmem:[#allocation21 + $0x1f0] sm:$0xff]
    %v2477 = vld [vmem:[#allocation21 + $0x1f8] sm:$0xff]
    %2478 = vmatpush.msra.mxu0 %v2474
    %2479 = vmatpush.msra.mxu0 %v2470
    %2480 = vmatpush.msra.mxu0 %v2466
    %2481 = vmatpush.msra.mxu0 %v2462
    %2482 = vmatpush.msra.mxu0 %v2458
    %2483 = vmatpush.msra.mxu0 %v2454
    %2484 = vmatpush.msra.mxu0 %v2450
    %2485 = vmatpush.msra.mxu0 %v2446
    %2486 = vmatpush.msra.mxu0 %v2442
    %2487 = vmatpush.msra.mxu0 %v2438
    %2488 = vmatpush.msra.mxu0 %v2434
    %2489 = vmatpush.msra.mxu0 %v2430
    %2490 = vmatpush.msra.mxu0 %v2426
    %2491 = vmatpush.msra.mxu0 %v2422
    %2492 = vmatpush.msra.mxu0 %v2418
    %2493 = vmatpush.msra.mxu0 %v2414
    %2494 = vmatmul.f32.gmra.mxu0 %v2413
    %v2495 = vpop.f32.mrf.mxu0
    %v2496 = vadd.f32 0.0, %v2495
    %2497 = vdwg.mxu0
    %2498 = vmatpush.msra.mxu0 %v2475
    %2499 = vmatpush.msra.mxu0 %v2471
    %2500 = vmatpush.msra.mxu0 %v2467
    %2501 = vmatpush.msra.mxu0 %v2463
    %2502 = vmatpush.msra.mxu0 %v2459
    %2503 = vmatpush.msra.mxu0 %v2455
    %2504 = vmatpush.msra.mxu0 %v2451
    %2505 = vmatpush.msra.mxu0 %v2447
    %2506 = vmatpush.msra.mxu0 %v2443
    %2507 = vmatpush.msra.mxu0 %v2439
    %2508 = vmatpush.msra.mxu0 %v2435
    %2509 = vmatpush.msra.mxu0 %v2431
    %2510 = vmatpush.msra.mxu0 %v2427
    %2511 = vmatpush.msra.mxu0 %v2423
    %2512 = vmatpush.msra.mxu0 %v2419
    %2513 = vmatpush.msra.mxu0 %v2415
    %2514 = vmatmul.f32.gmra.mxu0 %v2413
    %v2515 = vpop.f32.mrf.mxu0
    %v2516 = vadd.f32 0.0, %v2515
    %2517 = vdwg.mxu0
    %2518 = vmatpush.msra.mxu0 %v2476
    %2519 = vmatpush.msra.mxu0 %v2472
    %2520 = vmatpush.msra.mxu0 %v2468
    %2521 = vmatpush.msra.mxu0 %v2464
    %2522 = vmatpush.msra.mxu0 %v2460
    %2523 = vmatpush.msra.mxu0 %v2456
    %2524 = vmatpush.msra.mxu0 %v2452
    %2525 = vmatpush.msra.mxu0 %v2448
    %2526 = vmatpush.msra.mxu0 %v2444
    %2527 = vmatpush.msra.mxu0 %v2440
    %2528 = vmatpush.msra.mxu0 %v2436
    %2529 = vmatpush.msra.mxu0 %v2432
    %2530 = vmatpush.msra.mxu0 %v2428
    %2531 = vmatpush.msra.mxu0 %v2424
    %2532 = vmatpush.msra.mxu0 %v2420
    %2533 = vmatpush.msra.mxu0 %v2416
    %2534 = vmatmul.f32.gmra.mxu0 %v2413
    %v2535 = vpop.f32.mrf.mxu0
    %v2536 = vadd.f32 0.0, %v2535
    %2537 = vdwg.mxu0
    %2538 = vmatpush.msra.mxu0 %v2477
    %2539 = vmatpush.msra.mxu0 %v2473
    %2540 = vmatpush.msra.mxu0 %v2469
    %2541 = vmatpush.msra.mxu0 %v2465
    %2542 = vmatpush.msra.mxu0 %v2461
    %2543 = vmatpush.msra.mxu0 %v2457
    %2544 = vmatpush.msra.mxu0 %v2453
    %2545 = vmatpush.msra.mxu0 %v2449
    %2546 = vmatpush.msra.mxu0 %v2445
    %2547 = vmatpush.msra.mxu0 %v2441
    %2548 = vmatpush.msra.mxu0 %v2437
    %2549 = vmatpush.msra.mxu0 %v2433
    %2550 = vmatpush.msra.mxu0 %v2429
    %2551 = vmatpush.msra.mxu0 %v2425
    %2552 = vmatpush.msra.mxu0 %v2421
    %2553 = vmatpush.msra.mxu0 %v2417
    %2554 = vmatmul.f32.gmra.mxu0 %v2413
    %v2555 = vpop.f32.mrf.mxu0
    %v2556 = vadd.f32 0.0, %v2555
    %2557 = vdwg.mxu0
    %2558 = vmatpush.msra.mxu0 %v2408
    %2559 = vmatpush.msra.mxu0 %v2404
    %2560 = vmatpush.msra.mxu0 %v2400
    %2561 = vmatpush.msra.mxu0 %v2396
    %2562 = vmatpush.msra.mxu0 %v2392
    %2563 = vmatpush.msra.mxu0 %v2388
    %2564 = vmatpush.msra.mxu0 %v2384
    %2565 = vmatpush.msra.mxu0 %v2380
    %2566 = vmatpush.msra.mxu0 %v2376
    %2567 = vmatpush.msra.mxu0 %v2372
    %2568 = vmatpush.msra.mxu0 %v2368
    %2569 = vmatpush.msra.mxu0 %v2364
    %2570 = vmatpush.msra.mxu0 %v2360
    %2571 = vmatpush.msra.mxu0 %v2356
    %2572 = vmatpush.msra.mxu0 %v2352
    %2573 = vmatpush.msra.mxu0 %v2348
    %2574 = vmatmul.f32.gmra.mxu0 %v2347
    %v2575 = vpop.f32.mrf.mxu0
    %v2576 = vadd.f32 %v2496, %v2575
    %2577 = vdwg.mxu0
    %2578 = vmatpush.msra.mxu0 %v2409
    %2579 = vmatpush.msra.mxu0 %v2405
    %2580 = vmatpush.msra.mxu0 %v2401
    %2581 = vmatpush.msra.mxu0 %v2397
    %2582 = vmatpush.msra.mxu0 %v2393
    %2583 = vmatpush.msra.mxu0 %v2389
    %2584 = vmatpush.msra.mxu0 %v2385
    %2585 = vmatpush.msra.mxu0 %v2381
    %2586 = vmatpush.msra.mxu0 %v2377
    %2587 = vmatpush.msra.mxu0 %v2373
    %2588 = vmatpush.msra.mxu0 %v2369
    %2589 = vmatpush.msra.mxu0 %v2365
    %2590 = vmatpush.msra.mxu0 %v2361
    %2591 = vmatpush.msra.mxu0 %v2357
    %2592 = vmatpush.msra.mxu0 %v2353
    %2593 = vmatpush.msra.mxu0 %v2349
    %2594 = vmatmul.f32.gmra.mxu0 %v2347
    %v2595 = vpop.f32.mrf.mxu0
    %v2596 = vadd.f32 %v2516, %v2595
    %2597 = vdwg.mxu0
    %2598 = vmatpush.msra.mxu0 %v2410
    %2599 = vmatpush.msra.mxu0 %v2406
    %2600 = vmatpush.msra.mxu0 %v2402
    %2601 = vmatpush.msra.mxu0 %v2398
    %2602 = vmatpush.msra.mxu0 %v2394
    %2603 = vmatpush.msra.mxu0 %v2390
    %2604 = vmatpush.msra.mxu0 %v2386
    %2605 = vmatpush.msra.mxu0 %v2382
    %2606 = vmatpush.msra.mxu0 %v2378
    %2607 = vmatpush.msra.mxu0 %v2374
    %2608 = vmatpush.msra.mxu0 %v2370
    %2609 = vmatpush.msra.mxu0 %v2366
    %2610 = vmatpush.msra.mxu0 %v2362
    %2611 = vmatpush.msra.mxu0 %v2358
    %2612 = vmatpush.msra.mxu0 %v2354
    %2613 = vmatpush.msra.mxu0 %v2350
    %2614 = vmatmul.f32.gmra.mxu0 %v2347
    %v2615 = vpop.f32.mrf.mxu0
    %v2616 = vadd.f32 %v2536, %v2615
    %2617 = vdwg.mxu0
    %2618 = vmatpush.msra.mxu0 %v2411
    %2619 = vmatpush.msra.mxu0 %v2407
    %2620 = vmatpush.msra.mxu0 %v2403
    %2621 = vmatpush.msra.mxu0 %v2399
    %2622 = vmatpush.msra.mxu0 %v2395
    %2623 = vmatpush.msra.mxu0 %v2391
    %2624 = vmatpush.msra.mxu0 %v2387
    %2625 = vmatpush.msra.mxu0 %v2383
    %2626 = vmatpush.msra.mxu0 %v2379
    %2627 = vmatpush.msra.mxu0 %v2375
    %2628 = vmatpush.msra.mxu0 %v2371
    %2629 = vmatpush.msra.mxu0 %v2367
    %2630 = vmatpush.msra.mxu0 %v2363
    %2631 = vmatpush.msra.mxu0 %v2359
    %2632 = vmatpush.msra.mxu0 %v2355
    %2633 = vmatpush.msra.mxu0 %v2351
    %2634 = vmatmul.f32.gmra.mxu0 %v2347
    %v2635 = vpop.f32.mrf.mxu0
    %v2636 = vadd.f32 %v2556, %v2635
    %2637 = vdwg.mxu0
    %v2638 = vld [vmem:[#allocation23] sm:$0xff]
    %v2639 = vld [vmem:[#allocation23 + $0x8] sm:$0xff]
    %v2640 = vld [vmem:[#allocation23 + $0x10] sm:$0xff]
    %v2641 = vld [vmem:[#allocation23 + $0x18] sm:$0xff]
    %v2642 = vld [vmem:[#allocation23 + $0x20] sm:$0xff]
    %v2643 = vld [vmem:[#allocation23 + $0x28] sm:$0xff]
    %v2644 = vld [vmem:[#allocation23 + $0x30] sm:$0xff]
    %v2645 = vld [vmem:[#allocation23 + $0x38] sm:$0xff]
    %v2646 = vld [vmem:[#allocation23 + $0x40] sm:$0xff]
    %v2647 = vld [vmem:[#allocation23 + $0x48] sm:$0xff]
    %v2648 = vld [vmem:[#allocation23 + $0x50] sm:$0xff]
    %v2649 = vld [vmem:[#allocation23 + $0x58] sm:$0xff]
    %v2650 = vld [vmem:[#allocation23 + $0x60] sm:$0xff]
    %v2651 = vld [vmem:[#allocation23 + $0x68] sm:$0xff]
    %v2652 = vld [vmem:[#allocation23 + $0x70] sm:$0xff]
    %v2653 = vld [vmem:[#allocation23 + $0x78] sm:$0xff]
    %v2654 = vld [vmem:[#allocation23 + $0x80] sm:$0xff]
    %v2655 = vld [vmem:[#allocation23 + $0x88] sm:$0xff]
    %v2656 = vld [vmem:[#allocation23 + $0x90] sm:$0xff]
    %v2657 = vld [vmem:[#allocation23 + $0x98] sm:$0xff]
    %v2658 = vld [vmem:[#allocation23 + $0xa0] sm:$0xff]
    %v2659 = vld [vmem:[#allocation23 + $0xa8] sm:$0xff]
    %v2660 = vld [vmem:[#allocation23 + $0xb0] sm:$0xff]
    %v2661 = vld [vmem:[#allocation23 + $0xb8] sm:$0xff]
    %v2662 = vld [vmem:[#allocation23 + $0xc0] sm:$0xff]
    %v2663 = vld [vmem:[#allocation23 + $0xc8] sm:$0xff]
    %v2664 = vld [vmem:[#allocation23 + $0xd0] sm:$0xff]
    %v2665 = vld [vmem:[#allocation23 + $0xd8] sm:$0xff]
    %v2666 = vld [vmem:[#allocation23 + $0xe0] sm:$0xff]
    %v2667 = vld [vmem:[#allocation23 + $0xe8] sm:$0xff]
    %v2668 = vld [vmem:[#allocation23 + $0xf0] sm:$0xff]
    %v2669 = vld [vmem:[#allocation23 + $0xf8] sm:$0xff]
    %v2670 = vld [vmem:[#allocation23 + $0x100] sm:$0xff]
    %v2671 = vld [vmem:[#allocation23 + $0x108] sm:$0xff]
    %v2672 = vld [vmem:[#allocation23 + $0x110] sm:$0xff]
    %v2673 = vld [vmem:[#allocation23 + $0x118] sm:$0xff]
    %v2674 = vld [vmem:[#allocation23 + $0x120] sm:$0xff]
    %v2675 = vld [vmem:[#allocation23 + $0x128] sm:$0xff]
    %v2676 = vld [vmem:[#allocation23 + $0x130] sm:$0xff]
    %v2677 = vld [vmem:[#allocation23 + $0x138] sm:$0xff]
    %v2678 = vld [vmem:[#allocation23 + $0x140] sm:$0xff]
    %v2679 = vld [vmem:[#allocation23 + $0x148] sm:$0xff]
    %v2680 = vld [vmem:[#allocation23 + $0x150] sm:$0xff]
    %v2681 = vld [vmem:[#allocation23 + $0x158] sm:$0xff]
    %v2682 = vld [vmem:[#allocation23 + $0x160] sm:$0xff]
    %v2683 = vld [vmem:[#allocation23 + $0x168] sm:$0xff]
    %v2684 = vld [vmem:[#allocation23 + $0x170] sm:$0xff]
    %v2685 = vld [vmem:[#allocation23 + $0x178] sm:$0xff]
    %v2686 = vld [vmem:[#allocation23 + $0x180] sm:$0xff]
    %v2687 = vld [vmem:[#allocation23 + $0x188] sm:$0xff]
    %v2688 = vld [vmem:[#allocation23 + $0x190] sm:$0xff]
    %v2689 = vld [vmem:[#allocation23 + $0x198] sm:$0xff]
    %v2690 = vld [vmem:[#allocation23 + $0x1a0] sm:$0xff]
    %v2691 = vld [vmem:[#allocation23 + $0x1a8] sm:$0xff]
    %v2692 = vld [vmem:[#allocation23 + $0x1b0] sm:$0xff]
    %v2693 = vld [vmem:[#allocation23 + $0x1b8] sm:$0xff]
    %v2694 = vld [vmem:[#allocation23 + $0x1c0] sm:$0xff]
    %v2695 = vld [vmem:[#allocation23 + $0x1c8] sm:$0xff]
    %v2696 = vld [vmem:[#allocation23 + $0x1d0] sm:$0xff]
    %v2697 = vld [vmem:[#allocation23 + $0x1d8] sm:$0xff]
    %v2698 = vld [vmem:[#allocation23 + $0x1e0] sm:$0xff]
    %v2699 = vld [vmem:[#allocation23 + $0x1e8] sm:$0xff]
    %v2700 = vld [vmem:[#allocation23 + $0x1f0] sm:$0xff]
    %v2701 = vld [vmem:[#allocation23 + $0x1f8] sm:$0xff]
    %2702 = vmatpush.msra.mxu0 %v2698
    %2703 = vmatpush.msra.mxu0 %v2694
    %2704 = vmatpush.msra.mxu0 %v2690
    %2705 = vmatpush.msra.mxu0 %v2686
    %2706 = vmatpush.msra.mxu0 %v2682
    %2707 = vmatpush.msra.mxu0 %v2678
    %2708 = vmatpush.msra.mxu0 %v2674
    %2709 = vmatpush.msra.mxu0 %v2670
    %2710 = vmatpush.msra.mxu0 %v2666
    %2711 = vmatpush.msra.mxu0 %v2662
    %2712 = vmatpush.msra.mxu0 %v2658
    %2713 = vmatpush.msra.mxu0 %v2654
    %2714 = vmatpush.msra.mxu0 %v2650
    %2715 = vmatpush.msra.mxu0 %v2646
    %2716 = vmatpush.msra.mxu0 %v2642
    %2717 = vmatpush.msra.mxu0 %v2638
    %2718 = vmatmul.f32.gmra.mxu0 0.0
    %v2719 = vpop.f32.mrf.mxu0
    %v2720 = vadd.f32 0.0, %v2719
    %2721 = vdwg.mxu0
    %2722 = vmatpush.msra.mxu0 %v2699
    %2723 = vmatpush.msra.mxu0 %v2695
    %2724 = vmatpush.msra.mxu0 %v2691
    %2725 = vmatpush.msra.mxu0 %v2687
    %2726 = vmatpush.msra.mxu0 %v2683
    %2727 = vmatpush.msra.mxu0 %v2679
    %2728 = vmatpush.msra.mxu0 %v2675
    %2729 = vmatpush.msra.mxu0 %v2671
    %2730 = vmatpush.msra.mxu0 %v2667
    %2731 = vmatpush.msra.mxu0 %v2663
    %2732 = vmatpush.msra.mxu0 %v2659
    %2733 = vmatpush.msra.mxu0 %v2655
    %2734 = vmatpush.msra.mxu0 %v2651
    %2735 = vmatpush.msra.mxu0 %v2647
    %2736 = vmatpush.msra.mxu0 %v2643
    %2737 = vmatpush.msra.mxu0 %v2639
    %2738 = vmatmul.f32.gmra.mxu0 0.0
    %v2739 = vpop.f32.mrf.mxu0
    %v2740 = vadd.f32 0.0, %v2739
    %2741 = vdwg.mxu0
    %2742 = vmatpush.msra.mxu0 %v2700
    %2743 = vmatpush.msra.mxu0 %v2696
    %2744 = vmatpush.msra.mxu0 %v2692
    %2745 = vmatpush.msra.mxu0 %v2688
    %2746 = vmatpush.msra.mxu0 %v2684
    %2747 = vmatpush.msra.mxu0 %v2680
    %2748 = vmatpush.msra.mxu0 %v2676
    %2749 = vmatpush.msra.mxu0 %v2672
    %2750 = vmatpush.msra.mxu0 %v2668
    %2751 = vmatpush.msra.mxu0 %v2664
    %2752 = vmatpush.msra.mxu0 %v2660
    %2753 = vmatpush.msra.mxu0 %v2656
    %2754 = vmatpush.msra.mxu0 %v2652
    %2755 = vmatpush.msra.mxu0 %v2648
    %2756 = vmatpush.msra.mxu0 %v2644
    %2757 = vmatpush.msra.mxu0 %v2640
    %2758 = vmatmul.f32.gmra.mxu0 0.0
    %v2759 = vpop.f32.mrf.mxu0
    %v2760 = vadd.f32 0.0, %v2759
    %2761 = vdwg.mxu0
    %2762 = vmatpush.msra.mxu0 %v2701
    %2763 = vmatpush.msra.mxu0 %v2697
    %2764 = vmatpush.msra.mxu0 %v2693
    %2765 = vmatpush.msra.mxu0 %v2689
    %2766 = vmatpush.msra.mxu0 %v2685
    %2767 = vmatpush.msra.mxu0 %v2681
    %2768 = vmatpush.msra.mxu0 %v2677
    %2769 = vmatpush.msra.mxu0 %v2673
    %2770 = vmatpush.msra.mxu0 %v2669
    %2771 = vmatpush.msra.mxu0 %v2665
    %2772 = vmatpush.msra.mxu0 %v2661
    %2773 = vmatpush.msra.mxu0 %v2657
    %2774 = vmatpush.msra.mxu0 %v2653
    %2775 = vmatpush.msra.mxu0 %v2649
    %2776 = vmatpush.msra.mxu0 %v2645
    %2777 = vmatpush.msra.mxu0 %v2641
    %2778 = vmatmul.f32.gmra.mxu0 0.0
    %v2779 = vpop.f32.mrf.mxu0
    %v2780 = vadd.f32 0.0, %v2779
    %2781 = vdwg.mxu0
    %v2782 = vadd.f32 %v2576, %v2720
    %v2783 = vadd.f32 %v2596, %v2740
    %v2784 = vadd.f32 %v2616, %v2760
    %v2785 = vadd.f32 %v2636, %v2780
    %v2786 = vld [vmem:[%s14] sm:$0xf]
    %v2788 = vperm.slane %v2786, 0
    %v2789 = vperm.slane %v2786, 1
    %v2790 = vperm.slane %v2786, 2
    %v2791 = vperm.slane %v2786, 3
    %v2796 = vadd.f32 %v2782, %v2788
    %v2797 = vadd.f32 %v2783, %v2789
    %v2798 = vadd.f32 %v2784, %v2790
    %v2799 = vadd.f32 %v2785, %v2791
    %v2800 = vsub.f32 0.0, %v2796
    %v2801 = vmul.f32 %v2800, 1.442695
    %v2802 = vpow.pop %v2801
    %v2803 = vadd.f32 %v2802, 1.0
    %v2804 = vrcp.pop %v2803
    %v2805 = vmul.f32 %v2803, %v2804
    %v2806 = vsub.f32 1.0, %v2805
    %v2807 = vmul.f32 %v2804, %v2806
    %v2808 = vadd.f32 %v2804, %v2807
    %vm2809 = vweird.f32 %v2803
    %vm2810 = vweird.f32 %v2804
    %vm2811 = vmor %vm2809, %vm2810
    %v2812 = vsel %vm2811, %v2804, %v2808
    %v2813 = vand.u32 2147483647, %v2803
    %vm2814 = vcmp.eq.f32.partialorder %v2813, 8.507059e+37
    %v2815 = vand.u32 %v2803, 2147483648
    %v2816 = vor.u32 1.1754944e-38, %v2815
    %v2817 = vsel %vm2814, %v2816, %v2812
    %v2818 = vmul.f32 1.0, %v2817
    %v2819 = vsub.f32 0.0, %v2797
    %v2820 = vmul.f32 %v2819, 1.442695
    %v2821 = vpow.pop %v2820
    %v2822 = vadd.f32 %v2821, 1.0
    %v2823 = vrcp.pop %v2822
    %v2824 = vmul.f32 %v2822, %v2823
    %v2825 = vsub.f32 1.0, %v2824
    %v2826 = vmul.f32 %v2823, %v2825
    %v2827 = vadd.f32 %v2823, %v2826
    %vm2828 = vweird.f32 %v2822
    %vm2829 = vweird.f32 %v2823
    %vm2830 = vmor %vm2828, %vm2829
    %v2831 = vsel %vm2830, %v2823, %v2827
    %v2832 = vand.u32 2147483647, %v2822
    %vm2833 = vcmp.eq.f32.partialorder %v2832, 8.507059e+37
    %v2834 = vand.u32 %v2822, 2147483648
    %v2835 = vor.u32 1.1754944e-38, %v2834
    %v2836 = vsel %vm2833, %v2835, %v2831
    %v2837 = vmul.f32 1.0, %v2836
    %v2838 = vtanh.pop %v2798
    %v2839 = vsub.f32 0.0, %v2799
    %v2840 = vmul.f32 %v2839, 1.442695
    %v2841 = vpow.pop %v2840
    %v2842 = vadd.f32 %v2841, 1.0
    %v2843 = vrcp.pop %v2842
    %v2844 = vmul.f32 %v2842, %v2843
    %v2845 = vsub.f32 1.0, %v2844
    %v2846 = vmul.f32 %v2843, %v2845
    %v2847 = vadd.f32 %v2843, %v2846
    %vm2848 = vweird.f32 %v2842
    %vm2849 = vweird.f32 %v2843
    %vm2850 = vmor %vm2848, %vm2849
    %v2851 = vsel %vm2850, %v2843, %v2847
    %v2852 = vand.u32 2147483647, %v2842
    %vm2853 = vcmp.eq.f32.partialorder %v2852, 8.507059e+37
    %v2854 = vand.u32 %v2842, 2147483648
    %v2855 = vor.u32 1.1754944e-38, %v2854
    %v2856 = vsel %vm2853, %v2855, %v2851
    %v2857 = vmul.f32 1.0, %v2856
    %v2858 = vmul.f32 %v2837, 0.0
    %v2859 = vmul.f32 %v2818, %v2838
    %v2860 = vadd.f32 %v2858, %v2859
    %v2861 = vtanh.pop %v2860
    %v2862 = vmul.f32 %v2857, %v2861
    %v2863 = vld [vmem:[%s15] sm:$0xff]
    %v2864 = vld [vmem:[%s15 + $0x8] sm:$0xff]
    %v2865 = vld [vmem:[%s15 + $0x10] sm:$0xff]
    %v2866 = vld [vmem:[%s15 + $0x18] sm:$0xff]
    %v2867 = vld [vmem:[%s15 + $0x20] sm:$0xff]
    %v2868 = vld [vmem:[%s15 + $0x28] sm:$0xff]
    %v2869 = vld [vmem:[%s15 + $0x30] sm:$0xff]
    %v2870 = vld [vmem:[%s15 + $0x38] sm:$0xff]
    %v2871 = vld [vmem:[%s15 + $0x40] sm:$0xff]
    %v2872 = vld [vmem:[%s15 + $0x48] sm:$0xff]
    %v2873 = vld [vmem:[%s15 + $0x50] sm:$0xff]
    %v2874 = vld [vmem:[%s15 + $0x58] sm:$0xff]
    %v2875 = vld [vmem:[%s15 + $0x60] sm:$0xff]
    %v2876 = vld [vmem:[%s15 + $0x68] sm:$0xff]
    %v2877 = vld [vmem:[%s15 + $0x70] sm:$0xff]
    %v2878 = vld [vmem:[%s15 + $0x78] sm:$0xff]
    %v2879 = vld [vmem:[%s16] sm:$0xff]
    %v2880 = vld [vmem:[%s16 + $0x8] sm:$0xff]
    %v2881 = vld [vmem:[%s16 + $0x10] sm:$0xff]
    %v2882 = vld [vmem:[%s16 + $0x18] sm:$0xff]
    %v2883 = vld [vmem:[%s16 + $0x20] sm:$0xff]
    %v2884 = vld [vmem:[%s16 + $0x28] sm:$0xff]
    %v2885 = vld [vmem:[%s16 + $0x30] sm:$0xff]
    %v2886 = vld [vmem:[%s16 + $0x38] sm:$0xff]
    %v2887 = vld [vmem:[%s16 + $0x40] sm:$0xff]
    %v2888 = vld [vmem:[%s16 + $0x48] sm:$0xff]
    %v2889 = vld [vmem:[%s16 + $0x50] sm:$0xff]
    %v2890 = vld [vmem:[%s16 + $0x58] sm:$0xff]
    %v2891 = vld [vmem:[%s16 + $0x60] sm:$0xff]
    %v2892 = vld [vmem:[%s16 + $0x68] sm:$0xff]
    %v2893 = vld [vmem:[%s16 + $0x70] sm:$0xff]
    %v2894 = vld [vmem:[%s16 + $0x78] sm:$0xff]
    %2895 = vmatpush.msra.mxu0 %v2894
    %2896 = vmatpush.msra.mxu0 %v2893
    %2897 = vmatpush.msra.mxu0 %v2892
    %2898 = vmatpush.msra.mxu0 %v2891
    %2899 = vmatpush.msra.mxu0 %v2890
    %2900 = vmatpush.msra.mxu0 %v2889
    %2901 = vmatpush.msra.mxu0 %v2888
    %2902 = vmatpush.msra.mxu0 %v2887
    %2903 = vmatpush.msra.mxu0 %v2886
    %2904 = vmatpush.msra.mxu0 %v2885
    %2905 = vmatpush.msra.mxu0 %v2884
    %2906 = vmatpush.msra.mxu0 %v2883
    %2907 = vmatpush.msra.mxu0 %v2882
    %2908 = vmatpush.msra.mxu0 %v2881
    %2909 = vmatpush.msra.mxu0 %v2880
    %2910 = vmatpush.msra.mxu0 %v2879
    %2911 = vmatmul.f32.gmra.mxu0 %v2862
    %v2912 = vpop.f32.mrf.mxu0
    %v2913 = vadd.f32 0.0, %v2912
    %2914 = vdwg.mxu0
    %2915 = vmatpush.msra.mxu0 %v2878
    %2916 = vmatpush.msra.mxu0 %v2877
    %2917 = vmatpush.msra.mxu0 %v2876
    %2918 = vmatpush.msra.mxu0 %v2875
    %2919 = vmatpush.msra.mxu0 %v2874
    %2920 = vmatpush.msra.mxu0 %v2873
    %2921 = vmatpush.msra.mxu0 %v2872
    %2922 = vmatpush.msra.mxu0 %v2871
    %2923 = vmatpush.msra.mxu0 %v2870
    %2924 = vmatpush.msra.mxu0 %v2869
    %2925 = vmatpush.msra.mxu0 %v2868
    %2926 = vmatpush.msra.mxu0 %v2867
    %2927 = vmatpush.msra.mxu0 %v2866
    %2928 = vmatpush.msra.mxu0 %v2865
    %2929 = vmatpush.msra.mxu0 %v2864
    %2930 = vmatpush.msra.mxu0 %v2863
    %2931 = vmatmul.f32.gmra.mxu0 %v2345
    %v2932 = vpop.f32.mrf.mxu0
    %v2933 = vadd.f32 %v2913, %v2932
    %2934 = vdwg.mxu0
    %v2935 = vld [vmem:[#allocation6] sm:$0x1]
    %v2937 = vperm.slane %v2935, 0
    %v2939 = vadd.f32 %v2933, %v2937
    %v2940 = vsub.f32 0.0, %v2939
    %v2941 = vmul.f32 %v2940, 1.442695
    %v2942 = vpow.pop %v2941
    %v2943 = vadd.f32 %v2942, 1.0
    %v2944 = vrcp.pop %v2943
    %v2945 = vmul.f32 %v2943, %v2944
    %v2946 = vsub.f32 1.0, %v2945
    %v2947 = vmul.f32 %v2944, %v2946
    %v2948 = vadd.f32 %v2944, %v2947
    %vm2949 = vweird.f32 %v2943
    %vm2950 = vweird.f32 %v2944
    %vm2951 = vmor %vm2949, %vm2950
    %v2952 = vsel %vm2951, %v2944, %v2948
    %v2953 = vand.u32 2147483647, %v2943
    %vm2954 = vcmp.eq.f32.partialorder %v2953, 8.507059e+37
    %v2955 = vand.u32 %v2943, 2147483648
    %v2956 = vor.u32 1.1754944e-38, %v2955
    %v2957 = vsel %vm2954, %v2956, %v2952
    %v2958 = vmul.f32 1.0, %v2957
    %vm2959 = vcmask 7168
    %2960 = vst.msk [vmem:[%s18] sm:$0xff] %vm2959, %v2958
    // Predicated region
    $region139: #{tpu_custom_call.1} parent=1 // pred_check
      _
    $region140: #{tpu_custom_call.1} parent=1 // pred_check_branch
      %2962 = sbr.rel (0) target = $region142
    $region141: #{tpu_custom_call.1} parent=1 // pred_region
      _
    $region142: #{tpu_custom_call.1} parent=1 // pred_fallthru
      _
    // Predicated region
    $region143: #{tpu_custom_call.1} parent=1 // pred_check
      _
    $region144: #{tpu_custom_call.1} parent=1 // pred_check_branch
      %2964 = sbr.rel (0) target = $region146
    $region145: #{tpu_custom_call.1} parent=1 // pred_region
      _
    $region146: #{tpu_custom_call.1} parent=1 // pred_fallthru
      _
    %2965 = vsyncpa [#allocation8], 1
    %2966 = vsyncpa [#allocation10], 1
    %2967 = vsyncpa [#allocation13], 1
    %2968 = vsyncpa [#allocation16], 1
    %2969 = vsyncpa [#allocation19], 1
    %2970 = vsyncpa [#allocation22], 1

</llo_original>
